<compile_context>
chip_gen: v6e
topology: v6e:2x2x1
jax: 0.10.0
libtpu: 0.0.40
codegen_flags: <defaults>
</compile_context>

<pallas_src>
import functools

import jax
import jax.numpy as jnp
from jax.experimental import pallas as pl
from jax.experimental.pallas import tpu as pltpu

# Layer widths of the PyTorch module.
DIMS = [3, 64, 128, 256, 512, 256]   # fc1..fc5 (ReLU after each)
OUT_DIM = 2                          # fc6 (no activation), applied in wrapper
FEAT_DIM = DIMS[-1]                  # pooled feature width (lane-dense: 2x128)


def _has_bf16_vpu():
    """bf16 VALU is native on v6e/v7x; fall back to f32 bias/ReLU on <= v5."""
    try:
        kind = jax.devices()[0].device_kind.lower()
    except Exception:
        return False
    return not any(t in kind for t in ("v2", "v3", "v4", "v5"))


def pointnet_kernel(x_ref,
                    w1t_ref, b1_ref, w2_ref, b2_ref, w3_ref, b3_ref,
                    w4_ref, b4_ref, w5_ref, b5_ref,
                    o_ref, *, bf16_vpu):
    # x_ref:  (1, 3, TILE_N) block of the transposed input (lane-dense).
    # w1t:    (64, 3) f32.  w2..w5: bf16.  Biases: f32.
    # o_ref:  (1, 1, 1, FEAT_DIM) f32 block, VMEM-resident across the k axis
    #         (its block index is constant in k) -> running-max accumulator.
    k = pl.program_id(2)

    @pl.when(k == 0)
    def _():
        # Must be -inf (not zero) to stay correct for all-negative features;
        # ReLU guarantees a finite (>= 0) update on the first tile.
        o_ref[...] = jnp.full(o_ref.shape, -jnp.inf, dtype=o_ref.dtype)

    xt = x_ref[0]                                   # (3, TILE_N) f32
    w1t = w1t_ref[...]                              # (64, 3) f32

    # fc1 (K=3): keep it off the MXU.  Compute in the transposed orientation
    # with 3 VPU multiply-adds on lane-dense rows, then one XLU transpose.
    h1t = (w1t[:, 0:1] * xt[0:1, :]
           + w1t[:, 1:2] * xt[1:2, :]
           + w1t[:, 2:3] * xt[2:3, :])              # (64, TILE_N) f32
    h = jnp.maximum(h1t.T + b1_ref[...], 0.0)       # (TILE_N, 64) f32
    h = h.astype(jnp.bfloat16)                      # store activations bf16

    def linear_relu(h, w_ref, b_ref):
        # bf16 MXU inputs, f32 accumulation.
        acc = jnp.dot(h, w_ref[...], preferred_element_type=jnp.float32)
        if bf16_vpu:
            # bf16 bias-add + ReLU (v6e/v7x): halves vreg / spill traffic.
            return jnp.maximum(acc.astype(jnp.bfloat16)
                               + b_ref[...].astype(jnp.bfloat16), 0)
        # f32 VPU path (v5e and older), bf16 only as the stored intermediate.
        return jnp.maximum(acc + b_ref[...], 0.0).astype(jnp.bfloat16)

    h = linear_relu(h, w2_ref, b2_ref)              # (TILE_N, 128) bf16
    h = linear_relu(h, w3_ref, b3_ref)              # (TILE_N, 256) bf16
    h = linear_relu(h, w4_ref, b4_ref)              # (TILE_N, 512) bf16

    # fc5: keep bias-add/ReLU and the pooled feature in f32 (feeds fc6).
    acc5 = jnp.dot(h, w5_ref[...], preferred_element_type=jnp.float32)
    h5 = jnp.maximum(acc5 + b5_ref[...], 0.0)       # (TILE_N, 256) f32

    # Running max over the point axis (torch.max(x, 1, keepdim=True)[0]),
    # accumulated directly in the resident output block.
    tile_max = jnp.max(h5, axis=0, keepdims=True)   # (1, FEAT_DIM)
    o_ref[0, 0] = jnp.maximum(o_ref[0, 0], tile_max)


def pointnet_forward(x, params, *, tile_n=512, n_split=None, bf16_vpu=None):
    """x: (B, N, 3) float32. params: list of (W, b), W:(in,out), b:(1,out)."""
    B, N, C = x.shape
    assert C == DIMS[0]
    assert N >= 1, "need at least one point (output block otherwise unwritten)"
    if bf16_vpu is None:
        bf16_vpu = _has_bf16_vpu()

    # Pad the point axis up to a multiple of tile_n by replicating the last
    # point -- the max over points is invariant to duplicated points.
    n_pad = pl.cdiv(N, tile_n) * tile_n
    if n_pad != N:
        x = jnp.concatenate(
            [x, jnp.broadcast_to(x[:, -1:, :], (B, n_pad - N, C))], axis=1)
    num_tiles = n_pad // tile_n

    # Core split of the N-tile axis (helps v7x when B is small/odd; on 1-TC
    # chips it is just an extra trivially-iterated grid axis).
    if n_split is None:
        n_split = 2 if (num_tiles >= 2 and num_tiles % 2 == 0) else 1
    assert num_tiles % n_split == 0
    tiles_per_split = num_tiles // n_split

    # Lane-dense input layout for the kernel: (B, 3, N_pad).
    xt = jnp.transpose(x, (0, 2, 1))

    # fc1 weights transposed + f32 (tiny, used on the VPU); fc2..fc5 weights
    # bf16 (MXU inputs, half the DMA); biases f32.
    w1, b1 = params[0]
    mlp_params = [w1.T.astype(jnp.float32), b1.astype(jnp.float32)]
    for w, b in params[1:5]:
        mlp_params.append(w.astype(jnp.bfloat16))
        mlp_params.append(b.astype(jnp.float32))

    weight_specs = [pl.BlockSpec(p.shape, lambda s, bi, ki: (0, 0))
                    for p in mlp_params]

    layer_flops = sum(d_in * d_out for d_in, d_out in zip(DIMS[:-1], DIMS[1:]))
    weight_bytes = sum(int(p.size) * p.dtype.itemsize for p in mlp_params)
    cost = pl.CostEstimate(
        flops=2 * B * n_pad * layer_flops,
        transcendentals=0,
        bytes_accessed=B * n_pad * C * 4 + weight_bytes
                       + n_split * B * FEAT_DIM * 4,
    )

    pooled = pl.pallas_call(
        functools.partial(pointnet_kernel, bf16_vpu=bf16_vpu),
        out_shape=jax.ShapeDtypeStruct((n_split, B, 1, FEAT_DIM), jnp.float32),
        grid_spec=pltpu.PrefetchScalarGridSpec(
            num_scalar_prefetch=0,
            grid=(n_split, B, tiles_per_split),
            in_specs=[pl.BlockSpec(
                (1, C, tile_n),
                lambda s, bi, ki, tps=tiles_per_split: (bi, 0, s * tps + ki))]
                     + weight_specs,
            out_specs=pl.BlockSpec((1, 1, 1, FEAT_DIM),
                                   lambda s, bi, ki: (s, bi, 0, 0)),
        ),
        compiler_params=pltpu.CompilerParams(
            dimension_semantics=("parallel", "parallel", "arbitrary"),
            vmem_limit_bytes=32 * 1024 * 1024),
        cost_estimate=cost,
    )(xt, *mlp_params)                               # (n_split, B, 1, 256)

    # Combine per-split partial maxima (tiny), then fc6 (256 -> 2) in plain
    # JAX (keeps the kernel output lane-dense instead of a 2-wide store).
    pooled = jnp.max(pooled, axis=0)                 # (B, 1, 256)
    w6, b6 = params[5]
    return jnp.einsum("bnd,de->bne", pooled, w6) + b6[None]


def init_params(key):
    """Deterministic init mimicking nn.Linear (uniform +-1/sqrt(fan_in))."""
    params = []
    in_dims = DIMS
    out_dims = DIMS[1:] + [OUT_DIM]
    for din, dout in zip(in_dims, out_dims):
        kw, kb, key = jax.random.split(key, 3)
        bound = 1.0 / jnp.sqrt(float(din))
        w = jax.random.uniform(kw, (din, dout), jnp.float32, -bound, bound)
        b = jax.random.uniform(kb, (1, dout), jnp.float32, -bound, bound)
        params.append((w, b))
    return params


if __name__ == "__main__":
    key = jax.random.PRNGKey(0)
    k_x, k_p = jax.random.split(key)

    # 2 point clouds, 2000 points, 3 coords -> padded to 2048 = 4 tiles of 512
    # -> exercises padding, the running-max across k, and the 2-way split.
    B, N = 2, 2000
    x = jax.random.normal(k_x, (B, N, 3), jnp.float32)
    params = init_params(k_p)

    out = pointnet_forward(x, params)
    out = jax.block_until_ready(out)

    # Pure-JAX reference mirroring the kernel's numerics (bf16 matmul inputs,
    # f32 accumulation, f32 fc1/fc5/fc6, bf16 bias path where the kernel uses
    # it), so the tolerance check is tight and hardware-independent.
    def q(a):
        return a.astype(jnp.bfloat16).astype(jnp.float32)

    bf16_vpu = _has_bf16_vpu()
    w1, b1 = params[0]
    h = jax.nn.relu(jnp.einsum("bnd,de->bne", x, w1) + b1[None])
    for (w, b) in params[1:4]:                     # fc2..fc4
        acc = jnp.einsum("bnd,de->bne", q(h), q(w))
        if bf16_vpu:
            h = jax.nn.relu(q(acc) + q(b)[None])
        else:
            h = jax.nn.relu(acc + b[None])
    w5, b5 = params[4]                             # fc5 (f32 bias/ReLU)
    h = jax.nn.relu(jnp.einsum("bnd,de->bne", q(h), q(w5)) + b5[None])
    pooled_ref = jnp.max(h, axis=1, keepdims=True)
    w6, b6 = params[5]
    ref = jnp.einsum("bnd,de->bne", pooled_ref, w6) + b6[None]

    assert out.shape == (B, 1, OUT_DIM), out.shape
    assert jnp.allclose(out, ref, atol=2e-2, rtol=2e-2), (out, ref)
    print("KERNEL_OK")
</pallas_src>

<mosaic_0001>
module attributes {stable_mosaic.version = 11 : i64} {
  func.func @pointnet_kernel(%arg0: i32, %arg1: i32, %arg2: i32, %arg3: memref<1x3x512xf32, #tpu.memory_space<vmem>>, %arg4: memref<64x3xf32, #tpu.memory_space<vmem>>, %arg5: memref<1x64xf32, #tpu.memory_space<vmem>>, %arg6: memref<64x128xbf16, #tpu.memory_space<vmem>>, %arg7: memref<1x128xf32, #tpu.memory_space<vmem>>, %arg8: memref<128x256xbf16, #tpu.memory_space<vmem>>, %arg9: memref<1x256xf32, #tpu.memory_space<vmem>>, %arg10: memref<256x512xbf16, #tpu.memory_space<vmem>>, %arg11: memref<1x512xf32, #tpu.memory_space<vmem>>, %arg12: memref<512x256xbf16, #tpu.memory_space<vmem>>, %arg13: memref<1x256xf32, #tpu.memory_space<vmem>>, %arg14: memref<1x1x1x256xf32, #tpu.memory_space<vmem>>) attributes {dimension_semantics = [#tpu.dimension_semantics<parallel>, #tpu.dimension_semantics<parallel>, #tpu.dimension_semantics<arbitrary>], iteration_bounds = array<i64: 2, 2, 2>, scalar_prefetch = 0 : i64, scratch_operands = 0 : i64, tpu.core_type = #tpu.core_type<tc>, window_params = [{transform_indices = @transform_0, window_bounds = array<i64: 1, 3, 512>}, {pipeline_mode = #tpu.pipeline_mode<synchronous>, transform_indices = @transform_1, window_bounds = array<i64: 64, 3>}, {pipeline_mode = #tpu.pipeline_mode<synchronous>, transform_indices = @transform_2, window_bounds = array<i64: 1, 64>}, {pipeline_mode = #tpu.pipeline_mode<synchronous>, transform_indices = @transform_3, window_bounds = array<i64: 64, 128>}, {pipeline_mode = #tpu.pipeline_mode<synchronous>, transform_indices = @transform_4, window_bounds = array<i64: 1, 128>}, {pipeline_mode = #tpu.pipeline_mode<synchronous>, transform_indices = @transform_5, window_bounds = array<i64: 128, 256>}, {pipeline_mode = #tpu.pipeline_mode<synchronous>, transform_indices = @transform_6, window_bounds = array<i64: 1, 256>}, {pipeline_mode = #tpu.pipeline_mode<synchronous>, transform_indices = @transform_7, window_bounds = array<i64: 256, 512>}, {pipeline_mode = #tpu.pipeline_mode<synchronous>, transform_indices = @transform_8, window_bounds = array<i64: 1, 512>}, {pipeline_mode = #tpu.pipeline_mode<synchronous>, transform_indices = @transform_9, window_bounds = array<i64: 512, 256>}, {pipeline_mode = #tpu.pipeline_mode<synchronous>, transform_indices = @transform_10, window_bounds = array<i64: 1, 256>}, {transform_indices = @transform_11, window_bounds = array<i64: 1, 1, 1, 256>}]} {
    %c0_i32 = arith.constant 0 : i32
    %0 = arith.cmpi eq, %arg2, %c0_i32 : i32
    %1 = arith.extui %0 : i1 to i32
    %c0_i32_0 = arith.constant 0 : i32
    %2 = arith.cmpi ne, %1, %c0_i32_0 : i32
    scf.if %2 {
      %cst_40 = arith.constant 0xFF800000 : f32
      %72 = vector.broadcast %cst_40 : f32 to vector<1x1x1x256xf32>
      %c0_41 = arith.constant 0 : index
      %c0_42 = arith.constant 0 : index
      %c0_43 = arith.constant 0 : index
      %c0_44 = arith.constant 0 : index
      %73 = vector.load %arg14[%c0_41, %c0_42, %c0_43, %c0_44] : memref<1x1x1x256xf32, #tpu.memory_space<vmem>>, vector<1x1x1x256xf32>
      tpu.vector_store %arg14[%c0_41, %c0_42, %c0_43, %c0_44], %72 {strides = array<i32>} : memref<1x1x1x256xf32, #tpu.memory_space<vmem>>, vector<1x1x1x256xf32>,
    } else {
    }
    %c0 = arith.constant 0 : index
    %c0_1 = arith.constant 0 : index
    %c0_2 = arith.constant 0 : index
    %3 = vector.load %arg3[%c0, %c0_1, %c0_2] : memref<1x3x512xf32, #tpu.memory_space<vmem>>, vector<1x3x512xf32>
    %4 = vector.shape_cast %3 : vector<1x3x512xf32> to vector<3x512xf32>
    %c0_3 = arith.constant 0 : index
    %c0_4 = arith.constant 0 : index
    %5 = vector.load %arg4[%c0_3, %c0_4] : memref<64x3xf32, #tpu.memory_space<vmem>>, vector<64x3xf32>
    %6 = vector.extract_strided_slice %5 {offsets = [0, 0], sizes = [64, 1], strides = [1, 1]} : vector<64x3xf32> to vector<64x1xf32>
    %7 = vector.extract_strided_slice %4 {offsets = [0, 0], sizes = [1, 512], strides = [1, 1]} : vector<3x512xf32> to vector<1x512xf32>
    %8 = vector.broadcast %6 : vector<64x1xf32> to vector<64x512xf32>
    %9 = vector.broadcast %7 : vector<1x512xf32> to vector<64x512xf32>
    %10 = arith.mulf %8, %9 : vector<64x512xf32>
    %11 = vector.extract_strided_slice %5 {offsets = [0, 1], sizes = [64, 1], strides = [1, 1]} : vector<64x3xf32> to vector<64x1xf32>
    %12 = vector.extract_strided_slice %4 {offsets = [1, 0], sizes = [1, 512], strides = [1, 1]} : vector<3x512xf32> to vector<1x512xf32>
    %13 = vector.broadcast %11 : vector<64x1xf32> to vector<64x512xf32>
    %14 = vector.broadcast %12 : vector<1x512xf32> to vector<64x512xf32>
    %15 = arith.mulf %13, %14 : vector<64x512xf32>
    %16 = arith.addf %10, %15 : vector<64x512xf32>
    %17 = vector.extract_strided_slice %5 {offsets = [0, 2], sizes = [64, 1], strides = [1, 1]} : vector<64x3xf32> to vector<64x1xf32>
    %18 = vector.extract_strided_slice %4 {offsets = [2, 0], sizes = [1, 512], strides = [1, 1]} : vector<3x512xf32> to vector<1x512xf32>
    %19 = vector.broadcast %17 : vector<64x1xf32> to vector<64x512xf32>
    %20 = vector.broadcast %18 : vector<1x512xf32> to vector<64x512xf32>
    %21 = arith.mulf %19, %20 : vector<64x512xf32>
    %22 = arith.addf %16, %21 : vector<64x512xf32>
    %23 = tpu.transpose %22, [1, 0] : vector<64x512xf32> -> vector<512x64xf32>
    %c0_5 = arith.constant 0 : index
    %c0_6 = arith.constant 0 : index
    %24 = vector.load %arg5[%c0_5, %c0_6] : memref<1x64xf32, #tpu.memory_space<vmem>>, vector<1x64xf32>
    %25 = vector.broadcast %24 : vector<1x64xf32> to vector<512x64xf32>
    %26 = arith.addf %23, %25 : vector<512x64xf32>
    %cst = arith.constant 0.000000e+00 : f32
    %27 = vector.broadcast %cst : f32 to vector<512x64xf32>
    %28 = arith.maximumf %26, %27 : vector<512x64xf32>
    %29 = arith.truncf %28 : vector<512x64xf32> to vector<512x64xbf16>
    %c0_7 = arith.constant 0 : index
    %c0_8 = arith.constant 0 : index
    %30 = vector.load %arg6[%c0_7, %c0_8] : memref<64x128xbf16, #tpu.memory_space<vmem>>, vector<64x128xbf16>
    %cst_9 = arith.constant dense<0.000000e+00> : vector<512x128xf32>
    %31 = tpu.matmul %29, %30, %cst_9 {dimension_numbers = #tpu.dot_dimension_numbers<[1], [0], [0], [1], [0, 0, 1, 1], [], []>} : vector<512x64xbf16>, vector<64x128xbf16>, vector<512x128xf32> -> vector<512x128xf32>
    %32 = arith.truncf %31 : vector<512x128xf32> to vector<512x128xbf16>
    %c0_10 = arith.constant 0 : index
    %c0_11 = arith.constant 0 : index
    %33 = vector.load %arg7[%c0_10, %c0_11] : memref<1x128xf32, #tpu.memory_space<vmem>>, vector<1x128xf32>
    %34 = arith.truncf %33 : vector<1x128xf32> to vector<1x128xbf16>
    %35 = vector.broadcast %34 : vector<1x128xbf16> to vector<512x128xbf16>
    %36 = arith.addf %32, %35 : vector<512x128xbf16>
    %cst_12 = arith.constant 0.000000e+00 : bf16
    %37 = vector.broadcast %cst_12 : bf16 to vector<512x128xbf16>
    %38 = arith.maximumf %36, %37 : vector<512x128xbf16>
    %c0_13 = arith.constant 0 : index
    %c0_14 = arith.constant 0 : index
    %39 = vector.load %arg8[%c0_13, %c0_14] : memref<128x256xbf16, #tpu.memory_space<vmem>>, vector<128x256xbf16>
    %cst_15 = arith.constant dense<0.000000e+00> : vector<512x256xf32>
    %40 = tpu.matmul %38, %39, %cst_15 {dimension_numbers = #tpu.dot_dimension_numbers<[1], [0], [0], [1], [0, 0, 1, 1], [], []>} : vector<512x128xbf16>, vector<128x256xbf16>, vector<512x256xf32> -> vector<512x256xf32>
    %41 = arith.truncf %40 : vector<512x256xf32> to vector<512x256xbf16>
    %c0_16 = arith.constant 0 : index
    %c0_17 = arith.constant 0 : index
    %42 = vector.load %arg9[%c0_16, %c0_17] : memref<1x256xf32, #tpu.memory_space<vmem>>, vector<1x256xf32>
    %43 = arith.truncf %42 : vector<1x256xf32> to vector<1x256xbf16>
    %44 = vector.broadcast %43 : vector<1x256xbf16> to vector<512x256xbf16>
    %45 = arith.addf %41, %44 : vector<512x256xbf16>
    %cst_18 = arith.constant 0.000000e+00 : bf16
    %46 = vector.broadcast %cst_18 : bf16 to vector<512x256xbf16>
    %47 = arith.maximumf %45, %46 : vector<512x256xbf16>
    %c0_19 = arith.constant 0 : index
    %c0_20 = arith.constant 0 : index
    %48 = vector.load %arg10[%c0_19, %c0_20] : memref<256x512xbf16, #tpu.memory_space<vmem>>, vector<256x512xbf16>
    %cst_21 = arith.constant dense<0.000000e+00> : vector<512x512xf32>
    %49 = tpu.matmul %47, %48, %cst_21 {dimension_numbers = #tpu.dot_dimension_numbers<[1], [0], [0], [1], [0, 0, 1, 1], [], []>} : vector<512x256xbf16>, vector<256x512xbf16>, vector<512x512xf32> -> vector<512x512xf32>
    %50 = arith.truncf %49 : vector<512x512xf32> to vector<512x512xbf16>
    %c0_22 = arith.constant 0 : index
    %c0_23 = arith.constant 0 : index
    %51 = vector.load %arg11[%c0_22, %c0_23] : memref<1x512xf32, #tpu.memory_space<vmem>>, vector<1x512xf32>
    %52 = arith.truncf %51 : vector<1x512xf32> to vector<1x512xbf16>
    %53 = vector.broadcast %52 : vector<1x512xbf16> to vector<512x512xbf16>
    %54 = arith.addf %50, %53 : vector<512x512xbf16>
    %cst_24 = arith.constant 0.000000e+00 : bf16
    %55 = vector.broadcast %cst_24 : bf16 to vector<512x512xbf16>
    %56 = arith.maximumf %54, %55 : vector<512x512xbf16>
    %c0_25 = arith.constant 0 : index
    %c0_26 = arith.constant 0 : index
    %57 = vector.load %arg12[%c0_25, %c0_26] : memref<512x256xbf16, #tpu.memory_space<vmem>>, vector<512x256xbf16>
    %cst_27 = arith.constant dense<0.000000e+00> : vector<512x256xf32>
    %58 = tpu.matmul %56, %57, %cst_27 {dimension_numbers = #tpu.dot_dimension_numbers<[1], [0], [0], [1], [0, 0, 1, 1], [], []>} : vector<512x512xbf16>, vector<512x256xbf16>, vector<512x256xf32> -> vector<512x256xf32>
    %c0_28 = arith.constant 0 : index
    %c0_29 = arith.constant 0 : index
    %59 = vector.load %arg13[%c0_28, %c0_29] : memref<1x256xf32, #tpu.memory_space<vmem>>, vector<1x256xf32>
    %60 = vector.broadcast %59 : vector<1x256xf32> to vector<512x256xf32>
    %61 = arith.addf %58, %60 : vector<512x256xf32>
    %cst_30 = arith.constant 0.000000e+00 : f32
    %62 = vector.broadcast %cst_30 : f32 to vector<512x256xf32>
    %63 = arith.maximumf %61, %62 : vector<512x256xf32>
    %cst_31 = arith.constant dense<0xFF800000> : vector<256xf32>
    %64 = vector.multi_reduction <maximumf>, %63, %cst_31 [0] : vector<512x256xf32> to vector<256xf32>
    %65 = vector.shape_cast %64 : vector<256xf32> to vector<1x256xf32>
    %c0_32 = arith.constant 0 : index
    %c0_33 = arith.constant 0 : index
    %c0_34 = arith.constant 0 : index
    %c0_35 = arith.constant 0 : index
    %66 = vector.load %arg14[%c0_32, %c0_33, %c0_34, %c0_35] : memref<1x1x1x256xf32, #tpu.memory_space<vmem>>, vector<1x1x1x256xf32>
    %67 = vector.shape_cast %66 : vector<1x1x1x256xf32> to vector<1x256xf32>
    %68 = arith.maximumf %67, %65 : vector<1x256xf32>
    %c0_36 = arith.constant 0 : index
    %c0_37 = arith.constant 0 : index
    %c0_38 = arith.constant 0 : index
    %c0_39 = arith.constant 0 : index
    %69 = vector.load %arg14[%c0_36, %c0_37, %c0_38, %c0_39] : memref<1x1x1x256xf32, #tpu.memory_space<vmem>>, vector<1x1x1x256xf32>
    %70 = vector.shape_cast %69 : vector<1x1x1x256xf32> to vector<1x256xf32>
    %71 = vector.shape_cast %68 : vector<1x256xf32> to vector<1x1x1x256xf32>
    tpu.vector_store %arg14[%c0_36, %c0_37, %c0_38, %c0_39], %71 {strides = array<i32>} : memref<1x1x1x256xf32, #tpu.memory_space<vmem>>, vector<1x1x1x256xf32>,
    return
  }
  func.func @transform_0(%arg0: i32, %arg1: i32, %arg2: i32) -> (i32, i32, i32) {
    %c2_i32 = arith.constant 2 : i32
    %0 = arith.muli %arg0, %c2_i32 : i32
    %1 = arith.addi %0, %arg2 : i32
    %c0_i32 = arith.constant 0 : i32
    %c0_i32_0 = arith.constant 0 : i32
    return %arg1, %c0_i32, %1 : i32, i32, i32
  }
  func.func @transform_1(%arg0: i32, %arg1: i32, %arg2: i32) -> (i32, i32) {
    %c0_i32 = arith.constant 0 : i32
    %c0_i32_0 = arith.constant 0 : i32
    %c0_i32_1 = arith.constant 0 : i32
    return %c0_i32, %c0_i32_0 : i32, i32
  }
  func.func @transform_2(%arg0: i32, %arg1: i32, %arg2: i32) -> (i32, i32) {
    %c0_i32 = arith.constant 0 : i32
    %c0_i32_0 = arith.constant 0 : i32
    %c0_i32_1 = arith.constant 0 : i32
    return %c0_i32, %c0_i32_0 : i32, i32
  }
  func.func @transform_3(%arg0: i32, %arg1: i32, %arg2: i32) -> (i32, i32) {
    %c0_i32 = arith.constant 0 : i32
    %c0_i32_0 = arith.constant 0 : i32
    %c0_i32_1 = arith.constant 0 : i32
    return %c0_i32, %c0_i32_0 : i32, i32
  }
  func.func @transform_4(%arg0: i32, %arg1: i32, %arg2: i32) -> (i32, i32) {
    %c0_i32 = arith.constant 0 : i32
    %c0_i32_0 = arith.constant 0 : i32
    %c0_i32_1 = arith.constant 0 : i32
    return %c0_i32, %c0_i32_0 : i32, i32
  }
  func.func @transform_5(%arg0: i32, %arg1: i32, %arg2: i32) -> (i32, i32) {
    %c0_i32 = arith.constant 0 : i32
    %c0_i32_0 = arith.constant 0 : i32
    %c0_i32_1 = arith.constant 0 : i32
    return %c0_i32, %c0_i32_0 : i32, i32
  }
  func.func @transform_6(%arg0: i32, %arg1: i32, %arg2: i32) -> (i32, i32) {
    %c0_i32 = arith.constant 0 : i32
    %c0_i32_0 = arith.constant 0 : i32
    %c0_i32_1 = arith.constant 0 : i32
    return %c0_i32, %c0_i32_0 : i32, i32
  }
  func.func @transform_7(%arg0: i32, %arg1: i32, %arg2: i32) -> (i32, i32) {
    %c0_i32 = arith.constant 0 : i32
    %c0_i32_0 = arith.constant 0 : i32
    %c0_i32_1 = arith.constant 0 : i32
    return %c0_i32, %c0_i32_0 : i32, i32
  }
  func.func @transform_8(%arg0: i32, %arg1: i32, %arg2: i32) -> (i32, i32) {
    %c0_i32 = arith.constant 0 : i32
    %c0_i32_0 = arith.constant 0 : i32
    %c0_i32_1 = arith.constant 0 : i32
    return %c0_i32, %c0_i32_0 : i32, i32
  }
  func.func @transform_9(%arg0: i32, %arg1: i32, %arg2: i32) -> (i32, i32) {
    %c0_i32 = arith.constant 0 : i32
    %c0_i32_0 = arith.constant 0 : i32
    %c0_i32_1 = arith.constant 0 : i32
    return %c0_i32, %c0_i32_0 : i32, i32
  }
  func.func @transform_10(%arg0: i32, %arg1: i32, %arg2: i32) -> (i32, i32) {
    %c0_i32 = arith.constant 0 : i32
    %c0_i32_0 = arith.constant 0 : i32
    %c0_i32_1 = arith.constant 0 : i32
    return %c0_i32, %c0_i32_0 : i32, i32
  }
  func.func @transform_11(%arg0: i32, %arg1: i32, %arg2: i32) -> (i32, i32, i32, i32) {
    %c0_i32 = arith.constant 0 : i32
    %c0_i32_0 = arith.constant 0 : i32
    %c0_i32_1 = arith.constant 0 : i32
    return %arg0, %arg1, %c0_i32, %c0_i32_0 : i32, i32, i32, i32
  }
}

</mosaic_0001>

<llo_original>
// kernel: tpu_custom_call.1
$region0: #{tpu_custom_call.1}
  #allocation0 [shape = 'u32[]', space=smem, size = 0x4, offset = 0x4, fixed_abs, tag = 'smem constant byte address 0x4 - core index']
  #allocation1 [shape = 'u32[144,128]{1,0:T(1,128)}', space=vmem, size = 0x12000, scoped, tag = 'internal scratch']
  %s0 = inlined_call_operand.vmem [shape: f32[2,3,2048], index: 0, kind: input, shape index: {}]
  %s1 = inlined_call_operand.vmem [shape: f32[64,3], index: 1, kind: input, shape index: {}]
  %s2 = inlined_call_operand.vmem [shape: f32[1,64], index: 2, kind: input, shape index: {}]
  %s3 = inlined_call_operand.vmem [shape: bf16[64,128], index: 3, kind: input, shape index: {}]
  %s4 = inlined_call_operand.vmem [shape: f32[1,128], index: 4, kind: input, shape index: {}]
  %s5 = inlined_call_operand.vmem [shape: bf16[128,256], index: 5, kind: input, shape index: {}]
  %s6 = inlined_call_operand.vmem [shape: f32[1,256], index: 6, kind: input, shape index: {}]
  %s7 = inlined_call_operand.hbm [shape: bf16[256,512], index: 7, kind: input, shape index: {}]
  %s8 = inlined_call_operand.vmem [shape: f32[1,512], index: 8, kind: input, shape index: {}]
  %s9 = inlined_call_operand.hbm [shape: bf16[512,256], index: 9, kind: input, shape index: {}]
  %s10 = inlined_call_operand.vmem [shape: f32[1,256], index: 10, kind: input, shape index: {}]
  %s11 = inlined_call_operand.hbm [shape: f32[2,2,1,256], index: 11, kind: output, shape index: {}]
  %s12 = sld [smem:[#allocation0]]
  $region89: #{tpu_custom_call.1} parent=0
    _
  %s14 = ssub.s32 1, %s12
  %s15 = scalar_select 0, %s14, %s12
  $region1: #{tpu_custom_call.1} parent=0
    #allocation2 [shape = 'u8[262144]{0}', space=vmem, size = 0x40000, scoped, tag = 'input window, operand 7, single buffered']
    #allocation3 [shape = 's32[2]{0}', space=sflag, size = 0x8, scoped, tag = 'scoped memory for tpu_custom_call.1']
    #allocation4 [shape = 's32[2]{0}', space=sflag, size = 0x8, scoped, tag = 'scoped memory for tpu_custom_call.1']
    #allocation5 [shape = 'u8[262144]{0}', space=vmem, size = 0x40000, scoped, tag = 'input window, operand 9, single buffered']
    #allocation6 [shape = 's32[1]{0}', space=sflag, size = 0x4, scoped, tag = 'scoped memory for tpu_custom_call.1']
    #allocation7 [shape = 'u8[2048]{0}', space=vmem, size = 0x800, scoped, tag = 'output window, operand 0']
    %16 = vsyncpa [#allocation3], 0
    %17 = vsyncpa [#allocation6], 0
    %18 = vsyncpa [#allocation4], 0
    %s19 = scalar_lea.sflag [#allocation4], 1
    %20 = vsyncpa %s19, 0
    loop: start=0, step=1, limit=10
    $region2: #{tpu_custom_call.1} parent=1 // loop_pre_header
      _
    $region3: #{tpu_custom_call.1} parent=1 // loop_header
      %s22 = sphi 0, %s26
      %p23 = scmp.ge.s32.totalorder %s22, 10
      %s29 = sphi 0, %s48
      %s30 = sphi 0, %s44
      %s31 = sphi 0, %s40
      %s32 = sphi 0, %s29
      %s33 = sphi 0, %s30
      %s34 = sphi 0, %s31
      %s35 = sphi 0, %s32
      %s36 = sphi 0, %s33
      %s37 = sphi 0, %s34
      %s57 = sphi 0, %s59
      %s60 = sphi 0, %s57
      %s61 = sphi 0, %s60
      %s77 = sphi 0, %s61
      %s81 = sphi 0, %s81
      %s83 = sphi 0, %s81
      %s84 = sphi 0, %s83
      %s98 = sphi 0, %s84
      %s102 = sphi 0, %s102
      %s104 = sphi 0, %s102
      %s105 = sphi 0, %s104
      %s119 = sphi 0, %s105
      %s123 = sphi 0, %s123
      %s125 = sphi 0, %s123
      %s126 = sphi 0, %s125
      %s140 = sphi 0, %s126
      %s144 = sphi 0, %s144
      %s146 = sphi 0, %s144
      %s147 = sphi 0, %s146
      %s161 = sphi 0, %s147
      %s165 = sphi 0, %s165
      %s167 = sphi 0, %s165
      %s168 = sphi 0, %s167
      %s182 = sphi 0, %s168
      %s186 = sphi 0, %s186
      %s188 = sphi 0, %s186
      %s189 = sphi 0, %s188
      %s203 = sphi 0, %s189
      %s207 = sphi 0, %s207
      %s209 = sphi 0, %s207
      %s210 = sphi 0, %s209
      %s224 = sphi 0, %s210
      %s228 = sphi 0, %s228
      %s230 = sphi 0, %s228
      %s231 = sphi 0, %s230
      %s245 = sphi 0, %s231
      %s249 = sphi 0, %s249
      %s251 = sphi 0, %s249
      %s252 = sphi 0, %s251
      %s266 = sphi 0, %s252
      %s270 = sphi 0, %s270
      %s272 = sphi 0, %s270
      %s273 = sphi 0, %s272
      %s287 = sphi 0, %s273
      %s295 = sphi 0, %s297
      %s298 = sphi 0, %s295
      %s299 = sphi 0, %s298
      %s315 = sphi 0, %s299
    $region4: #{tpu_custom_call.1} parent=1 // loop_header_branch
      %25 = sbr.rel (%p23) target = $region8
    $region5: #{tpu_custom_call.1} parent=1 // loop_body
      %s27 = ssub.s32 %s22, 1
      %s28 = ssub.s32 %s22, 2
      %s38 = sadd.s32 1, %s31
      %p39 = scmp.ge.s32.totalorder %s38, 2
      %s40 = scalar_select %p39, 0, %s38
      %s41 = sadd.s32 1, %s30
      %s42 = scalar_select %p39, %s41, %s30
      %p43 = scmp.ge.s32.totalorder %s42, 2
      %s44 = scalar_select %p43, 0, %s42
      %s45 = sadd.s32 1, %s29
      %s46 = scalar_select %p43, %s45, %s29
      %p47 = scmp.ge.s32.totalorder %s46, 2
      %s48 = scalar_select %p47, 0, %s46
      %s49 = smul.u32 %s29, 2
      %s50 = sadd.s32 %s49, %s31
      %s51 = smul.u32 %s48, 2
      %s52 = sadd.s32 %s51, %s40
      %s53 = ssub.s32 %s30, %s44
      %s54 = ssub.s32 %s50, %s52
      %s55 = sor.u32 %s53, %s54
      %p56 = scmp.eq.s32.totalorder %s55, 0
      %s58 = sadd.s32 %s57, 1
      %s59 = scalar_select %p56, %s57, %s58
      %p62 = pneg %p56
      %p63 = scmp.eq.s32.totalorder %s22, 7
      %p64 = por %p62, %p63
      %p65 = scmp.ne.s32.totalorder %s57, %s60
      %p66 = scmp.eq.s32.totalorder %s22, 0
      %p67 = por %p65, %p66
      %p68 = scmp.ne.s32.totalorder %s57, %s60
      %p69 = scmp.eq.s32.totalorder %s27, 7
      %p70 = por %p68, %p69
      %p71 = scmp.ne.s32.totalorder %s60, %s61
      %p72 = scmp.eq.s32.totalorder %s27, 0
      %p73 = por %p71, %p72
      %p74 = scmp.ne.s32.totalorder %s60, %s61
      %p75 = scmp.eq.s32.totalorder %s28, 7
      %p76 = por %p74, %p75
      %p78 = scmp.ne.s32.totalorder %s61, %s77
      %p79 = scmp.eq.s32.totalorder %s28, 0
      %p80 = por %p78, %p79
      %s82 = sadd.s32 %s81, 1
      %p85 = scmp.eq.s32.totalorder %s22, 7
      %p86 = scmp.ne.s32.totalorder %s81, %s83
      %p87 = scmp.eq.s32.totalorder %s22, 0
      %p88 = por %p86, %p87
      %p89 = scmp.ne.s32.totalorder %s81, %s83
      %p90 = scmp.eq.s32.totalorder %s27, 7
      %p91 = por %p89, %p90
      %p92 = scmp.ne.s32.totalorder %s83, %s84
      %p93 = scmp.eq.s32.totalorder %s27, 0
      %p94 = por %p92, %p93
      %p95 = scmp.ne.s32.totalorder %s83, %s84
      %p96 = scmp.eq.s32.totalorder %s28, 7
      %p97 = por %p95, %p96
      %p99 = scmp.ne.s32.totalorder %s84, %s98
      %p100 = scmp.eq.s32.totalorder %s28, 0
      %p101 = por %p99, %p100
      %s103 = sadd.s32 %s102, 1
      %p106 = scmp.eq.s32.totalorder %s22, 7
      %p107 = scmp.ne.s32.totalorder %s102, %s104
      %p108 = scmp.eq.s32.totalorder %s22, 0
      %p109 = por %p107, %p108
      %p110 = scmp.ne.s32.totalorder %s102, %s104
      %p111 = scmp.eq.s32.totalorder %s27, 7
      %p112 = por %p110, %p111
      %p113 = scmp.ne.s32.totalorder %s104, %s105
      %p114 = scmp.eq.s32.totalorder %s27, 0
      %p115 = por %p113, %p114
      %p116 = scmp.ne.s32.totalorder %s104, %s105
      %p117 = scmp.eq.s32.totalorder %s28, 7
      %p118 = por %p116, %p117
      %p120 = scmp.ne.s32.totalorder %s105, %s119
      %p121 = scmp.eq.s32.totalorder %s28, 0
      %p122 = por %p120, %p121
      %s124 = sadd.s32 %s123, 1
      %p127 = scmp.eq.s32.totalorder %s22, 7
      %p128 = scmp.ne.s32.totalorder %s123, %s125
      %p129 = scmp.eq.s32.totalorder %s22, 0
      %p130 = por %p128, %p129
      %p131 = scmp.ne.s32.totalorder %s123, %s125
      %p132 = scmp.eq.s32.totalorder %s27, 7
      %p133 = por %p131, %p132
      %p134 = scmp.ne.s32.totalorder %s125, %s126
      %p135 = scmp.eq.s32.totalorder %s27, 0
      %p136 = por %p134, %p135
      %p137 = scmp.ne.s32.totalorder %s125, %s126
      %p138 = scmp.eq.s32.totalorder %s28, 7
      %p139 = por %p137, %p138
      %p141 = scmp.ne.s32.totalorder %s126, %s140
      %p142 = scmp.eq.s32.totalorder %s28, 0
      %p143 = por %p141, %p142
      %s145 = sadd.s32 %s144, 1
      %p148 = scmp.eq.s32.totalorder %s22, 7
      %p149 = scmp.ne.s32.totalorder %s144, %s146
      %p150 = scmp.eq.s32.totalorder %s22, 0
      %p151 = por %p149, %p150
      %p152 = scmp.ne.s32.totalorder %s144, %s146
      %p153 = scmp.eq.s32.totalorder %s27, 7
      %p154 = por %p152, %p153
      %p155 = scmp.ne.s32.totalorder %s146, %s147
      %p156 = scmp.eq.s32.totalorder %s27, 0
      %p157 = por %p155, %p156
      %p158 = scmp.ne.s32.totalorder %s146, %s147
      %p159 = scmp.eq.s32.totalorder %s28, 7
      %p160 = por %p158, %p159
      %p162 = scmp.ne.s32.totalorder %s147, %s161
      %p163 = scmp.eq.s32.totalorder %s28, 0
      %p164 = por %p162, %p163
      %s166 = sadd.s32 %s165, 1
      %p169 = scmp.eq.s32.totalorder %s22, 7
      %p170 = scmp.ne.s32.totalorder %s165, %s167
      %p171 = scmp.eq.s32.totalorder %s22, 0
      %p172 = por %p170, %p171
      %p173 = scmp.ne.s32.totalorder %s165, %s167
      %p174 = scmp.eq.s32.totalorder %s27, 7
      %p175 = por %p173, %p174
      %p176 = scmp.ne.s32.totalorder %s167, %s168
      %p177 = scmp.eq.s32.totalorder %s27, 0
      %p178 = por %p176, %p177
      %p179 = scmp.ne.s32.totalorder %s167, %s168
      %p180 = scmp.eq.s32.totalorder %s28, 7
      %p181 = por %p179, %p180
      %p183 = scmp.ne.s32.totalorder %s168, %s182
      %p184 = scmp.eq.s32.totalorder %s28, 0
      %p185 = por %p183, %p184
      %s187 = sadd.s32 %s186, 1
      %p190 = scmp.eq.s32.totalorder %s22, 7
      %p191 = scmp.ne.s32.totalorder %s186, %s188
      %p192 = scmp.eq.s32.totalorder %s22, 0
      %p193 = por %p191, %p192
      %p194 = scmp.ne.s32.totalorder %s186, %s188
      %p195 = scmp.eq.s32.totalorder %s27, 7
      %p196 = por %p194, %p195
      %p197 = scmp.ne.s32.totalorder %s188, %s189
      %p198 = scmp.eq.s32.totalorder %s27, 0
      %p199 = por %p197, %p198
      %p200 = scmp.ne.s32.totalorder %s188, %s189
      %p201 = scmp.eq.s32.totalorder %s28, 7
      %p202 = por %p200, %p201
      %p204 = scmp.ne.s32.totalorder %s189, %s203
      %p205 = scmp.eq.s32.totalorder %s28, 0
      %p206 = por %p204, %p205
      %s208 = sadd.s32 %s207, 1
      %p211 = scmp.eq.s32.totalorder %s22, 7
      %p212 = scmp.ne.s32.totalorder %s207, %s209
      %p213 = scmp.eq.s32.totalorder %s22, 0
      %p214 = por %p212, %p213
      %p215 = scmp.ne.s32.totalorder %s207, %s209
      %p216 = scmp.eq.s32.totalorder %s27, 7
      %p217 = por %p215, %p216
      %p218 = scmp.ne.s32.totalorder %s209, %s210
      %p219 = scmp.eq.s32.totalorder %s27, 0
      %p220 = por %p218, %p219
      %p221 = scmp.ne.s32.totalorder %s209, %s210
      %p222 = scmp.eq.s32.totalorder %s28, 7
      %p223 = por %p221, %p222
      %p225 = scmp.ne.s32.totalorder %s210, %s224
      %p226 = scmp.eq.s32.totalorder %s28, 0
      %p227 = por %p225, %p226
      %s229 = sadd.s32 %s228, 1
      %p232 = scmp.eq.s32.totalorder %s22, 7
      %p233 = scmp.ne.s32.totalorder %s228, %s230
      %p234 = scmp.eq.s32.totalorder %s22, 0
      %p235 = por %p233, %p234
      %p236 = scmp.ne.s32.totalorder %s228, %s230
      %p237 = scmp.eq.s32.totalorder %s27, 7
      %p238 = por %p236, %p237
      %p239 = scmp.ne.s32.totalorder %s230, %s231
      %p240 = scmp.eq.s32.totalorder %s27, 0
      %p241 = por %p239, %p240
      %p242 = scmp.ne.s32.totalorder %s230, %s231
      %p243 = scmp.eq.s32.totalorder %s28, 7
      %p244 = por %p242, %p243
      %p246 = scmp.ne.s32.totalorder %s231, %s245
      %p247 = scmp.eq.s32.totalorder %s28, 0
      %p248 = por %p246, %p247
      %s250 = sadd.s32 %s249, 1
      %p253 = scmp.eq.s32.totalorder %s22, 7
      %p254 = scmp.ne.s32.totalorder %s249, %s251
      %p255 = scmp.eq.s32.totalorder %s22, 0
      %p256 = por %p254, %p255
      %p257 = scmp.ne.s32.totalorder %s249, %s251
      %p258 = scmp.eq.s32.totalorder %s27, 7
      %p259 = por %p257, %p258
      %p260 = scmp.ne.s32.totalorder %s251, %s252
      %p261 = scmp.eq.s32.totalorder %s27, 0
      %p262 = por %p260, %p261
      %p263 = scmp.ne.s32.totalorder %s251, %s252
      %p264 = scmp.eq.s32.totalorder %s28, 7
      %p265 = por %p263, %p264
      %p267 = scmp.ne.s32.totalorder %s252, %s266
      %p268 = scmp.eq.s32.totalorder %s28, 0
      %p269 = por %p267, %p268
      %s271 = sadd.s32 %s270, 1
      %p274 = scmp.eq.s32.totalorder %s22, 7
      %p275 = scmp.ne.s32.totalorder %s270, %s272
      %p276 = scmp.eq.s32.totalorder %s22, 0
      %p277 = por %p275, %p276
      %p278 = scmp.ne.s32.totalorder %s270, %s272
      %p279 = scmp.eq.s32.totalorder %s27, 7
      %p280 = por %p278, %p279
      %p281 = scmp.ne.s32.totalorder %s272, %s273
      %p282 = scmp.eq.s32.totalorder %s27, 0
      %p283 = por %p281, %p282
      %p284 = scmp.ne.s32.totalorder %s272, %s273
      %p285 = scmp.eq.s32.totalorder %s28, 7
      %p286 = por %p284, %p285
      %p288 = scmp.ne.s32.totalorder %s273, %s287
      %p289 = scmp.eq.s32.totalorder %s28, 0
      %p290 = por %p288, %p289
      %s291 = ssub.s32 %s29, %s48
      %s292 = ssub.s32 %s30, %s44
      %s293 = sor.u32 %s291, %s292
      %p294 = scmp.eq.s32.totalorder %s293, 0
      %s296 = sadd.s32 %s295, 1
      %s297 = scalar_select %p294, %s295, %s296
      %p300 = pneg %p294
      %p301 = scmp.eq.s32.totalorder %s22, 7
      %p302 = por %p300, %p301
      %p303 = scmp.ne.s32.totalorder %s295, %s298
      %p304 = scmp.eq.s32.totalorder %s22, 0
      %p305 = por %p303, %p304
      %p306 = scmp.ne.s32.totalorder %s295, %s298
      %p307 = scmp.eq.s32.totalorder %s27, 7
      %p308 = por %p306, %p307
      %p309 = scmp.ne.s32.totalorder %s298, %s299
      %p310 = scmp.eq.s32.totalorder %s27, 0
      %p311 = por %p309, %p310
      %p312 = scmp.ne.s32.totalorder %s298, %s299
      %p313 = scmp.eq.s32.totalorder %s28, 7
      %p314 = por %p312, %p313
      %p316 = scmp.ne.s32.totalorder %s299, %s315
      %p317 = scmp.eq.s32.totalorder %s28, 0
      %p318 = por %p316, %p317
      %p319 = scmp.le.s32.totalorder 1, %s22
      %p320 = scmp.lt.s32.totalorder %s22, 9
      %p321 = pnand %p319, %p320
      %p322 = pneg %p321
      // Predicated region
      $region9: #{tpu_custom_call.1} parent=5 // pred_check
        _
      $region10: #{tpu_custom_call.1} parent=5 // pred_check_branch
        %324 = sbr.rel (%p321) target = $region12
      $region11: #{tpu_custom_call.1} parent=5 // pred_region
        %s325 = ssub.s32 %s22, 1
        // Predicated region
        $region13: #{tpu_custom_call.1} parent=11 // pred_check
          %p326 = pneg %p94
        $region14: #{tpu_custom_call.1} parent=11 // pred_check_branch
          %328 = sbr.rel (%p326) target = $region16
        $region15: #{tpu_custom_call.1} parent=11 // pred_region
          _
        $region16: #{tpu_custom_call.1} parent=11 // pred_fallthru
          _
        // Predicated region
        $region17: #{tpu_custom_call.1} parent=11 // pred_check
          %p329 = pneg %p115
        $region18: #{tpu_custom_call.1} parent=11 // pred_check_branch
          %331 = sbr.rel (%p329) target = $region20
        $region19: #{tpu_custom_call.1} parent=11 // pred_region
          _
        $region20: #{tpu_custom_call.1} parent=11 // pred_fallthru
          _
        // Predicated region
        $region21: #{tpu_custom_call.1} parent=11 // pred_check
          %p332 = pneg %p136
        $region22: #{tpu_custom_call.1} parent=11 // pred_check_branch
          %334 = sbr.rel (%p332) target = $region24
        $region23: #{tpu_custom_call.1} parent=11 // pred_region
          _
        $region24: #{tpu_custom_call.1} parent=11 // pred_fallthru
          _
        // Predicated region
        $region25: #{tpu_custom_call.1} parent=11 // pred_check
          %p335 = pneg %p157
        $region26: #{tpu_custom_call.1} parent=11 // pred_check_branch
          %337 = sbr.rel (%p335) target = $region28
        $region27: #{tpu_custom_call.1} parent=11 // pred_region
          _
        $region28: #{tpu_custom_call.1} parent=11 // pred_fallthru
          _
        // Predicated region
        $region29: #{tpu_custom_call.1} parent=11 // pred_check
          %p338 = pneg %p178
        $region30: #{tpu_custom_call.1} parent=11 // pred_check_branch
          %340 = sbr.rel (%p338) target = $region32
        $region31: #{tpu_custom_call.1} parent=11 // pred_region
          _
        $region32: #{tpu_custom_call.1} parent=11 // pred_fallthru
          _
        // Predicated region
        $region33: #{tpu_custom_call.1} parent=11 // pred_check
          %p341 = pneg %p199
        $region34: #{tpu_custom_call.1} parent=11 // pred_check_branch
          %343 = sbr.rel (%p341) target = $region36
        $region35: #{tpu_custom_call.1} parent=11 // pred_region
          _
        $region36: #{tpu_custom_call.1} parent=11 // pred_fallthru
          _
        // Predicated region
        $region37: #{tpu_custom_call.1} parent=11 // pred_check
          %p344 = pneg %p220
        $region38: #{tpu_custom_call.1} parent=11 // pred_check_branch
          %346 = sbr.rel (%p344) target = $region40
        $region39: #{tpu_custom_call.1} parent=11 // pred_region
          %s348 = ssub.s32 8192, 8192
          %349 = vsyncadd [#allocation3], %s348
          %s350 = sshll.u32 [#allocation2], 4
          %s351 = int_to_ptr.vmem [resolvable:$true] %s350
          %356 = dma.hbm_to_vmem [thread:$0]  %s7, 8192, %s351, [#allocation3], 256, 256, 16
        $region40: #{tpu_custom_call.1} parent=11 // pred_fallthru
          _
        // Predicated region
        $region41: #{tpu_custom_call.1} parent=11 // pred_check
          %p357 = pneg %p241
        $region42: #{tpu_custom_call.1} parent=11 // pred_check_branch
          %359 = sbr.rel (%p357) target = $region44
        $region43: #{tpu_custom_call.1} parent=11 // pred_region
          _
        $region44: #{tpu_custom_call.1} parent=11 // pred_fallthru
          _
        // Predicated region
        $region45: #{tpu_custom_call.1} parent=11 // pred_check
          %p360 = pneg %p262
        $region46: #{tpu_custom_call.1} parent=11 // pred_check_branch
          %362 = sbr.rel (%p360) target = $region48
        $region47: #{tpu_custom_call.1} parent=11 // pred_region
          %s364 = ssub.s32 8192, 8192
          %365 = vsyncadd [#allocation6], %s364
          %s366 = sshll.u32 [#allocation5], 4
          %s367 = int_to_ptr.vmem [resolvable:$true] %s366
          %372 = dma.hbm_to_vmem [thread:$0]  %s9, 8192, %s367, [#allocation6], 128, 128, 8
        $region48: #{tpu_custom_call.1} parent=11 // pred_fallthru
          _
        // Predicated region
        $region49: #{tpu_custom_call.1} parent=11 // pred_check
          %p373 = pneg %p283
        $region50: #{tpu_custom_call.1} parent=11 // pred_check_branch
          %375 = sbr.rel (%p373) target = $region52
        $region51: #{tpu_custom_call.1} parent=11 // pred_region
          _
        $region52: #{tpu_custom_call.1} parent=11 // pred_fallthru
          _
      $region12: #{tpu_custom_call.1} parent=5 // pred_fallthru
        _
      %p376 = scmp.lt.s32.totalorder %s22, 8
      // Predicated region
      $region53: #{tpu_custom_call.1} parent=5 // pred_check
        %p377 = pneg %p376
      $region54: #{tpu_custom_call.1} parent=5 // pred_check_branch
        %379 = sbr.rel (%p377) target = $region56
      $region55: #{tpu_custom_call.1} parent=5 // pred_region
        // Predicated region
        $region57: #{tpu_custom_call.1} parent=55 // pred_check
          %p380 = pneg %p67
        $region58: #{tpu_custom_call.1} parent=55 // pred_check_branch
          %382 = sbr.rel (%p380) target = $region60
        $region59: #{tpu_custom_call.1} parent=55 // pred_region
          %s383 = smul.u32 %s29, 2
          %s384 = sadd.s32 %s383, %s31
          %s385 = smul.u32 4, %s384
          %p386 = scmp.lt.s32.totalorder %s30, 1
          %s387 = scalar_select %p386, %s30, 1
          %p388 = scmp.lt.s32.totalorder %s385, 15
          %s389 = scalar_select %p388, %s385, 15
          %s390 = smul.addr %s387, 16
          %s391 = sadd.s32 %s389, %s390
          %s392 = smul.addr %s391, 4
          %s393 = scalar_lea.vmem %s0, %s392
          %s394 = smul.u32 %s29, 2
          %s395 = sadd.s32 %s394, %s31
          %s396 = smul.u32 4, %s395
        $region60: #{tpu_custom_call.1} parent=55 // pred_fallthru
          _
      $region56: #{tpu_custom_call.1} parent=5 // pred_fallthru
        _
      %p397 = scmp.le.s32.totalorder 1, %s22
      %p398 = scmp.lt.s32.totalorder %s22, 9
      %p399 = pnand %p397, %p398
      %p400 = pneg %p399
      // Predicated region
      $region61: #{tpu_custom_call.1} parent=5 // pred_check
        _
      $region62: #{tpu_custom_call.1} parent=5 // pred_check_branch
        %402 = sbr.rel (%p399) target = $region64
      $region63: #{tpu_custom_call.1} parent=5 // pred_region
        %s403 = ssub.s32 %s22, 1
        // Predicated region
        $region65: #{tpu_custom_call.1} parent=63 // pred_check
          %p404 = pneg %p220
        $region66: #{tpu_custom_call.1} parent=63 // pred_check_branch
          %406 = sbr.rel (%p404) target = $region68
        $region67: #{tpu_custom_call.1} parent=63 // pred_region
          %407 = dma.done [#allocation3], 8192
        $region68: #{tpu_custom_call.1} parent=63 // pred_fallthru
          _
        // Predicated region
        $region69: #{tpu_custom_call.1} parent=63 // pred_check
          %p408 = pneg %p262
        $region70: #{tpu_custom_call.1} parent=63 // pred_check_branch
          %410 = sbr.rel (%p408) target = $region72
        $region71: #{tpu_custom_call.1} parent=63 // pred_region
          %411 = dma.done [#allocation6], 8192
        $region72: #{tpu_custom_call.1} parent=63 // pred_fallthru
          _
        %s412 = smul.u32 %s32, 2
        %s413 = sadd.s32 %s412, %s34
        %s414 = smul.u32 4, %s413
        %p415 = scmp.lt.s32.totalorder %s33, 1
        %s416 = scalar_select %p415, %s33, 1
        %p417 = scmp.lt.s32.totalorder %s414, 15
        %s418 = scalar_select %p417, %s414, 15
        %s419 = smul.addr %s416, 16
        %s420 = sadd.s32 %s418, %s419
        %s421 = smul.addr %s420, 4
        %s422 = scalar_lea.vmem %s0, %s421
        %p423 = pneg %p73
        %p424 = pneg %p70
        %p425 = pneg %p94
        %p426 = pneg %p91
        %p427 = pneg %p115
        %p428 = pneg %p112
        %p429 = pneg %p136
        %p430 = pneg %p133
        %p431 = pneg %p157
        %p432 = pneg %p154
        %p433 = pneg %p178
        %p434 = pneg %p175
        %p435 = pneg %p199
        %p436 = pneg %p196
        %p437 = pneg %p220
        %p438 = pneg %p217
        %p439 = pneg %p241
        %p440 = pneg %p238
        %p441 = pneg %p262
        %p442 = pneg %p259
        %p443 = pneg %p283
        %p444 = pneg %p280
        %p445 = pneg %p311
        %p446 = pneg %p308
        %s447 = sand.u32 %s298, 1
        %s448 = scalar_lea.sflag [#allocation4], %s447
        %s449 = sand.u32 %s298, 1
        %s450 = smul.addr %s449, 2
        %s451 = scalar_lea.vmem [#allocation7], %s450
        %s452 = smul.u32 %s32, 2
        %s453 = sadd.s32 %s452, %s34
        %s454 = smul.u32 4, %s453
        %p455 = scmp.lt.s32.totalorder %s33, 1
        %s456 = scalar_select %p455, %s33, 1
        %p457 = scmp.lt.s32.totalorder %s454, 15
        %s458 = scalar_select %p457, %s454, 15
        %s459 = smul.addr %s456, 16
        %s460 = sadd.s32 %s458, %s459
        %s461 = smul.addr %s460, 4
        %s462 = scalar_lea.vmem %s0, %s461
        %s463 = smul.u32 %s32, 2
        %s464 = sadd.s32 %s463, %s34
        %s465 = smul.u32 4, %s464
        %p467 = scmp.eq.s32.totalorder %s34, 0
        // Predicated region
        $region73: #{tpu_custom_call.1} parent=63 // pred_check
          %p468 = pneg %p467
        $region74: #{tpu_custom_call.1} parent=63 // pred_check_branch
          %470 = sbr.rel (%p468) target = $region76
        $region75: #{tpu_custom_call.1} parent=63 // pred_region
          %v471 = vlaneseq
          %vm472 = vcmp.ge.s32.totalorder %v471, 0
          %vm473 = vcmp.lt.s32.totalorder %v471, 256
          %vm474 = vmand %vm472, %vm473
          %475 = vst.msk [vmem:[%s451] sm:$0x3] %vm474, -inf
        $region76: #{tpu_custom_call.1} parent=63 // pred_fallthru
          _
        %v476 = vld [vmem:[%s462] sm:$0x77]
        %v477 = vld [vmem:[%s462 + $0x8] sm:$0x77]
        %v478 = vld [vmem:[%s1] sm:$0xff]
        %v479 = vld [vmem:[%s1 + $0x8] sm:$0xff]
        %v480 = vld [vmem:[%s1 + $0x10] sm:$0xff]
        %v481 = vld [vmem:[%s1 + $0x18] sm:$0xff]
        %v482 = vld [vmem:[%s1 + $0x20] sm:$0xff]
        %v483 = vld [vmem:[%s1 + $0x28] sm:$0xff]
        %v484 = vld [vmem:[%s1 + $0x30] sm:$0xff]
        %v485 = vld [vmem:[%s1 + $0x38] sm:$0xff]
        %487 = vset.pattern.permute.xlu0 0
        %488 = vperm.xlu0 %487, %v478
        %v489 = vpop.permute.xlu0 %488
        %492 = vset.pattern.permute.xlu0 0
        %493 = vperm.xlu0 %492, %v479
        %v494 = vpop.permute.xlu0 %493
        %497 = vset.pattern.permute.xlu0 0
        %498 = vperm.xlu0 %497, %v480
        %v499 = vpop.permute.xlu0 %498
        %502 = vset.pattern.permute.xlu0 0
        %503 = vperm.xlu0 %502, %v481
        %v504 = vpop.permute.xlu0 %503
        %507 = vset.pattern.permute.xlu0 0
        %508 = vperm.xlu0 %507, %v482
        %v509 = vpop.permute.xlu0 %508
        %512 = vset.pattern.permute.xlu0 0
        %513 = vperm.xlu0 %512, %v483
        %v514 = vpop.permute.xlu0 %513
        %517 = vset.pattern.permute.xlu0 0
        %518 = vperm.xlu0 %517, %v484
        %v519 = vpop.permute.xlu0 %518
        %522 = vset.pattern.permute.xlu0 0
        %523 = vperm.xlu0 %522, %v485
        %v524 = vpop.permute.xlu0 %523
        %v528 = vlaneseq
        %v529 = vshrl.u32 %v528, 7
        %v530 = vsub.s32 0, %v529
        %v531 = vrot.slane %v476, %v530
        %v532 = vlaneseq
        %v533 = vshrl.u32 %v532, 7
        %v534 = vsub.s32 4, %v533
        %v535 = vrot.slane %v476, %v534
        %v536 = vlaneseq
        %v537 = vshrl.u32 %v536, 7
        %v538 = vsub.s32 0, %v537
        %v539 = vrot.slane %v477, %v538
        %v540 = vlaneseq
        %v541 = vshrl.u32 %v540, 7
        %v542 = vsub.s32 4, %v541
        %v543 = vrot.slane %v477, %v542
        %v548 = vlaneseq
        %v549 = vshrl.u32 %v548, 7
        %v550 = vsub.s32 0, %v549
        %v551 = vrot.slane %v531, %v550
        %v552 = vlaneseq
        %v553 = vshrl.u32 %v552, 7
        %v554 = vsub.s32 0, %v553
        %v555 = vrot.slane %v535, %v554
        %v556 = vlaneseq
        %v557 = vshrl.u32 %v556, 7
        %v558 = vsub.s32 0, %v557
        %v559 = vrot.slane %v539, %v558
        %v560 = vlaneseq
        %v561 = vshrl.u32 %v560, 7
        %v562 = vsub.s32 0, %v561
        %v563 = vrot.slane %v543, %v562
        %v564 = vmul.f32 %v489, %v551
        %v565 = vmul.f32 %v489, %v555
        %v566 = vmul.f32 %v489, %v559
        %v567 = vmul.f32 %v489, %v563
        %v568 = vmul.f32 %v494, %v551
        %v569 = vmul.f32 %v494, %v555
        %v570 = vmul.f32 %v494, %v559
        %v571 = vmul.f32 %v494, %v563
        %v572 = vmul.f32 %v499, %v551
        %v573 = vmul.f32 %v499, %v555
        %v574 = vmul.f32 %v499, %v559
        %v575 = vmul.f32 %v499, %v563
        %v576 = vmul.f32 %v504, %v551
        %v577 = vmul.f32 %v504, %v555
        %v578 = vmul.f32 %v504, %v559
        %v579 = vmul.f32 %v504, %v563
        %v580 = vmul.f32 %v509, %v551
        %v581 = vmul.f32 %v509, %v555
        %v582 = vmul.f32 %v509, %v559
        %v583 = vmul.f32 %v509, %v563
        %v584 = vmul.f32 %v514, %v551
        %v585 = vmul.f32 %v514, %v555
        %v586 = vmul.f32 %v514, %v559
        %v587 = vmul.f32 %v514, %v563
        %v588 = vmul.f32 %v519, %v551
        %v589 = vmul.f32 %v519, %v555
        %v590 = vmul.f32 %v519, %v559
        %v591 = vmul.f32 %v519, %v563
        %v592 = vmul.f32 %v524, %v551
        %v593 = vmul.f32 %v524, %v555
        %v594 = vmul.f32 %v524, %v559
        %v595 = vmul.f32 %v524, %v563
        %596 = vset.pattern.permute.xlu0 1
        %597 = vperm.xlu0 %596, %v478
        %v598 = vpop.permute.xlu0 %597
        %600 = vset.pattern.permute.xlu0 1
        %601 = vperm.xlu0 %600, %v479
        %v602 = vpop.permute.xlu0 %601
        %604 = vset.pattern.permute.xlu0 1
        %605 = vperm.xlu0 %604, %v480
        %v606 = vpop.permute.xlu0 %605
        %608 = vset.pattern.permute.xlu0 1
        %609 = vperm.xlu0 %608, %v481
        %v610 = vpop.permute.xlu0 %609
        %612 = vset.pattern.permute.xlu0 1
        %613 = vperm.xlu0 %612, %v482
        %v614 = vpop.permute.xlu0 %613
        %616 = vset.pattern.permute.xlu0 1
        %617 = vperm.xlu0 %616, %v483
        %v618 = vpop.permute.xlu0 %617
        %620 = vset.pattern.permute.xlu0 1
        %621 = vperm.xlu0 %620, %v484
        %v622 = vpop.permute.xlu0 %621
        %624 = vset.pattern.permute.xlu0 1
        %625 = vperm.xlu0 %624, %v485
        %v626 = vpop.permute.xlu0 %625
        %v628 = vlaneseq
        %v629 = vshrl.u32 %v628, 7
        %v630 = vsub.s32 1, %v629
        %v631 = vrot.slane %v476, %v630
        %v632 = vlaneseq
        %v633 = vshrl.u32 %v632, 7
        %v634 = vsub.s32 5, %v633
        %v635 = vrot.slane %v476, %v634
        %v636 = vlaneseq
        %v637 = vshrl.u32 %v636, 7
        %v638 = vsub.s32 1, %v637
        %v639 = vrot.slane %v477, %v638
        %v640 = vlaneseq
        %v641 = vshrl.u32 %v640, 7
        %v642 = vsub.s32 5, %v641
        %v643 = vrot.slane %v477, %v642
        %v648 = vlaneseq
        %v649 = vshrl.u32 %v648, 7
        %v650 = vsub.s32 1, %v649
        %v651 = vrot.slane %v631, %v650
        %v652 = vlaneseq
        %v653 = vshrl.u32 %v652, 7
        %v654 = vsub.s32 1, %v653
        %v655 = vrot.slane %v635, %v654
        %v656 = vlaneseq
        %v657 = vshrl.u32 %v656, 7
        %v658 = vsub.s32 1, %v657
        %v659 = vrot.slane %v639, %v658
        %v660 = vlaneseq
        %v661 = vshrl.u32 %v660, 7
        %v662 = vsub.s32 1, %v661
        %v663 = vrot.slane %v643, %v662
        %v664 = vmul.f32 %v598, %v651
        %v665 = vmul.f32 %v598, %v655
        %v666 = vmul.f32 %v598, %v659
        %v667 = vmul.f32 %v598, %v663
        %v668 = vmul.f32 %v602, %v651
        %v669 = vmul.f32 %v602, %v655
        %v670 = vmul.f32 %v602, %v659
        %v671 = vmul.f32 %v602, %v663
        %v672 = vmul.f32 %v606, %v651
        %v673 = vmul.f32 %v606, %v655
        %v674 = vmul.f32 %v606, %v659
        %v675 = vmul.f32 %v606, %v663
        %v676 = vmul.f32 %v610, %v651
        %v677 = vmul.f32 %v610, %v655
        %v678 = vmul.f32 %v610, %v659
        %v679 = vmul.f32 %v610, %v663
        %v680 = vmul.f32 %v614, %v651
        %v681 = vmul.f32 %v614, %v655
        %v682 = vmul.f32 %v614, %v659
        %v683 = vmul.f32 %v614, %v663
        %v684 = vmul.f32 %v618, %v651
        %v685 = vmul.f32 %v618, %v655
        %v686 = vmul.f32 %v618, %v659
        %v687 = vmul.f32 %v618, %v663
        %v688 = vmul.f32 %v622, %v651
        %v689 = vmul.f32 %v622, %v655
        %v690 = vmul.f32 %v622, %v659
        %v691 = vmul.f32 %v622, %v663
        %v692 = vmul.f32 %v626, %v651
        %v693 = vmul.f32 %v626, %v655
        %v694 = vmul.f32 %v626, %v659
        %v695 = vmul.f32 %v626, %v663
        %v696 = vadd.f32 %v564, %v664
        %v697 = vadd.f32 %v565, %v665
        %v698 = vadd.f32 %v566, %v666
        %v699 = vadd.f32 %v567, %v667
        %v700 = vadd.f32 %v568, %v668
        %v701 = vadd.f32 %v569, %v669
        %v702 = vadd.f32 %v570, %v670
        %v703 = vadd.f32 %v571, %v671
        %v704 = vadd.f32 %v572, %v672
        %v705 = vadd.f32 %v573, %v673
        %v706 = vadd.f32 %v574, %v674
        %v707 = vadd.f32 %v575, %v675
        %v708 = vadd.f32 %v576, %v676
        %v709 = vadd.f32 %v577, %v677
        %v710 = vadd.f32 %v578, %v678
        %v711 = vadd.f32 %v579, %v679
        %v712 = vadd.f32 %v580, %v680
        %v713 = vadd.f32 %v581, %v681
        %v714 = vadd.f32 %v582, %v682
        %v715 = vadd.f32 %v583, %v683
        %v716 = vadd.f32 %v584, %v684
        %v717 = vadd.f32 %v585, %v685
        %v718 = vadd.f32 %v586, %v686
        %v719 = vadd.f32 %v587, %v687
        %v720 = vadd.f32 %v588, %v688
        %v721 = vadd.f32 %v589, %v689
        %v722 = vadd.f32 %v590, %v690
        %v723 = vadd.f32 %v591, %v691
        %v724 = vadd.f32 %v592, %v692
        %v725 = vadd.f32 %v593, %v693
        %v726 = vadd.f32 %v594, %v694
        %v727 = vadd.f32 %v595, %v695
        %728 = vset.pattern.permute.xlu0 2
        %729 = vperm.xlu0 %728, %v478
        %v730 = vpop.permute.xlu0 %729
        %732 = vset.pattern.permute.xlu0 2
        %733 = vperm.xlu0 %732, %v479
        %v734 = vpop.permute.xlu0 %733
        %736 = vset.pattern.permute.xlu0 2
        %737 = vperm.xlu0 %736, %v480
        %v738 = vpop.permute.xlu0 %737
        %740 = vset.pattern.permute.xlu0 2
        %741 = vperm.xlu0 %740, %v481
        %v742 = vpop.permute.xlu0 %741
        %744 = vset.pattern.permute.xlu0 2
        %745 = vperm.xlu0 %744, %v482
        %v746 = vpop.permute.xlu0 %745
        %748 = vset.pattern.permute.xlu0 2
        %749 = vperm.xlu0 %748, %v483
        %v750 = vpop.permute.xlu0 %749
        %752 = vset.pattern.permute.xlu0 2
        %753 = vperm.xlu0 %752, %v484
        %v754 = vpop.permute.xlu0 %753
        %756 = vset.pattern.permute.xlu0 2
        %757 = vperm.xlu0 %756, %v485
        %v758 = vpop.permute.xlu0 %757
        %v760 = vlaneseq
        %v761 = vshrl.u32 %v760, 7
        %v762 = vsub.s32 2, %v761
        %v763 = vrot.slane %v476, %v762
        %v764 = vlaneseq
        %v765 = vshrl.u32 %v764, 7
        %v766 = vsub.s32 6, %v765
        %v767 = vrot.slane %v476, %v766
        %v768 = vlaneseq
        %v769 = vshrl.u32 %v768, 7
        %v770 = vsub.s32 2, %v769
        %v771 = vrot.slane %v477, %v770
        %v772 = vlaneseq
        %v773 = vshrl.u32 %v772, 7
        %v774 = vsub.s32 6, %v773
        %v775 = vrot.slane %v477, %v774
        %v780 = vlaneseq
        %v781 = vshrl.u32 %v780, 7
        %v782 = vsub.s32 2, %v781
        %v783 = vrot.slane %v763, %v782
        %v784 = vlaneseq
        %v785 = vshrl.u32 %v784, 7
        %v786 = vsub.s32 2, %v785
        %v787 = vrot.slane %v767, %v786
        %v788 = vlaneseq
        %v789 = vshrl.u32 %v788, 7
        %v790 = vsub.s32 2, %v789
        %v791 = vrot.slane %v771, %v790
        %v792 = vlaneseq
        %v793 = vshrl.u32 %v792, 7
        %v794 = vsub.s32 2, %v793
        %v795 = vrot.slane %v775, %v794
        %v796 = vmul.f32 %v730, %v783
        %v797 = vmul.f32 %v730, %v787
        %v798 = vmul.f32 %v730, %v791
        %v799 = vmul.f32 %v730, %v795
        %v800 = vmul.f32 %v734, %v783
        %v801 = vmul.f32 %v734, %v787
        %v802 = vmul.f32 %v734, %v791
        %v803 = vmul.f32 %v734, %v795
        %v804 = vmul.f32 %v738, %v783
        %v805 = vmul.f32 %v738, %v787
        %v806 = vmul.f32 %v738, %v791
        %v807 = vmul.f32 %v738, %v795
        %v808 = vmul.f32 %v742, %v783
        %v809 = vmul.f32 %v742, %v787
        %v810 = vmul.f32 %v742, %v791
        %v811 = vmul.f32 %v742, %v795
        %v812 = vmul.f32 %v746, %v783
        %v813 = vmul.f32 %v746, %v787
        %v814 = vmul.f32 %v746, %v791
        %v815 = vmul.f32 %v746, %v795
        %v816 = vmul.f32 %v750, %v783
        %v817 = vmul.f32 %v750, %v787
        %v818 = vmul.f32 %v750, %v791
        %v819 = vmul.f32 %v750, %v795
        %v820 = vmul.f32 %v754, %v783
        %v821 = vmul.f32 %v754, %v787
        %v822 = vmul.f32 %v754, %v791
        %v823 = vmul.f32 %v754, %v795
        %v824 = vmul.f32 %v758, %v783
        %v825 = vmul.f32 %v758, %v787
        %v826 = vmul.f32 %v758, %v791
        %v827 = vmul.f32 %v758, %v795
        %v828 = vadd.f32 %v696, %v796
        %v829 = vadd.f32 %v697, %v797
        %v830 = vadd.f32 %v698, %v798
        %v831 = vadd.f32 %v699, %v799
        %v832 = vadd.f32 %v700, %v800
        %v833 = vadd.f32 %v701, %v801
        %v834 = vadd.f32 %v702, %v802
        %v835 = vadd.f32 %v703, %v803
        %v836 = vadd.f32 %v704, %v804
        %v837 = vadd.f32 %v705, %v805
        %v838 = vadd.f32 %v706, %v806
        %v839 = vadd.f32 %v707, %v807
        %v840 = vadd.f32 %v708, %v808
        %v841 = vadd.f32 %v709, %v809
        %v842 = vadd.f32 %v710, %v810
        %v843 = vadd.f32 %v711, %v811
        %v844 = vadd.f32 %v712, %v812
        %v845 = vadd.f32 %v713, %v813
        %v846 = vadd.f32 %v714, %v814
        %v847 = vadd.f32 %v715, %v815
        %v848 = vadd.f32 %v716, %v816
        %v849 = vadd.f32 %v717, %v817
        %v850 = vadd.f32 %v718, %v818
        %v851 = vadd.f32 %v719, %v819
        %v852 = vadd.f32 %v720, %v820
        %v853 = vadd.f32 %v721, %v821
        %v854 = vadd.f32 %v722, %v822
        %v855 = vadd.f32 %v723, %v823
        %v856 = vadd.f32 %v724, %v824
        %v857 = vadd.f32 %v725, %v825
        %v858 = vadd.f32 %v726, %v826
        %v859 = vadd.f32 %v727, %v827
        %860 = vxpose.xlu0.b32.start [1/16] %v828, 128
        %861 = vxpose.xlu0.b32.cont [2/16] %v832, 128
        %862 = vxpose.xlu0.b32.cont [3/16] %v836, 128
        %863 = vxpose.xlu0.b32.cont [4/16] %v840, 128
        %864 = vxpose.xlu0.b32.cont [5/16] %v844, 128
        %865 = vxpose.xlu0.b32.cont [6/16] %v848, 128
        %866 = vxpose.xlu0.b32.cont [7/16] %v852, 128
        %867 = vxpose.xlu0.b32.cont [8/16] %v856, 128
        %868 = vxpose.xlu0.b32.cont [9/16] 0.0, 128
        %869 = vxpose.xlu0.b32.cont [10/16] 0.0, 128
        %870 = vxpose.xlu0.b32.cont [11/16] 0.0, 128
        %871 = vxpose.xlu0.b32.cont [12/16] 0.0, 128
        %872 = vxpose.xlu0.b32.cont [13/16] 0.0, 128
        %873 = vxpose.xlu0.b32.cont [14/16] 0.0, 128
        %874 = vxpose.xlu0.b32.cont [15/16] 0.0, 128
        %875 = vxpose.xlu0.b32.end [16/16] 0.0, 128
        %v876 = vpop.trf.xlu0
        %v877 = vpop.trf.xlu0
        %v878 = vpop.trf.xlu0
        %v879 = vpop.trf.xlu0
        %v880 = vpop.trf.xlu0
        %v881 = vpop.trf.xlu0
        %v882 = vpop.trf.xlu0
        %v883 = vpop.trf.xlu0
        %v884 = vpop.trf.xlu0
        %v885 = vpop.trf.xlu0
        %v886 = vpop.trf.xlu0
        %v887 = vpop.trf.xlu0
        %v888 = vpop.trf.xlu0
        %v889 = vpop.trf.xlu0
        %v890 = vpop.trf.xlu0
        %v891 = vpop.trf.xlu0
        %892 = vxpose.xlu0.b32.start [1/16] %v829, 128
        %893 = vxpose.xlu0.b32.cont [2/16] %v833, 128
        %894 = vxpose.xlu0.b32.cont [3/16] %v837, 128
        %895 = vxpose.xlu0.b32.cont [4/16] %v841, 128
        %896 = vxpose.xlu0.b32.cont [5/16] %v845, 128
        %897 = vxpose.xlu0.b32.cont [6/16] %v849, 128
        %898 = vxpose.xlu0.b32.cont [7/16] %v853, 128
        %899 = vxpose.xlu0.b32.cont [8/16] %v857, 128
        %900 = vxpose.xlu0.b32.cont [9/16] 0.0, 128
        %901 = vxpose.xlu0.b32.cont [10/16] 0.0, 128
        %902 = vxpose.xlu0.b32.cont [11/16] 0.0, 128
        %903 = vxpose.xlu0.b32.cont [12/16] 0.0, 128
        %904 = vxpose.xlu0.b32.cont [13/16] 0.0, 128
        %905 = vxpose.xlu0.b32.cont [14/16] 0.0, 128
        %906 = vxpose.xlu0.b32.cont [15/16] 0.0, 128
        %907 = vxpose.xlu0.b32.end [16/16] 0.0, 128
        %v908 = vpop.trf.xlu0
        %v909 = vpop.trf.xlu0
        %v910 = vpop.trf.xlu0
        %v911 = vpop.trf.xlu0
        %v912 = vpop.trf.xlu0
        %v913 = vpop.trf.xlu0
        %v914 = vpop.trf.xlu0
        %v915 = vpop.trf.xlu0
        %v916 = vpop.trf.xlu0
        %v917 = vpop.trf.xlu0
        %v918 = vpop.trf.xlu0
        %v919 = vpop.trf.xlu0
        %v920 = vpop.trf.xlu0
        %v921 = vpop.trf.xlu0
        %v922 = vpop.trf.xlu0
        %v923 = vpop.trf.xlu0
        %924 = vxpose.xlu0.b32.start [1/16] %v830, 128
        %925 = vxpose.xlu0.b32.cont [2/16] %v834, 128
        %926 = vxpose.xlu0.b32.cont [3/16] %v838, 128
        %927 = vxpose.xlu0.b32.cont [4/16] %v842, 128
        %928 = vxpose.xlu0.b32.cont [5/16] %v846, 128
        %929 = vxpose.xlu0.b32.cont [6/16] %v850, 128
        %930 = vxpose.xlu0.b32.cont [7/16] %v854, 128
        %931 = vxpose.xlu0.b32.cont [8/16] %v858, 128
        %932 = vxpose.xlu0.b32.cont [9/16] 0.0, 128
        %933 = vxpose.xlu0.b32.cont [10/16] 0.0, 128
        %934 = vxpose.xlu0.b32.cont [11/16] 0.0, 128
        %935 = vxpose.xlu0.b32.cont [12/16] 0.0, 128
        %936 = vxpose.xlu0.b32.cont [13/16] 0.0, 128
        %937 = vxpose.xlu0.b32.cont [14/16] 0.0, 128
        %938 = vxpose.xlu0.b32.cont [15/16] 0.0, 128
        %939 = vxpose.xlu0.b32.end [16/16] 0.0, 128
        %v940 = vpop.trf.xlu0
        %v941 = vpop.trf.xlu0
        %v942 = vpop.trf.xlu0
        %v943 = vpop.trf.xlu0
        %v944 = vpop.trf.xlu0
        %v945 = vpop.trf.xlu0
        %v946 = vpop.trf.xlu0
        %v947 = vpop.trf.xlu0
        %v948 = vpop.trf.xlu0
        %v949 = vpop.trf.xlu0
        %v950 = vpop.trf.xlu0
        %v951 = vpop.trf.xlu0
        %v952 = vpop.trf.xlu0
        %v953 = vpop.trf.xlu0
        %v954 = vpop.trf.xlu0
        %v955 = vpop.trf.xlu0
        %956 = vxpose.xlu0.b32.start [1/16] %v831, 128
        %957 = vxpose.xlu0.b32.cont [2/16] %v835, 128
        %958 = vxpose.xlu0.b32.cont [3/16] %v839, 128
        %959 = vxpose.xlu0.b32.cont [4/16] %v843, 128
        %960 = vxpose.xlu0.b32.cont [5/16] %v847, 128
        %961 = vxpose.xlu0.b32.cont [6/16] %v851, 128
        %962 = vxpose.xlu0.b32.cont [7/16] %v855, 128
        %963 = vxpose.xlu0.b32.cont [8/16] %v859, 128
        %964 = vxpose.xlu0.b32.cont [9/16] 0.0, 128
        %965 = vxpose.xlu0.b32.cont [10/16] 0.0, 128
        %966 = vxpose.xlu0.b32.cont [11/16] 0.0, 128
        %967 = vxpose.xlu0.b32.cont [12/16] 0.0, 128
        %968 = vxpose.xlu0.b32.cont [13/16] 0.0, 128
        %969 = vxpose.xlu0.b32.cont [14/16] 0.0, 128
        %970 = vxpose.xlu0.b32.cont [15/16] 0.0, 128
        %971 = vxpose.xlu0.b32.end [16/16] 0.0, 128
        %v972 = vpop.trf.xlu0
        %v973 = vpop.trf.xlu0
        %v974 = vpop.trf.xlu0
        %v975 = vpop.trf.xlu0
        %v976 = vpop.trf.xlu0
        %v977 = vpop.trf.xlu0
        %v978 = vpop.trf.xlu0
        %v979 = vpop.trf.xlu0
        %v980 = vpop.trf.xlu0
        %v981 = vpop.trf.xlu0
        %v982 = vpop.trf.xlu0
        %v983 = vpop.trf.xlu0
        %v984 = vpop.trf.xlu0
        %v985 = vpop.trf.xlu0
        %v986 = vpop.trf.xlu0
        %v987 = vpop.trf.xlu0
        %v988 = vld [vmem:[%s2] sm:$0x1]
        %v990 = vlaneseq
        %v991 = vshrl.u32 %v990, 7
        %v992 = vsub.s32 0, %v991
        %v993 = vrot.slane %v988, %v992
        %v995 = vadd.f32 %v876, %v993
        %v996 = vadd.f32 %v877, %v993
        %v997 = vadd.f32 %v878, %v993
        %v998 = vadd.f32 %v879, %v993
        %v999 = vadd.f32 %v880, %v993
        %v1000 = vadd.f32 %v881, %v993
        %v1001 = vadd.f32 %v882, %v993
        %v1002 = vadd.f32 %v883, %v993
        %v1003 = vadd.f32 %v884, %v993
        %v1004 = vadd.f32 %v885, %v993
        %v1005 = vadd.f32 %v886, %v993
        %v1006 = vadd.f32 %v887, %v993
        %v1007 = vadd.f32 %v888, %v993
        %v1008 = vadd.f32 %v889, %v993
        %v1009 = vadd.f32 %v890, %v993
        %v1010 = vadd.f32 %v891, %v993
        %v1011 = vadd.f32 %v908, %v993
        %v1012 = vadd.f32 %v909, %v993
        %v1013 = vadd.f32 %v910, %v993
        %v1014 = vadd.f32 %v911, %v993
        %v1015 = vadd.f32 %v912, %v993
        %v1016 = vadd.f32 %v913, %v993
        %v1017 = vadd.f32 %v914, %v993
        %v1018 = vadd.f32 %v915, %v993
        %v1019 = vadd.f32 %v916, %v993
        %v1020 = vadd.f32 %v917, %v993
        %v1021 = vadd.f32 %v918, %v993
        %v1022 = vadd.f32 %v919, %v993
        %v1023 = vadd.f32 %v920, %v993
        %v1024 = vadd.f32 %v921, %v993
        %v1025 = vadd.f32 %v922, %v993
        %v1026 = vadd.f32 %v923, %v993
        %v1027 = vadd.f32 %v940, %v993
        %v1028 = vadd.f32 %v941, %v993
        %v1029 = vadd.f32 %v942, %v993
        %v1030 = vadd.f32 %v943, %v993
        %v1031 = vadd.f32 %v944, %v993
        %v1032 = vadd.f32 %v945, %v993
        %v1033 = vadd.f32 %v946, %v993
        %v1034 = vadd.f32 %v947, %v993
        %v1035 = vadd.f32 %v948, %v993
        %v1036 = vadd.f32 %v949, %v993
        %v1037 = vadd.f32 %v950, %v993
        %v1038 = vadd.f32 %v951, %v993
        %v1039 = vadd.f32 %v952, %v993
        %v1040 = vadd.f32 %v953, %v993
        %v1041 = vadd.f32 %v954, %v993
        %v1042 = vadd.f32 %v955, %v993
        %v1043 = vadd.f32 %v972, %v993
        %v1044 = vadd.f32 %v973, %v993
        %v1045 = vadd.f32 %v974, %v993
        %v1046 = vadd.f32 %v975, %v993
        %v1047 = vadd.f32 %v976, %v993
        %v1048 = vadd.f32 %v977, %v993
        %v1049 = vadd.f32 %v978, %v993
        %v1050 = vadd.f32 %v979, %v993
        %v1051 = vadd.f32 %v980, %v993
        %v1052 = vadd.f32 %v981, %v993
        %v1053 = vadd.f32 %v982, %v993
        %v1054 = vadd.f32 %v983, %v993
        %v1055 = vadd.f32 %v984, %v993
        %v1056 = vadd.f32 %v985, %v993
        %v1057 = vadd.f32 %v986, %v993
        %v1058 = vadd.f32 %v987, %v993
        %v1059 = vmax.f32 %v995, 0.0
        %v1060 = vmax.f32 %v996, 0.0
        %v1061 = vmax.f32 %v997, 0.0
        %v1062 = vmax.f32 %v998, 0.0
        %v1063 = vmax.f32 %v999, 0.0
        %v1064 = vmax.f32 %v1000, 0.0
        %v1065 = vmax.f32 %v1001, 0.0
        %v1066 = vmax.f32 %v1002, 0.0
        %v1067 = vmax.f32 %v1003, 0.0
        %v1068 = vmax.f32 %v1004, 0.0
        %v1069 = vmax.f32 %v1005, 0.0
        %v1070 = vmax.f32 %v1006, 0.0
        %v1071 = vmax.f32 %v1007, 0.0
        %v1072 = vmax.f32 %v1008, 0.0
        %v1073 = vmax.f32 %v1009, 0.0
        %v1074 = vmax.f32 %v1010, 0.0
        %v1075 = vmax.f32 %v1011, 0.0
        %v1076 = vmax.f32 %v1012, 0.0
        %v1077 = vmax.f32 %v1013, 0.0
        %v1078 = vmax.f32 %v1014, 0.0
        %v1079 = vmax.f32 %v1015, 0.0
        %v1080 = vmax.f32 %v1016, 0.0
        %v1081 = vmax.f32 %v1017, 0.0
        %v1082 = vmax.f32 %v1018, 0.0
        %v1083 = vmax.f32 %v1019, 0.0
        %v1084 = vmax.f32 %v1020, 0.0
        %v1085 = vmax.f32 %v1021, 0.0
        %v1086 = vmax.f32 %v1022, 0.0
        %v1087 = vmax.f32 %v1023, 0.0
        %v1088 = vmax.f32 %v1024, 0.0
        %v1089 = vmax.f32 %v1025, 0.0
        %v1090 = vmax.f32 %v1026, 0.0
        %v1091 = vmax.f32 %v1027, 0.0
        %v1092 = vmax.f32 %v1028, 0.0
        %v1093 = vmax.f32 %v1029, 0.0
        %v1094 = vmax.f32 %v1030, 0.0
        %v1095 = vmax.f32 %v1031, 0.0
        %v1096 = vmax.f32 %v1032, 0.0
        %v1097 = vmax.f32 %v1033, 0.0
        %v1098 = vmax.f32 %v1034, 0.0
        %v1099 = vmax.f32 %v1035, 0.0
        %v1100 = vmax.f32 %v1036, 0.0
        %v1101 = vmax.f32 %v1037, 0.0
        %v1102 = vmax.f32 %v1038, 0.0
        %v1103 = vmax.f32 %v1039, 0.0
        %v1104 = vmax.f32 %v1040, 0.0
        %v1105 = vmax.f32 %v1041, 0.0
        %v1106 = vmax.f32 %v1042, 0.0
        %v1107 = vmax.f32 %v1043, 0.0
        %v1108 = vmax.f32 %v1044, 0.0
        %v1109 = vmax.f32 %v1045, 0.0
        %v1110 = vmax.f32 %v1046, 0.0
        %v1111 = vmax.f32 %v1047, 0.0
        %v1112 = vmax.f32 %v1048, 0.0
        %v1113 = vmax.f32 %v1049, 0.0
        %v1114 = vmax.f32 %v1050, 0.0
        %v1115 = vmax.f32 %v1051, 0.0
        %v1116 = vmax.f32 %v1052, 0.0
        %v1117 = vmax.f32 %v1053, 0.0
        %v1118 = vmax.f32 %v1054, 0.0
        %v1119 = vmax.f32 %v1055, 0.0
        %v1120 = vmax.f32 %v1056, 0.0
        %v1121 = vmax.f32 %v1057, 0.0
        %v1122 = vmax.f32 %v1058, 0.0
        %v1123 = vpack.c.bf16 %v1060, %v1059
        %v1124 = vpack.c.bf16 %v1062, %v1061
        %v1125 = vpack.c.bf16 %v1064, %v1063
        %v1126 = vpack.c.bf16 %v1066, %v1065
        %v1127 = vpack.c.bf16 %v1068, %v1067
        %v1128 = vpack.c.bf16 %v1070, %v1069
        %v1129 = vpack.c.bf16 %v1072, %v1071
        %v1130 = vpack.c.bf16 %v1074, %v1073
        %v1131 = vpack.c.bf16 %v1076, %v1075
        %v1132 = vpack.c.bf16 %v1078, %v1077
        %v1133 = vpack.c.bf16 %v1080, %v1079
        %v1134 = vpack.c.bf16 %v1082, %v1081
        %v1135 = vpack.c.bf16 %v1084, %v1083
        %v1136 = vpack.c.bf16 %v1086, %v1085
        %v1137 = vpack.c.bf16 %v1088, %v1087
        %v1138 = vpack.c.bf16 %v1090, %v1089
        %v1139 = vpack.c.bf16 %v1092, %v1091
        %v1140 = vpack.c.bf16 %v1094, %v1093
        %v1141 = vpack.c.bf16 %v1096, %v1095
        %v1142 = vpack.c.bf16 %v1098, %v1097
        %v1143 = vpack.c.bf16 %v1100, %v1099
        %v1144 = vpack.c.bf16 %v1102, %v1101
        %v1145 = vpack.c.bf16 %v1104, %v1103
        %v1146 = vpack.c.bf16 %v1106, %v1105
        %v1147 = vpack.c.bf16 %v1108, %v1107
        %v1148 = vpack.c.bf16 %v1110, %v1109
        %v1149 = vpack.c.bf16 %v1112, %v1111
        %v1150 = vpack.c.bf16 %v1114, %v1113
        %v1151 = vpack.c.bf16 %v1116, %v1115
        %v1152 = vpack.c.bf16 %v1118, %v1117
        %v1153 = vpack.c.bf16 %v1120, %v1119
        %v1154 = vpack.c.bf16 %v1122, %v1121
        %v1155 = vld [vmem:[%s3] sm:$0xf]
        %v1156 = vld [vmem:[%s3 + $0x4] sm:$0xf]
        %v1157 = vld [vmem:[%s3 + $0x8] sm:$0xf]
        %v1158 = vld [vmem:[%s3 + $0xc] sm:$0xf]
        %v1159 = vld [vmem:[%s3 + $0x10] sm:$0xf]
        %v1160 = vld [vmem:[%s3 + $0x14] sm:$0xf]
        %v1161 = vld [vmem:[%s3 + $0x18] sm:$0xf]
        %v1162 = vld [vmem:[%s3 + $0x1c] sm:$0xf]
        %v1171 = vunpack.c.l.b16 %v1155
        %v1172 = vunpack.c.l.b16 %v1156
        %v1173 = vunpack.c.l.b16 %v1157
        %v1174 = vunpack.c.l.b16 %v1158
        %v1175 = vunpack.c.l.b16 %v1159
        %v1176 = vunpack.c.l.b16 %v1160
        %v1177 = vunpack.c.l.b16 %v1161
        %v1178 = vunpack.c.l.b16 %v1162
        %v1179 = vpack.c.b16 %v1172, %v1171
        %v1180 = vpack.c.b16 %v1174, %v1173
        %v1181 = vpack.c.b16 %v1176, %v1175
        %v1182 = vpack.c.b16 %v1178, %v1177
        %vm1187 = vcmask 523264
        %v1189 = vsel %vm1187, %v1123, 0
        %v1192 = vsel %vm1187, %v1124, 0
        %v1195 = vsel %vm1187, %v1125, 0
        %v1198 = vsel %vm1187, %v1126, 0
        %v1201 = vsel %vm1187, %v1127, 0
        %v1204 = vsel %vm1187, %v1128, 0
        %v1207 = vsel %vm1187, %v1129, 0
        %v1210 = vsel %vm1187, %v1130, 0
        %v1213 = vsel %vm1187, %v1131, 0
        %v1216 = vsel %vm1187, %v1132, 0
        %v1219 = vsel %vm1187, %v1133, 0
        %v1222 = vsel %vm1187, %v1134, 0
        %v1225 = vsel %vm1187, %v1135, 0
        %v1228 = vsel %vm1187, %v1136, 0
        %v1231 = vsel %vm1187, %v1137, 0
        %v1234 = vsel %vm1187, %v1138, 0
        %v1237 = vsel %vm1187, %v1139, 0
        %v1240 = vsel %vm1187, %v1140, 0
        %v1243 = vsel %vm1187, %v1141, 0
        %v1246 = vsel %vm1187, %v1142, 0
        %v1249 = vsel %vm1187, %v1143, 0
        %v1252 = vsel %vm1187, %v1144, 0
        %v1255 = vsel %vm1187, %v1145, 0
        %v1258 = vsel %vm1187, %v1146, 0
        %v1261 = vsel %vm1187, %v1147, 0
        %v1264 = vsel %vm1187, %v1148, 0
        %v1267 = vsel %vm1187, %v1149, 0
        %v1270 = vsel %vm1187, %v1150, 0
        %v1273 = vsel %vm1187, %v1151, 0
        %v1276 = vsel %vm1187, %v1152, 0
        %v1279 = vsel %vm1187, %v1153, 0
        %v1282 = vsel %vm1187, %v1154, 0
        %1284 = vmatprep.subr.bf16.mxu0 0
        %1285 = vmatpush1.bf16.msra.mxu0 0
        %1286 = vmatprep.subr.bf16.mxu0 0
        %1287 = vmatpush1.bf16.msra.mxu0 0
        %1288 = vmatprep.subr.bf16.mxu0 0
        %1289 = vmatpush1.bf16.msra.mxu0 0
        %1290 = vmatprep.subr.bf16.mxu0 0
        %1291 = vmatpush1.bf16.msra.mxu0 0
        %1292 = vmatprep.subr.bf16.mxu0 0
        %1293 = vmatpush1.bf16.msra.mxu0 %v1182
        %1294 = vmatprep.subr.bf16.mxu0 0
        %1295 = vmatpush1.bf16.msra.mxu0 %v1181
        %1296 = vmatprep.subr.bf16.mxu0 0
        %1297 = vmatpush1.bf16.msra.mxu0 %v1180
        %1298 = vmatprep.subr.bf16.mxu0 0
        %1299 = vmatpush1.bf16.msra.mxu0 %v1179
        %1300 = vmatprep.subr.bf16.mxu0 0
        %1301 = vmatpush2.bf16.msra.mxu0 0
        %1302 = vmatprep.subr.bf16.mxu0 0
        %1303 = vmatpush2.bf16.msra.mxu0 0
        %1304 = vmatprep.subr.bf16.mxu0 0
        %1305 = vmatpush2.bf16.msra.mxu0 0
        %1306 = vmatprep.subr.bf16.mxu0 0
        %1307 = vmatpush2.bf16.msra.mxu0 0
        %1308 = vmatprep.subr.bf16.mxu0 0
        %1309 = vmatpush2.bf16.msra.mxu0 0
        %1310 = vmatprep.subr.bf16.mxu0 0
        %1311 = vmatpush2.bf16.msra.mxu0 0
        %1312 = vmatprep.subr.bf16.mxu0 0
        %1313 = vmatpush2.bf16.msra.mxu0 0
        %1314 = vmatprep.subr.bf16.mxu0 0
        %1315 = vmatpush2.bf16.msra.mxu0 0
        %1316 = vmatprep.mubr.bf16.mxu0 0
        %1317 = vmatmul.mubr.bf16.gmra.mxu0 %v1189
        %v1318 = vpop.f32.mrf.mxu0
        %v1319 = vadd.f32 0.0, %v1318
        %v1320 = vpop.f32.mrf.mxu0
        %v1321 = vpop.f32.mrf.mxu0
        %v1322 = vadd.f32 0.0, %v1321
        %v1323 = vpop.f32.mrf.mxu0
        %1324 = vmatprep.mubr.bf16.mxu0 0
        %1325 = vmatmul.mubr.bf16.gmra.mxu0 %v1192
        %v1326 = vpop.f32.mrf.mxu0
        %v1327 = vadd.f32 0.0, %v1326
        %v1328 = vpop.f32.mrf.mxu0
        %v1329 = vpop.f32.mrf.mxu0
        %v1330 = vadd.f32 0.0, %v1329
        %v1331 = vpop.f32.mrf.mxu0
        %1332 = vmatprep.mubr.bf16.mxu0 0
        %1333 = vmatmul.mubr.bf16.gmra.mxu0 %v1195
        %v1334 = vpop.f32.mrf.mxu0
        %v1335 = vadd.f32 0.0, %v1334
        %v1336 = vpop.f32.mrf.mxu0
        %v1337 = vpop.f32.mrf.mxu0
        %v1338 = vadd.f32 0.0, %v1337
        %v1339 = vpop.f32.mrf.mxu0
        %1340 = vmatprep.mubr.bf16.mxu0 0
        %1341 = vmatmul.mubr.bf16.gmra.mxu0 %v1198
        %v1342 = vpop.f32.mrf.mxu0
        %v1343 = vadd.f32 0.0, %v1342
        %v1344 = vpop.f32.mrf.mxu0
        %v1345 = vpop.f32.mrf.mxu0
        %v1346 = vadd.f32 0.0, %v1345
        %v1347 = vpop.f32.mrf.mxu0
        %1348 = vmatprep.mubr.bf16.mxu0 0
        %1349 = vmatmul.mubr.bf16.gmra.mxu0 %v1201
        %v1350 = vpop.f32.mrf.mxu0
        %v1351 = vadd.f32 0.0, %v1350
        %v1352 = vpop.f32.mrf.mxu0
        %v1353 = vpop.f32.mrf.mxu0
        %v1354 = vadd.f32 0.0, %v1353
        %v1355 = vpop.f32.mrf.mxu0
        %1356 = vmatprep.mubr.bf16.mxu0 0
        %1357 = vmatmul.mubr.bf16.gmra.mxu0 %v1204
        %v1358 = vpop.f32.mrf.mxu0
        %v1359 = vadd.f32 0.0, %v1358
        %v1360 = vpop.f32.mrf.mxu0
        %v1361 = vpop.f32.mrf.mxu0
        %v1362 = vadd.f32 0.0, %v1361
        %v1363 = vpop.f32.mrf.mxu0
        %1364 = vmatprep.mubr.bf16.mxu0 0
        %1365 = vmatmul.mubr.bf16.gmra.mxu0 %v1207
        %v1366 = vpop.f32.mrf.mxu0
        %v1367 = vadd.f32 0.0, %v1366
        %v1368 = vpop.f32.mrf.mxu0
        %v1369 = vpop.f32.mrf.mxu0
        %v1370 = vadd.f32 0.0, %v1369
        %v1371 = vpop.f32.mrf.mxu0
        %1372 = vmatprep.mubr.bf16.mxu0 0
        %1373 = vmatmul.mubr.bf16.gmra.mxu0 %v1210
        %v1374 = vpop.f32.mrf.mxu0
        %v1375 = vadd.f32 0.0, %v1374
        %v1376 = vpop.f32.mrf.mxu0
        %v1377 = vpop.f32.mrf.mxu0
        %v1378 = vadd.f32 0.0, %v1377
        %v1379 = vpop.f32.mrf.mxu0
        %1380 = vmatprep.mubr.bf16.mxu0 0
        %1381 = vmatmul.mubr.bf16.gmra.mxu0 %v1213
        %v1382 = vpop.f32.mrf.mxu0
        %v1383 = vadd.f32 0.0, %v1382
        %v1384 = vpop.f32.mrf.mxu0
        %v1385 = vpop.f32.mrf.mxu0
        %v1386 = vadd.f32 0.0, %v1385
        %v1387 = vpop.f32.mrf.mxu0
        %1388 = vmatprep.mubr.bf16.mxu0 0
        %1389 = vmatmul.mubr.bf16.gmra.mxu0 %v1216
        %v1390 = vpop.f32.mrf.mxu0
        %v1391 = vadd.f32 0.0, %v1390
        %v1392 = vpop.f32.mrf.mxu0
        %v1393 = vpop.f32.mrf.mxu0
        %v1394 = vadd.f32 0.0, %v1393
        %v1395 = vpop.f32.mrf.mxu0
        %1396 = vmatprep.mubr.bf16.mxu0 0
        %1397 = vmatmul.mubr.bf16.gmra.mxu0 %v1219
        %v1398 = vpop.f32.mrf.mxu0
        %v1399 = vadd.f32 0.0, %v1398
        %v1400 = vpop.f32.mrf.mxu0
        %v1401 = vpop.f32.mrf.mxu0
        %v1402 = vadd.f32 0.0, %v1401
        %v1403 = vpop.f32.mrf.mxu0
        %1404 = vmatprep.mubr.bf16.mxu0 0
        %1405 = vmatmul.mubr.bf16.gmra.mxu0 %v1222
        %v1406 = vpop.f32.mrf.mxu0
        %v1407 = vadd.f32 0.0, %v1406
        %v1408 = vpop.f32.mrf.mxu0
        %v1409 = vpop.f32.mrf.mxu0
        %v1410 = vadd.f32 0.0, %v1409
        %v1411 = vpop.f32.mrf.mxu0
        %1412 = vmatprep.mubr.bf16.mxu0 0
        %1413 = vmatmul.mubr.bf16.gmra.mxu0 %v1225
        %v1414 = vpop.f32.mrf.mxu0
        %v1415 = vadd.f32 0.0, %v1414
        %v1416 = vpop.f32.mrf.mxu0
        %v1417 = vpop.f32.mrf.mxu0
        %v1418 = vadd.f32 0.0, %v1417
        %v1419 = vpop.f32.mrf.mxu0
        %1420 = vmatprep.mubr.bf16.mxu0 0
        %1421 = vmatmul.mubr.bf16.gmra.mxu0 %v1228
        %v1422 = vpop.f32.mrf.mxu0
        %v1423 = vadd.f32 0.0, %v1422
        %v1424 = vpop.f32.mrf.mxu0
        %v1425 = vpop.f32.mrf.mxu0
        %v1426 = vadd.f32 0.0, %v1425
        %v1427 = vpop.f32.mrf.mxu0
        %1428 = vmatprep.mubr.bf16.mxu0 0
        %1429 = vmatmul.mubr.bf16.gmra.mxu0 %v1231
        %v1430 = vpop.f32.mrf.mxu0
        %v1431 = vadd.f32 0.0, %v1430
        %v1432 = vpop.f32.mrf.mxu0
        %v1433 = vpop.f32.mrf.mxu0
        %v1434 = vadd.f32 0.0, %v1433
        %v1435 = vpop.f32.mrf.mxu0
        %1436 = vmatprep.mubr.bf16.mxu0 0
        %1437 = vmatmul.mubr.bf16.gmra.mxu0 %v1234
        %v1438 = vpop.f32.mrf.mxu0
        %v1439 = vadd.f32 0.0, %v1438
        %v1440 = vpop.f32.mrf.mxu0
        %v1441 = vpop.f32.mrf.mxu0
        %v1442 = vadd.f32 0.0, %v1441
        %v1443 = vpop.f32.mrf.mxu0
        %1444 = vmatprep.mubr.bf16.mxu0 0
        %1445 = vmatmul.mubr.bf16.gmra.mxu0 %v1237
        %v1446 = vpop.f32.mrf.mxu0
        %v1447 = vadd.f32 0.0, %v1446
        %v1448 = vpop.f32.mrf.mxu0
        %v1449 = vpop.f32.mrf.mxu0
        %v1450 = vadd.f32 0.0, %v1449
        %v1451 = vpop.f32.mrf.mxu0
        %1452 = vmatprep.mubr.bf16.mxu0 0
        %1453 = vmatmul.mubr.bf16.gmra.mxu0 %v1240
        %v1454 = vpop.f32.mrf.mxu0
        %v1455 = vadd.f32 0.0, %v1454
        %v1456 = vpop.f32.mrf.mxu0
        %v1457 = vpop.f32.mrf.mxu0
        %v1458 = vadd.f32 0.0, %v1457
        %v1459 = vpop.f32.mrf.mxu0
        %1460 = vmatprep.mubr.bf16.mxu0 0
        %1461 = vmatmul.mubr.bf16.gmra.mxu0 %v1243
        %v1462 = vpop.f32.mrf.mxu0
        %v1463 = vadd.f32 0.0, %v1462
        %v1464 = vpop.f32.mrf.mxu0
        %v1465 = vpop.f32.mrf.mxu0
        %v1466 = vadd.f32 0.0, %v1465
        %v1467 = vpop.f32.mrf.mxu0
        %1468 = vmatprep.mubr.bf16.mxu0 0
        %1469 = vmatmul.mubr.bf16.gmra.mxu0 %v1246
        %v1470 = vpop.f32.mrf.mxu0
        %v1471 = vadd.f32 0.0, %v1470
        %v1472 = vpop.f32.mrf.mxu0
        %v1473 = vpop.f32.mrf.mxu0
        %v1474 = vadd.f32 0.0, %v1473
        %v1475 = vpop.f32.mrf.mxu0
        %1476 = vmatprep.mubr.bf16.mxu0 0
        %1477 = vmatmul.mubr.bf16.gmra.mxu0 %v1249
        %v1478 = vpop.f32.mrf.mxu0
        %v1479 = vadd.f32 0.0, %v1478
        %v1480 = vpop.f32.mrf.mxu0
        %v1481 = vpop.f32.mrf.mxu0
        %v1482 = vadd.f32 0.0, %v1481
        %v1483 = vpop.f32.mrf.mxu0
        %1484 = vmatprep.mubr.bf16.mxu0 0
        %1485 = vmatmul.mubr.bf16.gmra.mxu0 %v1252
        %v1486 = vpop.f32.mrf.mxu0
        %v1487 = vadd.f32 0.0, %v1486
        %v1488 = vpop.f32.mrf.mxu0
        %v1489 = vpop.f32.mrf.mxu0
        %v1490 = vadd.f32 0.0, %v1489
        %v1491 = vpop.f32.mrf.mxu0
        %1492 = vmatprep.mubr.bf16.mxu0 0
        %1493 = vmatmul.mubr.bf16.gmra.mxu0 %v1255
        %v1494 = vpop.f32.mrf.mxu0
        %v1495 = vadd.f32 0.0, %v1494
        %v1496 = vpop.f32.mrf.mxu0
        %v1497 = vpop.f32.mrf.mxu0
        %v1498 = vadd.f32 0.0, %v1497
        %v1499 = vpop.f32.mrf.mxu0
        %1500 = vmatprep.mubr.bf16.mxu0 0
        %1501 = vmatmul.mubr.bf16.gmra.mxu0 %v1258
        %v1502 = vpop.f32.mrf.mxu0
        %v1503 = vadd.f32 0.0, %v1502
        %v1504 = vpop.f32.mrf.mxu0
        %v1505 = vpop.f32.mrf.mxu0
        %v1506 = vadd.f32 0.0, %v1505
        %v1507 = vpop.f32.mrf.mxu0
        %1508 = vmatprep.mubr.bf16.mxu0 0
        %1509 = vmatmul.mubr.bf16.gmra.mxu0 %v1261
        %v1510 = vpop.f32.mrf.mxu0
        %v1511 = vadd.f32 0.0, %v1510
        %v1512 = vpop.f32.mrf.mxu0
        %v1513 = vpop.f32.mrf.mxu0
        %v1514 = vadd.f32 0.0, %v1513
        %v1515 = vpop.f32.mrf.mxu0
        %1516 = vmatprep.mubr.bf16.mxu0 0
        %1517 = vmatmul.mubr.bf16.gmra.mxu0 %v1264
        %v1518 = vpop.f32.mrf.mxu0
        %v1519 = vadd.f32 0.0, %v1518
        %v1520 = vpop.f32.mrf.mxu0
        %v1521 = vpop.f32.mrf.mxu0
        %v1522 = vadd.f32 0.0, %v1521
        %v1523 = vpop.f32.mrf.mxu0
        %1524 = vmatprep.mubr.bf16.mxu0 0
        %1525 = vmatmul.mubr.bf16.gmra.mxu0 %v1267
        %v1526 = vpop.f32.mrf.mxu0
        %v1527 = vadd.f32 0.0, %v1526
        %v1528 = vpop.f32.mrf.mxu0
        %v1529 = vpop.f32.mrf.mxu0
        %v1530 = vadd.f32 0.0, %v1529
        %v1531 = vpop.f32.mrf.mxu0
        %1532 = vmatprep.mubr.bf16.mxu0 0
        %1533 = vmatmul.mubr.bf16.gmra.mxu0 %v1270
        %v1534 = vpop.f32.mrf.mxu0
        %v1535 = vadd.f32 0.0, %v1534
        %v1536 = vpop.f32.mrf.mxu0
        %v1537 = vpop.f32.mrf.mxu0
        %v1538 = vadd.f32 0.0, %v1537
        %v1539 = vpop.f32.mrf.mxu0
        %1540 = vmatprep.mubr.bf16.mxu0 0
        %1541 = vmatmul.mubr.bf16.gmra.mxu0 %v1273
        %v1542 = vpop.f32.mrf.mxu0
        %v1543 = vadd.f32 0.0, %v1542
        %v1544 = vpop.f32.mrf.mxu0
        %v1545 = vpop.f32.mrf.mxu0
        %v1546 = vadd.f32 0.0, %v1545
        %v1547 = vpop.f32.mrf.mxu0
        %1548 = vmatprep.mubr.bf16.mxu0 0
        %1549 = vmatmul.mubr.bf16.gmra.mxu0 %v1276
        %v1550 = vpop.f32.mrf.mxu0
        %v1551 = vadd.f32 0.0, %v1550
        %v1552 = vpop.f32.mrf.mxu0
        %v1553 = vpop.f32.mrf.mxu0
        %v1554 = vadd.f32 0.0, %v1553
        %v1555 = vpop.f32.mrf.mxu0
        %1556 = vmatprep.mubr.bf16.mxu0 0
        %1557 = vmatmul.mubr.bf16.gmra.mxu0 %v1279
        %v1558 = vpop.f32.mrf.mxu0
        %v1559 = vadd.f32 0.0, %v1558
        %v1560 = vpop.f32.mrf.mxu0
        %v1561 = vpop.f32.mrf.mxu0
        %v1562 = vadd.f32 0.0, %v1561
        %v1563 = vpop.f32.mrf.mxu0
        %1564 = vmatprep.mubr.bf16.mxu0 0
        %1565 = vmatmul.mubr.bf16.gmra.mxu0 %v1282
        %v1566 = vpop.f32.mrf.mxu0
        %v1567 = vadd.f32 0.0, %v1566
        %v1568 = vpop.f32.mrf.mxu0
        %v1569 = vpop.f32.mrf.mxu0
        %v1570 = vadd.f32 0.0, %v1569
        %v1571 = vpop.f32.mrf.mxu0
        %1572 = vdwg.mxu0
        %v1573 = vpack.c.bf16 %v1322, %v1319
        %v1574 = vpack.c.bf16 %v1330, %v1327
        %v1575 = vpack.c.bf16 %v1338, %v1335
        %v1576 = vpack.c.bf16 %v1346, %v1343
        %v1577 = vpack.c.bf16 %v1354, %v1351
        %v1578 = vpack.c.bf16 %v1362, %v1359
        %v1579 = vpack.c.bf16 %v1370, %v1367
        %v1580 = vpack.c.bf16 %v1378, %v1375
        %v1581 = vpack.c.bf16 %v1386, %v1383
        %v1582 = vpack.c.bf16 %v1394, %v1391
        %v1583 = vpack.c.bf16 %v1402, %v1399
        %v1584 = vpack.c.bf16 %v1410, %v1407
        %v1585 = vpack.c.bf16 %v1418, %v1415
        %v1586 = vpack.c.bf16 %v1426, %v1423
        %v1587 = vpack.c.bf16 %v1434, %v1431
        %v1588 = vpack.c.bf16 %v1442, %v1439
        %v1589 = vpack.c.bf16 %v1450, %v1447
        %v1590 = vpack.c.bf16 %v1458, %v1455
        %v1591 = vpack.c.bf16 %v1466, %v1463
        %v1592 = vpack.c.bf16 %v1474, %v1471
        %v1593 = vpack.c.bf16 %v1482, %v1479
        %v1594 = vpack.c.bf16 %v1490, %v1487
        %v1595 = vpack.c.bf16 %v1498, %v1495
        %v1596 = vpack.c.bf16 %v1506, %v1503
        %v1597 = vpack.c.bf16 %v1514, %v1511
        %v1598 = vpack.c.bf16 %v1522, %v1519
        %v1599 = vpack.c.bf16 %v1530, %v1527
        %v1600 = vpack.c.bf16 %v1538, %v1535
        %v1601 = vpack.c.bf16 %v1546, %v1543
        %v1602 = vpack.c.bf16 %v1554, %v1551
        %v1603 = vpack.c.bf16 %v1562, %v1559
        %v1604 = vpack.c.bf16 %v1570, %v1567
        %v1605 = vld [vmem:[%s4] sm:$0x1]
        %v1606 = vpack.c.bf16 %v1605, %v1605
        %v1608 = vpack.i.b16 %v1606, %v1606
        %v1610 = vlaneseq
        %v1611 = vshrl.u32 %v1610, 7
        %v1612 = vsub.s32 0, %v1611
        %v1613 = vrot.slane %v1608, %v1612
        %v1614 = vadd.bf16 %v1573, %v1613
        %v1615 = vadd.bf16 %v1574, %v1613
        %v1616 = vadd.bf16 %v1575, %v1613
        %v1617 = vadd.bf16 %v1576, %v1613
        %v1618 = vadd.bf16 %v1577, %v1613
        %v1619 = vadd.bf16 %v1578, %v1613
        %v1620 = vadd.bf16 %v1579, %v1613
        %v1621 = vadd.bf16 %v1580, %v1613
        %v1622 = vadd.bf16 %v1581, %v1613
        %v1623 = vadd.bf16 %v1582, %v1613
        %v1624 = vadd.bf16 %v1583, %v1613
        %v1625 = vadd.bf16 %v1584, %v1613
        %v1626 = vadd.bf16 %v1585, %v1613
        %v1627 = vadd.bf16 %v1586, %v1613
        %v1628 = vadd.bf16 %v1587, %v1613
        %v1629 = vadd.bf16 %v1588, %v1613
        %v1630 = vadd.bf16 %v1589, %v1613
        %v1631 = vadd.bf16 %v1590, %v1613
        %v1632 = vadd.bf16 %v1591, %v1613
        %v1633 = vadd.bf16 %v1592, %v1613
        %v1634 = vadd.bf16 %v1593, %v1613
        %v1635 = vadd.bf16 %v1594, %v1613
        %v1636 = vadd.bf16 %v1595, %v1613
        %v1637 = vadd.bf16 %v1596, %v1613
        %v1638 = vadd.bf16 %v1597, %v1613
        %v1639 = vadd.bf16 %v1598, %v1613
        %v1640 = vadd.bf16 %v1599, %v1613
        %v1641 = vadd.bf16 %v1600, %v1613
        %v1642 = vadd.bf16 %v1601, %v1613
        %v1643 = vadd.bf16 %v1602, %v1613
        %v1644 = vadd.bf16 %v1603, %v1613
        %v1645 = vadd.bf16 %v1604, %v1613
        %v1646 = vmax.bf16 %v1614, 0
        %v1647 = vmax.bf16 %v1615, 0
        %v1648 = vmax.bf16 %v1616, 0
        %v1649 = vmax.bf16 %v1617, 0
        %v1650 = vmax.bf16 %v1618, 0
        %v1651 = vmax.bf16 %v1619, 0
        %v1652 = vmax.bf16 %v1620, 0
        %v1653 = vmax.bf16 %v1621, 0
        %v1654 = vmax.bf16 %v1622, 0
        %v1655 = vmax.bf16 %v1623, 0
        %v1656 = vmax.bf16 %v1624, 0
        %v1657 = vmax.bf16 %v1625, 0
        %v1658 = vmax.bf16 %v1626, 0
        %v1659 = vmax.bf16 %v1627, 0
        %v1660 = vmax.bf16 %v1628, 0
        %v1661 = vmax.bf16 %v1629, 0
        %v1662 = vmax.bf16 %v1630, 0
        %v1663 = vmax.bf16 %v1631, 0
        %v1664 = vmax.bf16 %v1632, 0
        %v1665 = vmax.bf16 %v1633, 0
        %v1666 = vmax.bf16 %v1634, 0
        %v1667 = vmax.bf16 %v1635, 0
        %v1668 = vmax.bf16 %v1636, 0
        %v1669 = vmax.bf16 %v1637, 0
        %v1670 = vmax.bf16 %v1638, 0
        %v1671 = vmax.bf16 %v1639, 0
        %v1672 = vmax.bf16 %v1640, 0
        %v1673 = vmax.bf16 %v1641, 0
        %v1674 = vmax.bf16 %v1642, 0
        %v1675 = vmax.bf16 %v1643, 0
        %v1676 = vmax.bf16 %v1644, 0
        %v1677 = vmax.bf16 %v1645, 0
        %v1678 = vld [vmem:[%s5] sm:$0xff]
        %v1679 = vld [vmem:[%s5 + $0x8] sm:$0xff]
        %v1680 = vld [vmem:[%s5 + $0x10] sm:$0xff]
        %v1681 = vld [vmem:[%s5 + $0x18] sm:$0xff]
        %v1682 = vld [vmem:[%s5 + $0x20] sm:$0xff]
        %v1683 = vld [vmem:[%s5 + $0x28] sm:$0xff]
        %v1684 = vld [vmem:[%s5 + $0x30] sm:$0xff]
        %v1685 = vld [vmem:[%s5 + $0x38] sm:$0xff]
        %v1686 = vld [vmem:[%s5 + $0x40] sm:$0xff]
        %v1687 = vld [vmem:[%s5 + $0x48] sm:$0xff]
        %v1688 = vld [vmem:[%s5 + $0x50] sm:$0xff]
        %v1689 = vld [vmem:[%s5 + $0x58] sm:$0xff]
        %v1690 = vld [vmem:[%s5 + $0x60] sm:$0xff]
        %v1691 = vld [vmem:[%s5 + $0x68] sm:$0xff]
        %v1692 = vld [vmem:[%s5 + $0x70] sm:$0xff]
        %v1693 = vld [vmem:[%s5 + $0x78] sm:$0xff]
        %v1710 = vunpack.c.l.b16 %v1678
        %v1711 = vunpack.c.h.b16 %v1678
        %v1712 = vunpack.c.l.b16 %v1679
        %v1713 = vunpack.c.h.b16 %v1679
        %v1714 = vunpack.c.l.b16 %v1680
        %v1715 = vunpack.c.h.b16 %v1680
        %v1716 = vunpack.c.l.b16 %v1681
        %v1717 = vunpack.c.h.b16 %v1681
        %v1718 = vunpack.c.l.b16 %v1682
        %v1719 = vunpack.c.h.b16 %v1682
        %v1720 = vunpack.c.l.b16 %v1683
        %v1721 = vunpack.c.h.b16 %v1683
        %v1722 = vunpack.c.l.b16 %v1684
        %v1723 = vunpack.c.h.b16 %v1684
        %v1724 = vunpack.c.l.b16 %v1685
        %v1725 = vunpack.c.h.b16 %v1685
        %v1726 = vunpack.c.l.b16 %v1686
        %v1727 = vunpack.c.h.b16 %v1686
        %v1728 = vunpack.c.l.b16 %v1687
        %v1729 = vunpack.c.h.b16 %v1687
        %v1730 = vunpack.c.l.b16 %v1688
        %v1731 = vunpack.c.h.b16 %v1688
        %v1732 = vunpack.c.l.b16 %v1689
        %v1733 = vunpack.c.h.b16 %v1689
        %v1734 = vunpack.c.l.b16 %v1690
        %v1735 = vunpack.c.h.b16 %v1690
        %v1736 = vunpack.c.l.b16 %v1691
        %v1737 = vunpack.c.h.b16 %v1691
        %v1738 = vunpack.c.l.b16 %v1692
        %v1739 = vunpack.c.h.b16 %v1692
        %v1740 = vunpack.c.l.b16 %v1693
        %v1741 = vunpack.c.h.b16 %v1693
        %v1742 = vpack.c.b16 %v1712, %v1710
        %v1743 = vpack.c.b16 %v1713, %v1711
        %v1744 = vpack.c.b16 %v1716, %v1714
        %v1745 = vpack.c.b16 %v1717, %v1715
        %v1746 = vpack.c.b16 %v1720, %v1718
        %v1747 = vpack.c.b16 %v1721, %v1719
        %v1748 = vpack.c.b16 %v1724, %v1722
        %v1749 = vpack.c.b16 %v1725, %v1723
        %v1750 = vpack.c.b16 %v1728, %v1726
        %v1751 = vpack.c.b16 %v1729, %v1727
        %v1752 = vpack.c.b16 %v1732, %v1730
        %v1753 = vpack.c.b16 %v1733, %v1731
        %v1754 = vpack.c.b16 %v1736, %v1734
        %v1755 = vpack.c.b16 %v1737, %v1735
        %v1756 = vpack.c.b16 %v1740, %v1738
        %v1757 = vpack.c.b16 %v1741, %v1739
        %1774 = vmatprep.subr.bf16.mxu0 %v1757
        %1775 = vmatpush1.bf16.msra.mxu0 %v1756
        %1776 = vmatprep.subr.bf16.mxu0 %v1755
        %1777 = vmatpush1.bf16.msra.mxu0 %v1754
        %1778 = vmatprep.subr.bf16.mxu0 %v1753
        %1779 = vmatpush1.bf16.msra.mxu0 %v1752
        %1780 = vmatprep.subr.bf16.mxu0 %v1751
        %1781 = vmatpush1.bf16.msra.mxu0 %v1750
        %1782 = vmatprep.subr.bf16.mxu0 %v1749
        %1783 = vmatpush1.bf16.msra.mxu0 %v1748
        %1784 = vmatprep.subr.bf16.mxu0 %v1747
        %1785 = vmatpush1.bf16.msra.mxu0 %v1746
        %1786 = vmatprep.subr.bf16.mxu0 %v1745
        %1787 = vmatpush1.bf16.msra.mxu0 %v1744
        %1788 = vmatprep.subr.bf16.mxu0 %v1743
        %1789 = vmatpush1.bf16.msra.mxu0 %v1742
        %1790 = vmatprep.subr.bf16.mxu0 0
        %1791 = vmatpush2.bf16.msra.mxu0 0
        %1792 = vmatprep.subr.bf16.mxu0 0
        %1793 = vmatpush2.bf16.msra.mxu0 0
        %1794 = vmatprep.subr.bf16.mxu0 0
        %1795 = vmatpush2.bf16.msra.mxu0 0
        %1796 = vmatprep.subr.bf16.mxu0 0
        %1797 = vmatpush2.bf16.msra.mxu0 0
        %1798 = vmatprep.subr.bf16.mxu0 0
        %1799 = vmatpush2.bf16.msra.mxu0 0
        %1800 = vmatprep.subr.bf16.mxu0 0
        %1801 = vmatpush2.bf16.msra.mxu0 0
        %1802 = vmatprep.subr.bf16.mxu0 0
        %1803 = vmatpush2.bf16.msra.mxu0 0
        %1804 = vmatprep.subr.bf16.mxu0 0
        %1805 = vmatpush2.bf16.msra.mxu0 0
        %1806 = vmatprep.mubr.bf16.mxu0 0
        %1807 = vmatmul.mubr.bf16.gmra.mxu0 %v1646
        %v1808 = vpop.f32.mrf.mxu0
        %v1809 = vadd.f32 0.0, %v1808
        %v1810 = vpop.f32.mrf.mxu0
        %v1811 = vadd.f32 0.0, %v1810
        %v1812 = vpop.f32.mrf.mxu0
        %v1813 = vadd.f32 0.0, %v1812
        %v1814 = vpop.f32.mrf.mxu0
        %v1815 = vadd.f32 0.0, %v1814
        %1816 = vmatprep.mubr.bf16.mxu0 0
        %1817 = vmatmul.mubr.bf16.gmra.mxu0 %v1647
        %v1818 = vpop.f32.mrf.mxu0
        %v1819 = vadd.f32 0.0, %v1818
        %v1820 = vpop.f32.mrf.mxu0
        %v1821 = vadd.f32 0.0, %v1820
        %v1822 = vpop.f32.mrf.mxu0
        %v1823 = vadd.f32 0.0, %v1822
        %v1824 = vpop.f32.mrf.mxu0
        %v1825 = vadd.f32 0.0, %v1824
        %1826 = vmatprep.mubr.bf16.mxu0 0
        %1827 = vmatmul.mubr.bf16.gmra.mxu0 %v1648
        %v1828 = vpop.f32.mrf.mxu0
        %v1829 = vadd.f32 0.0, %v1828
        %v1830 = vpop.f32.mrf.mxu0
        %v1831 = vadd.f32 0.0, %v1830
        %v1832 = vpop.f32.mrf.mxu0
        %v1833 = vadd.f32 0.0, %v1832
        %v1834 = vpop.f32.mrf.mxu0
        %v1835 = vadd.f32 0.0, %v1834
        %1836 = vmatprep.mubr.bf16.mxu0 0
        %1837 = vmatmul.mubr.bf16.gmra.mxu0 %v1649
        %v1838 = vpop.f32.mrf.mxu0
        %v1839 = vadd.f32 0.0, %v1838
        %v1840 = vpop.f32.mrf.mxu0
        %v1841 = vadd.f32 0.0, %v1840
        %v1842 = vpop.f32.mrf.mxu0
        %v1843 = vadd.f32 0.0, %v1842
        %v1844 = vpop.f32.mrf.mxu0
        %v1845 = vadd.f32 0.0, %v1844
        %1846 = vmatprep.mubr.bf16.mxu0 0
        %1847 = vmatmul.mubr.bf16.gmra.mxu0 %v1650
        %v1848 = vpop.f32.mrf.mxu0
        %v1849 = vadd.f32 0.0, %v1848
        %v1850 = vpop.f32.mrf.mxu0
        %v1851 = vadd.f32 0.0, %v1850
        %v1852 = vpop.f32.mrf.mxu0
        %v1853 = vadd.f32 0.0, %v1852
        %v1854 = vpop.f32.mrf.mxu0
        %v1855 = vadd.f32 0.0, %v1854
        %1856 = vmatprep.mubr.bf16.mxu0 0
        %1857 = vmatmul.mubr.bf16.gmra.mxu0 %v1651
        %v1858 = vpop.f32.mrf.mxu0
        %v1859 = vadd.f32 0.0, %v1858
        %v1860 = vpop.f32.mrf.mxu0
        %v1861 = vadd.f32 0.0, %v1860
        %v1862 = vpop.f32.mrf.mxu0
        %v1863 = vadd.f32 0.0, %v1862
        %v1864 = vpop.f32.mrf.mxu0
        %v1865 = vadd.f32 0.0, %v1864
        %1866 = vmatprep.mubr.bf16.mxu0 0
        %1867 = vmatmul.mubr.bf16.gmra.mxu0 %v1652
        %v1868 = vpop.f32.mrf.mxu0
        %v1869 = vadd.f32 0.0, %v1868
        %v1870 = vpop.f32.mrf.mxu0
        %v1871 = vadd.f32 0.0, %v1870
        %v1872 = vpop.f32.mrf.mxu0
        %v1873 = vadd.f32 0.0, %v1872
        %v1874 = vpop.f32.mrf.mxu0
        %v1875 = vadd.f32 0.0, %v1874
        %1876 = vmatprep.mubr.bf16.mxu0 0
        %1877 = vmatmul.mubr.bf16.gmra.mxu0 %v1653
        %v1878 = vpop.f32.mrf.mxu0
        %v1879 = vadd.f32 0.0, %v1878
        %v1880 = vpop.f32.mrf.mxu0
        %v1881 = vadd.f32 0.0, %v1880
        %v1882 = vpop.f32.mrf.mxu0
        %v1883 = vadd.f32 0.0, %v1882
        %v1884 = vpop.f32.mrf.mxu0
        %v1885 = vadd.f32 0.0, %v1884
        %1886 = vmatprep.mubr.bf16.mxu0 0
        %1887 = vmatmul.mubr.bf16.gmra.mxu0 %v1654
        %v1888 = vpop.f32.mrf.mxu0
        %v1889 = vadd.f32 0.0, %v1888
        %v1890 = vpop.f32.mrf.mxu0
        %v1891 = vadd.f32 0.0, %v1890
        %v1892 = vpop.f32.mrf.mxu0
        %v1893 = vadd.f32 0.0, %v1892
        %v1894 = vpop.f32.mrf.mxu0
        %v1895 = vadd.f32 0.0, %v1894
        %1896 = vmatprep.mubr.bf16.mxu0 0
        %1897 = vmatmul.mubr.bf16.gmra.mxu0 %v1655
        %v1898 = vpop.f32.mrf.mxu0
        %v1899 = vadd.f32 0.0, %v1898
        %v1900 = vpop.f32.mrf.mxu0
        %v1901 = vadd.f32 0.0, %v1900
        %v1902 = vpop.f32.mrf.mxu0
        %v1903 = vadd.f32 0.0, %v1902
        %v1904 = vpop.f32.mrf.mxu0
        %v1905 = vadd.f32 0.0, %v1904
        %1906 = vmatprep.mubr.bf16.mxu0 0
        %1907 = vmatmul.mubr.bf16.gmra.mxu0 %v1656
        %v1908 = vpop.f32.mrf.mxu0
        %v1909 = vadd.f32 0.0, %v1908
        %v1910 = vpop.f32.mrf.mxu0
        %v1911 = vadd.f32 0.0, %v1910
        %v1912 = vpop.f32.mrf.mxu0
        %v1913 = vadd.f32 0.0, %v1912
        %v1914 = vpop.f32.mrf.mxu0
        %v1915 = vadd.f32 0.0, %v1914
        %1916 = vmatprep.mubr.bf16.mxu0 0
        %1917 = vmatmul.mubr.bf16.gmra.mxu0 %v1657
        %v1918 = vpop.f32.mrf.mxu0
        %v1919 = vadd.f32 0.0, %v1918
        %v1920 = vpop.f32.mrf.mxu0
        %v1921 = vadd.f32 0.0, %v1920
        %v1922 = vpop.f32.mrf.mxu0
        %v1923 = vadd.f32 0.0, %v1922
        %v1924 = vpop.f32.mrf.mxu0
        %v1925 = vadd.f32 0.0, %v1924
        %1926 = vmatprep.mubr.bf16.mxu0 0
        %1927 = vmatmul.mubr.bf16.gmra.mxu0 %v1658
        %v1928 = vpop.f32.mrf.mxu0
        %v1929 = vadd.f32 0.0, %v1928
        %v1930 = vpop.f32.mrf.mxu0
        %v1931 = vadd.f32 0.0, %v1930
        %v1932 = vpop.f32.mrf.mxu0
        %v1933 = vadd.f32 0.0, %v1932
        %v1934 = vpop.f32.mrf.mxu0
        %v1935 = vadd.f32 0.0, %v1934
        %1936 = vmatprep.mubr.bf16.mxu0 0
        %1937 = vmatmul.mubr.bf16.gmra.mxu0 %v1659
        %v1938 = vpop.f32.mrf.mxu0
        %v1939 = vadd.f32 0.0, %v1938
        %v1940 = vpop.f32.mrf.mxu0
        %v1941 = vadd.f32 0.0, %v1940
        %v1942 = vpop.f32.mrf.mxu0
        %v1943 = vadd.f32 0.0, %v1942
        %v1944 = vpop.f32.mrf.mxu0
        %v1945 = vadd.f32 0.0, %v1944
        %1946 = vmatprep.mubr.bf16.mxu0 0
        %1947 = vmatmul.mubr.bf16.gmra.mxu0 %v1660
        %v1948 = vpop.f32.mrf.mxu0
        %v1949 = vadd.f32 0.0, %v1948
        %v1950 = vpop.f32.mrf.mxu0
        %v1951 = vadd.f32 0.0, %v1950
        %v1952 = vpop.f32.mrf.mxu0
        %v1953 = vadd.f32 0.0, %v1952
        %v1954 = vpop.f32.mrf.mxu0
        %v1955 = vadd.f32 0.0, %v1954
        %1956 = vmatprep.mubr.bf16.mxu0 0
        %1957 = vmatmul.mubr.bf16.gmra.mxu0 %v1661
        %v1958 = vpop.f32.mrf.mxu0
        %v1959 = vadd.f32 0.0, %v1958
        %v1960 = vpop.f32.mrf.mxu0
        %v1961 = vadd.f32 0.0, %v1960
        %v1962 = vpop.f32.mrf.mxu0
        %v1963 = vadd.f32 0.0, %v1962
        %v1964 = vpop.f32.mrf.mxu0
        %v1965 = vadd.f32 0.0, %v1964
        %1966 = vmatprep.mubr.bf16.mxu0 0
        %1967 = vmatmul.mubr.bf16.gmra.mxu0 %v1662
        %v1968 = vpop.f32.mrf.mxu0
        %v1969 = vadd.f32 0.0, %v1968
        %v1970 = vpop.f32.mrf.mxu0
        %v1971 = vadd.f32 0.0, %v1970
        %v1972 = vpop.f32.mrf.mxu0
        %v1973 = vadd.f32 0.0, %v1972
        %v1974 = vpop.f32.mrf.mxu0
        %v1975 = vadd.f32 0.0, %v1974
        %1976 = vmatprep.mubr.bf16.mxu0 0
        %1977 = vmatmul.mubr.bf16.gmra.mxu0 %v1663
        %v1978 = vpop.f32.mrf.mxu0
        %v1979 = vadd.f32 0.0, %v1978
        %v1980 = vpop.f32.mrf.mxu0
        %v1981 = vadd.f32 0.0, %v1980
        %v1982 = vpop.f32.mrf.mxu0
        %v1983 = vadd.f32 0.0, %v1982
        %v1984 = vpop.f32.mrf.mxu0
        %v1985 = vadd.f32 0.0, %v1984
        %1986 = vmatprep.mubr.bf16.mxu0 0
        %1987 = vmatmul.mubr.bf16.gmra.mxu0 %v1664
        %v1988 = vpop.f32.mrf.mxu0
        %v1989 = vadd.f32 0.0, %v1988
        %v1990 = vpop.f32.mrf.mxu0
        %v1991 = vadd.f32 0.0, %v1990
        %v1992 = vpop.f32.mrf.mxu0
        %v1993 = vadd.f32 0.0, %v1992
        %v1994 = vpop.f32.mrf.mxu0
        %v1995 = vadd.f32 0.0, %v1994
        %1996 = vmatprep.mubr.bf16.mxu0 0
        %1997 = vmatmul.mubr.bf16.gmra.mxu0 %v1665
        %v1998 = vpop.f32.mrf.mxu0
        %v1999 = vadd.f32 0.0, %v1998
        %v2000 = vpop.f32.mrf.mxu0
        %v2001 = vadd.f32 0.0, %v2000
        %v2002 = vpop.f32.mrf.mxu0
        %v2003 = vadd.f32 0.0, %v2002
        %v2004 = vpop.f32.mrf.mxu0
        %v2005 = vadd.f32 0.0, %v2004
        %2006 = vmatprep.mubr.bf16.mxu0 0
        %2007 = vmatmul.mubr.bf16.gmra.mxu0 %v1666
        %v2008 = vpop.f32.mrf.mxu0
        %v2009 = vadd.f32 0.0, %v2008
        %v2010 = vpop.f32.mrf.mxu0
        %v2011 = vadd.f32 0.0, %v2010
        %v2012 = vpop.f32.mrf.mxu0
        %v2013 = vadd.f32 0.0, %v2012
        %v2014 = vpop.f32.mrf.mxu0
        %v2015 = vadd.f32 0.0, %v2014
        %2016 = vmatprep.mubr.bf16.mxu0 0
        %2017 = vmatmul.mubr.bf16.gmra.mxu0 %v1667
        %v2018 = vpop.f32.mrf.mxu0
        %v2019 = vadd.f32 0.0, %v2018
        %v2020 = vpop.f32.mrf.mxu0
        %v2021 = vadd.f32 0.0, %v2020
        %v2022 = vpop.f32.mrf.mxu0
        %v2023 = vadd.f32 0.0, %v2022
        %v2024 = vpop.f32.mrf.mxu0
        %v2025 = vadd.f32 0.0, %v2024
        %2026 = vmatprep.mubr.bf16.mxu0 0
        %2027 = vmatmul.mubr.bf16.gmra.mxu0 %v1668
        %v2028 = vpop.f32.mrf.mxu0
        %v2029 = vadd.f32 0.0, %v2028
        %v2030 = vpop.f32.mrf.mxu0
        %v2031 = vadd.f32 0.0, %v2030
        %v2032 = vpop.f32.mrf.mxu0
        %v2033 = vadd.f32 0.0, %v2032
        %v2034 = vpop.f32.mrf.mxu0
        %v2035 = vadd.f32 0.0, %v2034
        %2036 = vmatprep.mubr.bf16.mxu0 0
        %2037 = vmatmul.mubr.bf16.gmra.mxu0 %v1669
        %v2038 = vpop.f32.mrf.mxu0
        %v2039 = vadd.f32 0.0, %v2038
        %v2040 = vpop.f32.mrf.mxu0
        %v2041 = vadd.f32 0.0, %v2040
        %v2042 = vpop.f32.mrf.mxu0
        %v2043 = vadd.f32 0.0, %v2042
        %v2044 = vpop.f32.mrf.mxu0
        %v2045 = vadd.f32 0.0, %v2044
        %2046 = vmatprep.mubr.bf16.mxu0 0
        %2047 = vmatmul.mubr.bf16.gmra.mxu0 %v1670
        %v2048 = vpop.f32.mrf.mxu0
        %v2049 = vadd.f32 0.0, %v2048
        %v2050 = vpop.f32.mrf.mxu0
        %v2051 = vadd.f32 0.0, %v2050
        %v2052 = vpop.f32.mrf.mxu0
        %v2053 = vadd.f32 0.0, %v2052
        %v2054 = vpop.f32.mrf.mxu0
        %v2055 = vadd.f32 0.0, %v2054
        %2056 = vmatprep.mubr.bf16.mxu0 0
        %2057 = vmatmul.mubr.bf16.gmra.mxu0 %v1671
        %v2058 = vpop.f32.mrf.mxu0
        %v2059 = vadd.f32 0.0, %v2058
        %v2060 = vpop.f32.mrf.mxu0
        %v2061 = vadd.f32 0.0, %v2060
        %v2062 = vpop.f32.mrf.mxu0
        %v2063 = vadd.f32 0.0, %v2062
        %v2064 = vpop.f32.mrf.mxu0
        %v2065 = vadd.f32 0.0, %v2064
        %2066 = vmatprep.mubr.bf16.mxu0 0
        %2067 = vmatmul.mubr.bf16.gmra.mxu0 %v1672
        %v2068 = vpop.f32.mrf.mxu0
        %v2069 = vadd.f32 0.0, %v2068
        %v2070 = vpop.f32.mrf.mxu0
        %v2071 = vadd.f32 0.0, %v2070
        %v2072 = vpop.f32.mrf.mxu0
        %v2073 = vadd.f32 0.0, %v2072
        %v2074 = vpop.f32.mrf.mxu0
        %v2075 = vadd.f32 0.0, %v2074
        %2076 = vmatprep.mubr.bf16.mxu0 0
        %2077 = vmatmul.mubr.bf16.gmra.mxu0 %v1673
        %v2078 = vpop.f32.mrf.mxu0
        %v2079 = vadd.f32 0.0, %v2078
        %v2080 = vpop.f32.mrf.mxu0
        %v2081 = vadd.f32 0.0, %v2080
        %v2082 = vpop.f32.mrf.mxu0
        %v2083 = vadd.f32 0.0, %v2082
        %v2084 = vpop.f32.mrf.mxu0
        %v2085 = vadd.f32 0.0, %v2084
        %2086 = vmatprep.mubr.bf16.mxu0 0
        %2087 = vmatmul.mubr.bf16.gmra.mxu0 %v1674
        %v2088 = vpop.f32.mrf.mxu0
        %v2089 = vadd.f32 0.0, %v2088
        %v2090 = vpop.f32.mrf.mxu0
        %v2091 = vadd.f32 0.0, %v2090
        %v2092 = vpop.f32.mrf.mxu0
        %v2093 = vadd.f32 0.0, %v2092
        %v2094 = vpop.f32.mrf.mxu0
        %v2095 = vadd.f32 0.0, %v2094
        %2096 = vmatprep.mubr.bf16.mxu0 0
        %2097 = vmatmul.mubr.bf16.gmra.mxu0 %v1675
        %v2098 = vpop.f32.mrf.mxu0
        %v2099 = vadd.f32 0.0, %v2098
        %v2100 = vpop.f32.mrf.mxu0
        %v2101 = vadd.f32 0.0, %v2100
        %v2102 = vpop.f32.mrf.mxu0
        %v2103 = vadd.f32 0.0, %v2102
        %v2104 = vpop.f32.mrf.mxu0
        %v2105 = vadd.f32 0.0, %v2104
        %2106 = vmatprep.mubr.bf16.mxu0 0
        %2107 = vmatmul.mubr.bf16.gmra.mxu0 %v1676
        %v2108 = vpop.f32.mrf.mxu0
        %v2109 = vadd.f32 0.0, %v2108
        %v2110 = vpop.f32.mrf.mxu0
        %v2111 = vadd.f32 0.0, %v2110
        %v2112 = vpop.f32.mrf.mxu0
        %v2113 = vadd.f32 0.0, %v2112
        %v2114 = vpop.f32.mrf.mxu0
        %v2115 = vadd.f32 0.0, %v2114
        %2116 = vmatprep.mubr.bf16.mxu0 0
        %2117 = vmatmul.mubr.bf16.gmra.mxu0 %v1677
        %v2118 = vpop.f32.mrf.mxu0
        %v2119 = vadd.f32 0.0, %v2118
        %v2120 = vpop.f32.mrf.mxu0
        %v2121 = vadd.f32 0.0, %v2120
        %v2122 = vpop.f32.mrf.mxu0
        %v2123 = vadd.f32 0.0, %v2122
        %v2124 = vpop.f32.mrf.mxu0
        %v2125 = vadd.f32 0.0, %v2124
        %2126 = vdwg.mxu0
        %v2127 = vpack.c.bf16 %v1813, %v1809
        %v2128 = vpack.c.bf16 %v1815, %v1811
        %v2129 = vpack.c.bf16 %v1823, %v1819
        %v2130 = vpack.c.bf16 %v1825, %v1821
        %v2131 = vpack.c.bf16 %v1833, %v1829
        %v2132 = vpack.c.bf16 %v1835, %v1831
        %v2133 = vpack.c.bf16 %v1843, %v1839
        %v2134 = vpack.c.bf16 %v1845, %v1841
        %v2135 = vpack.c.bf16 %v1853, %v1849
        %v2136 = vpack.c.bf16 %v1855, %v1851
        %v2137 = vpack.c.bf16 %v1863, %v1859
        %v2138 = vpack.c.bf16 %v1865, %v1861
        %v2139 = vpack.c.bf16 %v1873, %v1869
        %v2140 = vpack.c.bf16 %v1875, %v1871
        %v2141 = vpack.c.bf16 %v1883, %v1879
        %v2142 = vpack.c.bf16 %v1885, %v1881
        %v2143 = vpack.c.bf16 %v1893, %v1889
        %v2144 = vpack.c.bf16 %v1895, %v1891
        %v2145 = vpack.c.bf16 %v1903, %v1899
        %v2146 = vpack.c.bf16 %v1905, %v1901
        %v2147 = vpack.c.bf16 %v1913, %v1909
        %v2148 = vpack.c.bf16 %v1915, %v1911
        %v2149 = vpack.c.bf16 %v1923, %v1919
        %v2150 = vpack.c.bf16 %v1925, %v1921
        %v2151 = vpack.c.bf16 %v1933, %v1929
        %v2152 = vpack.c.bf16 %v1935, %v1931
        %v2153 = vpack.c.bf16 %v1943, %v1939
        %v2154 = vpack.c.bf16 %v1945, %v1941
        %v2155 = vpack.c.bf16 %v1953, %v1949
        %v2156 = vpack.c.bf16 %v1955, %v1951
        %v2157 = vpack.c.bf16 %v1963, %v1959
        %v2158 = vpack.c.bf16 %v1965, %v1961
        %v2159 = vpack.c.bf16 %v1973, %v1969
        %v2160 = vpack.c.bf16 %v1975, %v1971
        %v2161 = vpack.c.bf16 %v1983, %v1979
        %v2162 = vpack.c.bf16 %v1985, %v1981
        %v2163 = vpack.c.bf16 %v1993, %v1989
        %v2164 = vpack.c.bf16 %v1995, %v1991
        %v2165 = vpack.c.bf16 %v2003, %v1999
        %v2166 = vpack.c.bf16 %v2005, %v2001
        %v2167 = vpack.c.bf16 %v2013, %v2009
        %v2168 = vpack.c.bf16 %v2015, %v2011
        %v2169 = vpack.c.bf16 %v2023, %v2019
        %v2170 = vpack.c.bf16 %v2025, %v2021
        %v2171 = vpack.c.bf16 %v2033, %v2029
        %v2172 = vpack.c.bf16 %v2035, %v2031
        %v2173 = vpack.c.bf16 %v2043, %v2039
        %v2174 = vpack.c.bf16 %v2045, %v2041
        %v2175 = vpack.c.bf16 %v2053, %v2049
        %v2176 = vpack.c.bf16 %v2055, %v2051
        %v2177 = vpack.c.bf16 %v2063, %v2059
        %v2178 = vpack.c.bf16 %v2065, %v2061
        %v2179 = vpack.c.bf16 %v2073, %v2069
        %v2180 = vpack.c.bf16 %v2075, %v2071
        %v2181 = vpack.c.bf16 %v2083, %v2079
        %v2182 = vpack.c.bf16 %v2085, %v2081
        %v2183 = vpack.c.bf16 %v2093, %v2089
        %v2184 = vpack.c.bf16 %v2095, %v2091
        %v2185 = vpack.c.bf16 %v2103, %v2099
        %v2186 = vpack.c.bf16 %v2105, %v2101
        %v2187 = vpack.c.bf16 %v2113, %v2109
        %v2188 = vpack.c.bf16 %v2115, %v2111
        %v2189 = vpack.c.bf16 %v2123, %v2119
        %v2190 = vpack.c.bf16 %v2125, %v2121
        %v2191 = vld [vmem:[%s6] sm:$0x3]
        %v2193 = vlaneseq
        %v2194 = vshrl.u32 %v2193, 7
        %v2195 = vsub.s32 0, %v2194
        %v2196 = vrot.slane %v2191, %v2195
        %v2197 = vlaneseq
        %v2198 = vshrl.u32 %v2197, 7
        %v2199 = vsub.s32 1, %v2198
        %v2200 = vrot.slane %v2191, %v2199
        %v2203 = vpack.c.bf16 %v2196, %v2196
        %v2204 = vpack.c.bf16 %v2200, %v2200
        %v2206 = vpack.i.b16 %v2203, %v2203
        %v2208 = vlaneseq
        %v2209 = vshrl.u32 %v2208, 7
        %v2210 = vsub.s32 0, %v2209
        %v2211 = vrot.slane %v2206, %v2210
        %v2213 = vpack.i.b16 %v2204, %v2204
        %v2215 = vlaneseq
        %v2216 = vshrl.u32 %v2215, 7
        %v2217 = vsub.s32 0, %v2216
        %v2218 = vrot.slane %v2213, %v2217
        %v2219 = vadd.bf16 %v2127, %v2211
        %v2220 = vadd.bf16 %v2128, %v2218
        %v2221 = vadd.bf16 %v2129, %v2211
        %v2222 = vadd.bf16 %v2130, %v2218
        %v2223 = vadd.bf16 %v2131, %v2211
        %v2224 = vadd.bf16 %v2132, %v2218
        %v2225 = vadd.bf16 %v2133, %v2211
        %v2226 = vadd.bf16 %v2134, %v2218
        %v2227 = vadd.bf16 %v2135, %v2211
        %v2228 = vadd.bf16 %v2136, %v2218
        %v2229 = vadd.bf16 %v2137, %v2211
        %v2230 = vadd.bf16 %v2138, %v2218
        %v2231 = vadd.bf16 %v2139, %v2211
        %v2232 = vadd.bf16 %v2140, %v2218
        %v2233 = vadd.bf16 %v2141, %v2211
        %v2234 = vadd.bf16 %v2142, %v2218
        %v2235 = vadd.bf16 %v2143, %v2211
        %v2236 = vadd.bf16 %v2144, %v2218
        %v2237 = vadd.bf16 %v2145, %v2211
        %v2238 = vadd.bf16 %v2146, %v2218
        %v2239 = vadd.bf16 %v2147, %v2211
        %v2240 = vadd.bf16 %v2148, %v2218
        %v2241 = vadd.bf16 %v2149, %v2211
        %v2242 = vadd.bf16 %v2150, %v2218
        %v2243 = vadd.bf16 %v2151, %v2211
        %v2244 = vadd.bf16 %v2152, %v2218
        %v2245 = vadd.bf16 %v2153, %v2211
        %v2246 = vadd.bf16 %v2154, %v2218
        %v2247 = vadd.bf16 %v2155, %v2211
        %v2248 = vadd.bf16 %v2156, %v2218
        %v2249 = vadd.bf16 %v2157, %v2211
        %v2250 = vadd.bf16 %v2158, %v2218
        %v2251 = vadd.bf16 %v2159, %v2211
        %v2252 = vadd.bf16 %v2160, %v2218
        %v2253 = vadd.bf16 %v2161, %v2211
        %v2254 = vadd.bf16 %v2162, %v2218
        %v2255 = vadd.bf16 %v2163, %v2211
        %v2256 = vadd.bf16 %v2164, %v2218
        %v2257 = vadd.bf16 %v2165, %v2211
        %v2258 = vadd.bf16 %v2166, %v2218
        %v2259 = vadd.bf16 %v2167, %v2211
        %v2260 = vadd.bf16 %v2168, %v2218
        %v2261 = vadd.bf16 %v2169, %v2211
        %v2262 = vadd.bf16 %v2170, %v2218
        %v2263 = vadd.bf16 %v2171, %v2211
        %v2264 = vadd.bf16 %v2172, %v2218
        %v2265 = vadd.bf16 %v2173, %v2211
        %v2266 = vadd.bf16 %v2174, %v2218
        %v2267 = vadd.bf16 %v2175, %v2211
        %v2268 = vadd.bf16 %v2176, %v2218
        %v2269 = vadd.bf16 %v2177, %v2211
        %v2270 = vadd.bf16 %v2178, %v2218
        %v2271 = vadd.bf16 %v2179, %v2211
        %v2272 = vadd.bf16 %v2180, %v2218
        %v2273 = vadd.bf16 %v2181, %v2211
        %v2274 = vadd.bf16 %v2182, %v2218
        %v2275 = vadd.bf16 %v2183, %v2211
        %v2276 = vadd.bf16 %v2184, %v2218
        %v2277 = vadd.bf16 %v2185, %v2211
        %v2278 = vadd.bf16 %v2186, %v2218
        %v2279 = vadd.bf16 %v2187, %v2211
        %v2280 = vadd.bf16 %v2188, %v2218
        %v2281 = vadd.bf16 %v2189, %v2211
        %v2282 = vadd.bf16 %v2190, %v2218
        %v2283 = vmax.bf16 %v2219, 0
        %v2284 = vmax.bf16 %v2220, 0
        %v2285 = vmax.bf16 %v2221, 0
        %v2286 = vmax.bf16 %v2222, 0
        %v2287 = vmax.bf16 %v2223, 0
        %v2288 = vmax.bf16 %v2224, 0
        %v2289 = vmax.bf16 %v2225, 0
        %v2290 = vmax.bf16 %v2226, 0
        %v2291 = vmax.bf16 %v2227, 0
        %v2292 = vmax.bf16 %v2228, 0
        %v2293 = vmax.bf16 %v2229, 0
        %v2294 = vmax.bf16 %v2230, 0
        %v2295 = vmax.bf16 %v2231, 0
        %v2296 = vmax.bf16 %v2232, 0
        %v2297 = vmax.bf16 %v2233, 0
        %v2298 = vmax.bf16 %v2234, 0
        %v2299 = vmax.bf16 %v2235, 0
        %v2300 = vmax.bf16 %v2236, 0
        %v2301 = vmax.bf16 %v2237, 0
        %v2302 = vmax.bf16 %v2238, 0
        %v2303 = vmax.bf16 %v2239, 0
        %v2304 = vmax.bf16 %v2240, 0
        %v2305 = vmax.bf16 %v2241, 0
        %v2306 = vmax.bf16 %v2242, 0
        %v2307 = vmax.bf16 %v2243, 0
        %v2308 = vmax.bf16 %v2244, 0
        %v2309 = vmax.bf16 %v2245, 0
        %v2310 = vmax.bf16 %v2246, 0
        %v2311 = vmax.bf16 %v2247, 0
        %v2312 = vmax.bf16 %v2248, 0
        %v2313 = vmax.bf16 %v2249, 0
        %v2314 = vmax.bf16 %v2250, 0
        %v2315 = vmax.bf16 %v2251, 0
        %v2316 = vmax.bf16 %v2252, 0
        %v2317 = vmax.bf16 %v2253, 0
        %v2318 = vmax.bf16 %v2254, 0
        %v2319 = vmax.bf16 %v2255, 0
        %v2320 = vmax.bf16 %v2256, 0
        %v2321 = vmax.bf16 %v2257, 0
        %v2322 = vmax.bf16 %v2258, 0
        %v2323 = vmax.bf16 %v2259, 0
        %v2324 = vmax.bf16 %v2260, 0
        %v2325 = vmax.bf16 %v2261, 0
        %v2326 = vmax.bf16 %v2262, 0
        %v2327 = vmax.bf16 %v2263, 0
        %v2328 = vmax.bf16 %v2264, 0
        %v2329 = vmax.bf16 %v2265, 0
        %v2330 = vmax.bf16 %v2266, 0
        %v2331 = vmax.bf16 %v2267, 0
        %v2332 = vmax.bf16 %v2268, 0
        %v2333 = vmax.bf16 %v2269, 0
        %v2334 = vmax.bf16 %v2270, 0
        %v2335 = vmax.bf16 %v2271, 0
        %v2336 = vmax.bf16 %v2272, 0
        %v2337 = vmax.bf16 %v2273, 0
        %v2338 = vmax.bf16 %v2274, 0
        %v2339 = vmax.bf16 %v2275, 0
        %v2340 = vmax.bf16 %v2276, 0
        %v2341 = vmax.bf16 %v2277, 0
        %v2342 = vmax.bf16 %v2278, 0
        %v2343 = vmax.bf16 %v2279, 0
        %v2344 = vmax.bf16 %v2280, 0
        %v2345 = vmax.bf16 %v2281, 0
        %v2346 = vmax.bf16 %v2282, 0
        %v2347 = vld [vmem:[#allocation2] sm:$0xff]
        %v2348 = vld [vmem:[#allocation2 + $0x8] sm:$0xff]
        %v2349 = vld [vmem:[#allocation2 + $0x10] sm:$0xff]
        %v2350 = vld [vmem:[#allocation2 + $0x18] sm:$0xff]
        %v2351 = vld [vmem:[#allocation2 + $0x20] sm:$0xff]
        %v2352 = vld [vmem:[#allocation2 + $0x28] sm:$0xff]
        %v2353 = vld [vmem:[#allocation2 + $0x30] sm:$0xff]
        %v2354 = vld [vmem:[#allocation2 + $0x38] sm:$0xff]
        %v2355 = vld [vmem:[#allocation2 + $0x40] sm:$0xff]
        %v2356 = vld [vmem:[#allocation2 + $0x48] sm:$0xff]
        %v2357 = vld [vmem:[#allocation2 + $0x50] sm:$0xff]
        %v2358 = vld [vmem:[#allocation2 + $0x58] sm:$0xff]
        %v2359 = vld [vmem:[#allocation2 + $0x60] sm:$0xff]
        %v2360 = vld [vmem:[#allocation2 + $0x68] sm:$0xff]
        %v2361 = vld [vmem:[#allocation2 + $0x70] sm:$0xff]
        %v2362 = vld [vmem:[#allocation2 + $0x78] sm:$0xff]
        %v2363 = vld [vmem:[#allocation2 + $0x80] sm:$0xff]
        %v2364 = vld [vmem:[#allocation2 + $0x88] sm:$0xff]
        %v2365 = vld [vmem:[#allocation2 + $0x90] sm:$0xff]
        %v2366 = vld [vmem:[#allocation2 + $0x98] sm:$0xff]
        %v2367 = vld [vmem:[#allocation2 + $0xa0] sm:$0xff]
        %v2368 = vld [vmem:[#allocation2 + $0xa8] sm:$0xff]
        %v2369 = vld [vmem:[#allocation2 + $0xb0] sm:$0xff]
        %v2370 = vld [vmem:[#allocation2 + $0xb8] sm:$0xff]
        %v2371 = vld [vmem:[#allocation2 + $0xc0] sm:$0xff]
        %v2372 = vld [vmem:[#allocation2 + $0xc8] sm:$0xff]
        %v2373 = vld [vmem:[#allocation2 + $0xd0] sm:$0xff]
        %v2374 = vld [vmem:[#allocation2 + $0xd8] sm:$0xff]
        %v2375 = vld [vmem:[#allocation2 + $0xe0] sm:$0xff]
        %v2376 = vld [vmem:[#allocation2 + $0xe8] sm:$0xff]
        %v2377 = vld [vmem:[#allocation2 + $0xf0] sm:$0xff]
        %v2378 = vld [vmem:[#allocation2 + $0xf8] sm:$0xff]
        %v2379 = vld [vmem:[#allocation2 + $0x100] sm:$0xff]
        %v2380 = vld [vmem:[#allocation2 + $0x108] sm:$0xff]
        %v2381 = vld [vmem:[#allocation2 + $0x110] sm:$0xff]
        %v2382 = vld [vmem:[#allocation2 + $0x118] sm:$0xff]
        %v2383 = vld [vmem:[#allocation2 + $0x120] sm:$0xff]
        %v2384 = vld [vmem:[#allocation2 + $0x128] sm:$0xff]
        %v2385 = vld [vmem:[#allocation2 + $0x130] sm:$0xff]
        %v2386 = vld [vmem:[#allocation2 + $0x138] sm:$0xff]
        %v2387 = vld [vmem:[#allocation2 + $0x140] sm:$0xff]
        %v2388 = vld [vmem:[#allocation2 + $0x148] sm:$0xff]
        %v2389 = vld [vmem:[#allocation2 + $0x150] sm:$0xff]
        %v2390 = vld [vmem:[#allocation2 + $0x158] sm:$0xff]
        %v2391 = vld [vmem:[#allocation2 + $0x160] sm:$0xff]
        %v2392 = vld [vmem:[#allocation2 + $0x168] sm:$0xff]
        %v2393 = vld [vmem:[#allocation2 + $0x170] sm:$0xff]
        %v2394 = vld [vmem:[#allocation2 + $0x178] sm:$0xff]
        %v2395 = vld [vmem:[#allocation2 + $0x180] sm:$0xff]
        %v2396 = vld [vmem:[#allocation2 + $0x188] sm:$0xff]
        %v2397 = vld [vmem:[#allocation2 + $0x190] sm:$0xff]
        %v2398 = vld [vmem:[#allocation2 + $0x198] sm:$0xff]
        %v2399 = vld [vmem:[#allocation2 + $0x1a0] sm:$0xff]
        %v2400 = vld [vmem:[#allocation2 + $0x1a8] sm:$0xff]
        %v2401 = vld [vmem:[#allocation2 + $0x1b0] sm:$0xff]
        %v2402 = vld [vmem:[#allocation2 + $0x1b8] sm:$0xff]
        %v2403 = vld [vmem:[#allocation2 + $0x1c0] sm:$0xff]
        %v2404 = vld [vmem:[#allocation2 + $0x1c8] sm:$0xff]
        %v2405 = vld [vmem:[#allocation2 + $0x1d0] sm:$0xff]
        %v2406 = vld [vmem:[#allocation2 + $0x1d8] sm:$0xff]
        %v2407 = vld [vmem:[#allocation2 + $0x1e0] sm:$0xff]
        %v2408 = vld [vmem:[#allocation2 + $0x1e8] sm:$0xff]
        %v2409 = vld [vmem:[#allocation2 + $0x1f0] sm:$0xff]
        %v2410 = vld [vmem:[#allocation2 + $0x1f8] sm:$0xff]
        %v2475 = vunpack.c.l.b16 %v2347
        %v2476 = vunpack.c.h.b16 %v2347
        %v2477 = vunpack.c.l.b16 %v2348
        %v2478 = vunpack.c.h.b16 %v2348
        %v2479 = vunpack.c.l.b16 %v2349
        %v2480 = vunpack.c.h.b16 %v2349
        %v2481 = vunpack.c.l.b16 %v2350
        %v2482 = vunpack.c.h.b16 %v2350
        %v2483 = vunpack.c.l.b16 %v2351
        %v2484 = vunpack.c.h.b16 %v2351
        %v2485 = vunpack.c.l.b16 %v2352
        %v2486 = vunpack.c.h.b16 %v2352
        %v2487 = vunpack.c.l.b16 %v2353
        %v2488 = vunpack.c.h.b16 %v2353
        %v2489 = vunpack.c.l.b16 %v2354
        %v2490 = vunpack.c.h.b16 %v2354
        %v2491 = vunpack.c.l.b16 %v2355
        %v2492 = vunpack.c.h.b16 %v2355
        %v2493 = vunpack.c.l.b16 %v2356
        %v2494 = vunpack.c.h.b16 %v2356
        %v2495 = vunpack.c.l.b16 %v2357
        %v2496 = vunpack.c.h.b16 %v2357
        %v2497 = vunpack.c.l.b16 %v2358
        %v2498 = vunpack.c.h.b16 %v2358
        %v2499 = vunpack.c.l.b16 %v2359
        %v2500 = vunpack.c.h.b16 %v2359
        %v2501 = vunpack.c.l.b16 %v2360
        %v2502 = vunpack.c.h.b16 %v2360
        %v2503 = vunpack.c.l.b16 %v2361
        %v2504 = vunpack.c.h.b16 %v2361
        %v2505 = vunpack.c.l.b16 %v2362
        %v2506 = vunpack.c.h.b16 %v2362
        %v2507 = vunpack.c.l.b16 %v2363
        %v2508 = vunpack.c.h.b16 %v2363
        %v2509 = vunpack.c.l.b16 %v2364
        %v2510 = vunpack.c.h.b16 %v2364
        %v2511 = vunpack.c.l.b16 %v2365
        %v2512 = vunpack.c.h.b16 %v2365
        %v2513 = vunpack.c.l.b16 %v2366
        %v2514 = vunpack.c.h.b16 %v2366
        %v2515 = vunpack.c.l.b16 %v2367
        %v2516 = vunpack.c.h.b16 %v2367
        %v2517 = vunpack.c.l.b16 %v2368
        %v2518 = vunpack.c.h.b16 %v2368
        %v2519 = vunpack.c.l.b16 %v2369
        %v2520 = vunpack.c.h.b16 %v2369
        %v2521 = vunpack.c.l.b16 %v2370
        %v2522 = vunpack.c.h.b16 %v2370
        %v2523 = vunpack.c.l.b16 %v2371
        %v2524 = vunpack.c.h.b16 %v2371
        %v2525 = vunpack.c.l.b16 %v2372
        %v2526 = vunpack.c.h.b16 %v2372
        %v2527 = vunpack.c.l.b16 %v2373
        %v2528 = vunpack.c.h.b16 %v2373
        %v2529 = vunpack.c.l.b16 %v2374
        %v2530 = vunpack.c.h.b16 %v2374
        %v2531 = vunpack.c.l.b16 %v2375
        %v2532 = vunpack.c.h.b16 %v2375
        %v2533 = vunpack.c.l.b16 %v2376
        %v2534 = vunpack.c.h.b16 %v2376
        %v2535 = vunpack.c.l.b16 %v2377
        %v2536 = vunpack.c.h.b16 %v2377
        %v2537 = vunpack.c.l.b16 %v2378
        %v2538 = vunpack.c.h.b16 %v2378
        %v2539 = vunpack.c.l.b16 %v2379
        %v2540 = vunpack.c.h.b16 %v2379
        %v2541 = vunpack.c.l.b16 %v2380
        %v2542 = vunpack.c.h.b16 %v2380
        %v2543 = vunpack.c.l.b16 %v2381
        %v2544 = vunpack.c.h.b16 %v2381
        %v2545 = vunpack.c.l.b16 %v2382
        %v2546 = vunpack.c.h.b16 %v2382
        %v2547 = vunpack.c.l.b16 %v2383
        %v2548 = vunpack.c.h.b16 %v2383
        %v2549 = vunpack.c.l.b16 %v2384
        %v2550 = vunpack.c.h.b16 %v2384
        %v2551 = vunpack.c.l.b16 %v2385
        %v2552 = vunpack.c.h.b16 %v2385
        %v2553 = vunpack.c.l.b16 %v2386
        %v2554 = vunpack.c.h.b16 %v2386
        %v2555 = vunpack.c.l.b16 %v2387
        %v2556 = vunpack.c.h.b16 %v2387
        %v2557 = vunpack.c.l.b16 %v2388
        %v2558 = vunpack.c.h.b16 %v2388
        %v2559 = vunpack.c.l.b16 %v2389
        %v2560 = vunpack.c.h.b16 %v2389
        %v2561 = vunpack.c.l.b16 %v2390
        %v2562 = vunpack.c.h.b16 %v2390
        %v2563 = vunpack.c.l.b16 %v2391
        %v2564 = vunpack.c.h.b16 %v2391
        %v2565 = vunpack.c.l.b16 %v2392
        %v2566 = vunpack.c.h.b16 %v2392
        %v2567 = vunpack.c.l.b16 %v2393
        %v2568 = vunpack.c.h.b16 %v2393
        %v2569 = vunpack.c.l.b16 %v2394
        %v2570 = vunpack.c.h.b16 %v2394
        %v2571 = vunpack.c.l.b16 %v2395
        %v2572 = vunpack.c.h.b16 %v2395
        %v2573 = vunpack.c.l.b16 %v2396
        %v2574 = vunpack.c.h.b16 %v2396
        %v2575 = vunpack.c.l.b16 %v2397
        %v2576 = vunpack.c.h.b16 %v2397
        %v2577 = vunpack.c.l.b16 %v2398
        %v2578 = vunpack.c.h.b16 %v2398
        %v2579 = vunpack.c.l.b16 %v2399
        %v2580 = vunpack.c.h.b16 %v2399
        %v2581 = vunpack.c.l.b16 %v2400
        %v2582 = vunpack.c.h.b16 %v2400
        %v2583 = vunpack.c.l.b16 %v2401
        %v2584 = vunpack.c.h.b16 %v2401
        %v2585 = vunpack.c.l.b16 %v2402
        %v2586 = vunpack.c.h.b16 %v2402
        %v2587 = vunpack.c.l.b16 %v2403
        %v2588 = vunpack.c.h.b16 %v2403
        %v2589 = vunpack.c.l.b16 %v2404
        %v2590 = vunpack.c.h.b16 %v2404
        %v2591 = vunpack.c.l.b16 %v2405
        %v2592 = vunpack.c.h.b16 %v2405
        %v2593 = vunpack.c.l.b16 %v2406
        %v2594 = vunpack.c.h.b16 %v2406
        %v2595 = vunpack.c.l.b16 %v2407
        %v2596 = vunpack.c.h.b16 %v2407
        %v2597 = vunpack.c.l.b16 %v2408
        %v2598 = vunpack.c.h.b16 %v2408
        %v2599 = vunpack.c.l.b16 %v2409
        %v2600 = vunpack.c.h.b16 %v2409
        %v2601 = vunpack.c.l.b16 %v2410
        %v2602 = vunpack.c.h.b16 %v2410
        %v2603 = vpack.c.b16 %v2479, %v2475
        %v2604 = vpack.c.b16 %v2480, %v2476
        %v2605 = vpack.c.b16 %v2481, %v2477
        %v2606 = vpack.c.b16 %v2482, %v2478
        %v2607 = vpack.c.b16 %v2487, %v2483
        %v2608 = vpack.c.b16 %v2488, %v2484
        %v2609 = vpack.c.b16 %v2489, %v2485
        %v2610 = vpack.c.b16 %v2490, %v2486
        %v2611 = vpack.c.b16 %v2495, %v2491
        %v2612 = vpack.c.b16 %v2496, %v2492
        %v2613 = vpack.c.b16 %v2497, %v2493
        %v2614 = vpack.c.b16 %v2498, %v2494
        %v2615 = vpack.c.b16 %v2503, %v2499
        %v2616 = vpack.c.b16 %v2504, %v2500
        %v2617 = vpack.c.b16 %v2505, %v2501
        %v2618 = vpack.c.b16 %v2506, %v2502
        %v2619 = vpack.c.b16 %v2511, %v2507
        %v2620 = vpack.c.b16 %v2512, %v2508
        %v2621 = vpack.c.b16 %v2513, %v2509
        %v2622 = vpack.c.b16 %v2514, %v2510
        %v2623 = vpack.c.b16 %v2519, %v2515
        %v2624 = vpack.c.b16 %v2520, %v2516
        %v2625 = vpack.c.b16 %v2521, %v2517
        %v2626 = vpack.c.b16 %v2522, %v2518
        %v2627 = vpack.c.b16 %v2527, %v2523
        %v2628 = vpack.c.b16 %v2528, %v2524
        %v2629 = vpack.c.b16 %v2529, %v2525
        %v2630 = vpack.c.b16 %v2530, %v2526
        %v2631 = vpack.c.b16 %v2535, %v2531
        %v2632 = vpack.c.b16 %v2536, %v2532
        %v2633 = vpack.c.b16 %v2537, %v2533
        %v2634 = vpack.c.b16 %v2538, %v2534
        %v2635 = vpack.c.b16 %v2543, %v2539
        %v2636 = vpack.c.b16 %v2544, %v2540
        %v2637 = vpack.c.b16 %v2545, %v2541
        %v2638 = vpack.c.b16 %v2546, %v2542
        %v2639 = vpack.c.b16 %v2551, %v2547
        %v2640 = vpack.c.b16 %v2552, %v2548
        %v2641 = vpack.c.b16 %v2553, %v2549
        %v2642 = vpack.c.b16 %v2554, %v2550
        %v2643 = vpack.c.b16 %v2559, %v2555
        %v2644 = vpack.c.b16 %v2560, %v2556
        %v2645 = vpack.c.b16 %v2561, %v2557
        %v2646 = vpack.c.b16 %v2562, %v2558
        %v2647 = vpack.c.b16 %v2567, %v2563
        %v2648 = vpack.c.b16 %v2568, %v2564
        %v2649 = vpack.c.b16 %v2569, %v2565
        %v2650 = vpack.c.b16 %v2570, %v2566
        %v2651 = vpack.c.b16 %v2575, %v2571
        %v2652 = vpack.c.b16 %v2576, %v2572
        %v2653 = vpack.c.b16 %v2577, %v2573
        %v2654 = vpack.c.b16 %v2578, %v2574
        %v2655 = vpack.c.b16 %v2583, %v2579
        %v2656 = vpack.c.b16 %v2584, %v2580
        %v2657 = vpack.c.b16 %v2585, %v2581
        %v2658 = vpack.c.b16 %v2586, %v2582
        %v2659 = vpack.c.b16 %v2591, %v2587
        %v2660 = vpack.c.b16 %v2592, %v2588
        %v2661 = vpack.c.b16 %v2593, %v2589
        %v2662 = vpack.c.b16 %v2594, %v2590
        %v2663 = vpack.c.b16 %v2599, %v2595
        %v2664 = vpack.c.b16 %v2600, %v2596
        %v2665 = vpack.c.b16 %v2601, %v2597
        %v2666 = vpack.c.b16 %v2602, %v2598
        %2731 = vmatprep.subr.bf16.mxu0 %v2632
        %2732 = vmatpush1.bf16.msra.mxu0 %v2631
        %2733 = vmatprep.subr.bf16.mxu0 %v2628
        %2734 = vmatpush1.bf16.msra.mxu0 %v2627
        %2735 = vmatprep.subr.bf16.mxu0 %v2624
        %2736 = vmatpush1.bf16.msra.mxu0 %v2623
        %2737 = vmatprep.subr.bf16.mxu0 %v2620
        %2738 = vmatpush1.bf16.msra.mxu0 %v2619
        %2739 = vmatprep.subr.bf16.mxu0 %v2616
        %2740 = vmatpush1.bf16.msra.mxu0 %v2615
        %2741 = vmatprep.subr.bf16.mxu0 %v2612
        %2742 = vmatpush1.bf16.msra.mxu0 %v2611
        %2743 = vmatprep.subr.bf16.mxu0 %v2608
        %2744 = vmatpush1.bf16.msra.mxu0 %v2607
        %2745 = vmatprep.subr.bf16.mxu0 %v2604
        %2746 = vmatpush1.bf16.msra.mxu0 %v2603
        %2747 = vmatprep.subr.bf16.mxu0 %v2664
        %2748 = vmatpush2.bf16.msra.mxu0 %v2663
        %2749 = vmatprep.subr.bf16.mxu0 %v2660
        %2750 = vmatpush2.bf16.msra.mxu0 %v2659
        %2751 = vmatprep.subr.bf16.mxu0 %v2656
        %2752 = vmatpush2.bf16.msra.mxu0 %v2655
        %2753 = vmatprep.subr.bf16.mxu0 %v2652
        %2754 = vmatpush2.bf16.msra.mxu0 %v2651
        %2755 = vmatprep.subr.bf16.mxu0 %v2648
        %2756 = vmatpush2.bf16.msra.mxu0 %v2647
        %2757 = vmatprep.subr.bf16.mxu0 %v2644
        %2758 = vmatpush2.bf16.msra.mxu0 %v2643
        %2759 = vmatprep.subr.bf16.mxu0 %v2640
        %2760 = vmatpush2.bf16.msra.mxu0 %v2639
        %2761 = vmatprep.subr.bf16.mxu0 %v2636
        %2762 = vmatpush2.bf16.msra.mxu0 %v2635
        %2763 = vmatprep.mubr.bf16.mxu0 %v2284
        %2764 = vmatmul.mubr.bf16.gmra.mxu0 %v2283
        %v2765 = vpop.f32.mrf.mxu0
        %v2766 = vadd.f32 0.0, %v2765
        %v2767 = vpop.f32.mrf.mxu0
        %v2768 = vadd.f32 0.0, %v2767
        %v2769 = vpop.f32.mrf.mxu0
        %v2770 = vadd.f32 0.0, %v2769
        %v2771 = vpop.f32.mrf.mxu0
        %v2772 = vadd.f32 0.0, %v2771
        %2773 = vmatprep.mubr.bf16.mxu0 %v2286
        %2774 = vmatmul.mubr.bf16.gmra.mxu0 %v2285
        %v2775 = vpop.f32.mrf.mxu0
        %v2776 = vadd.f32 0.0, %v2775
        %v2777 = vpop.f32.mrf.mxu0
        %v2778 = vadd.f32 0.0, %v2777
        %v2779 = vpop.f32.mrf.mxu0
        %v2780 = vadd.f32 0.0, %v2779
        %v2781 = vpop.f32.mrf.mxu0
        %v2782 = vadd.f32 0.0, %v2781
        %2783 = vmatprep.mubr.bf16.mxu0 %v2288
        %2784 = vmatmul.mubr.bf16.gmra.mxu0 %v2287
        %v2785 = vpop.f32.mrf.mxu0
        %v2786 = vadd.f32 0.0, %v2785
        %v2787 = vpop.f32.mrf.mxu0
        %v2788 = vadd.f32 0.0, %v2787
        %v2789 = vpop.f32.mrf.mxu0
        %v2790 = vadd.f32 0.0, %v2789
        %v2791 = vpop.f32.mrf.mxu0
        %v2792 = vadd.f32 0.0, %v2791
        %2793 = vmatprep.mubr.bf16.mxu0 %v2290
        %2794 = vmatmul.mubr.bf16.gmra.mxu0 %v2289
        %v2795 = vpop.f32.mrf.mxu0
        %v2796 = vadd.f32 0.0, %v2795
        %v2797 = vpop.f32.mrf.mxu0
        %v2798 = vadd.f32 0.0, %v2797
        %v2799 = vpop.f32.mrf.mxu0
        %v2800 = vadd.f32 0.0, %v2799
        %v2801 = vpop.f32.mrf.mxu0
        %v2802 = vadd.f32 0.0, %v2801
        %2803 = vmatprep.mubr.bf16.mxu0 %v2292
        %2804 = vmatmul.mubr.bf16.gmra.mxu0 %v2291
        %v2805 = vpop.f32.mrf.mxu0
        %v2806 = vadd.f32 0.0, %v2805
        %v2807 = vpop.f32.mrf.mxu0
        %v2808 = vadd.f32 0.0, %v2807
        %v2809 = vpop.f32.mrf.mxu0
        %v2810 = vadd.f32 0.0, %v2809
        %v2811 = vpop.f32.mrf.mxu0
        %v2812 = vadd.f32 0.0, %v2811
        %2813 = vmatprep.mubr.bf16.mxu0 %v2294
        %2814 = vmatmul.mubr.bf16.gmra.mxu0 %v2293
        %v2815 = vpop.f32.mrf.mxu0
        %v2816 = vadd.f32 0.0, %v2815
        %v2817 = vpop.f32.mrf.mxu0
        %v2818 = vadd.f32 0.0, %v2817
        %v2819 = vpop.f32.mrf.mxu0
        %v2820 = vadd.f32 0.0, %v2819
        %v2821 = vpop.f32.mrf.mxu0
        %v2822 = vadd.f32 0.0, %v2821
        %2823 = vmatprep.mubr.bf16.mxu0 %v2296
        %2824 = vmatmul.mubr.bf16.gmra.mxu0 %v2295
        %v2825 = vpop.f32.mrf.mxu0
        %v2826 = vadd.f32 0.0, %v2825
        %v2827 = vpop.f32.mrf.mxu0
        %v2828 = vadd.f32 0.0, %v2827
        %v2829 = vpop.f32.mrf.mxu0
        %v2830 = vadd.f32 0.0, %v2829
        %v2831 = vpop.f32.mrf.mxu0
        %v2832 = vadd.f32 0.0, %v2831
        %2833 = vmatprep.mubr.bf16.mxu0 %v2298
        %2834 = vmatmul.mubr.bf16.gmra.mxu0 %v2297
        %v2835 = vpop.f32.mrf.mxu0
        %v2836 = vadd.f32 0.0, %v2835
        %v2837 = vpop.f32.mrf.mxu0
        %v2838 = vadd.f32 0.0, %v2837
        %v2839 = vpop.f32.mrf.mxu0
        %v2840 = vadd.f32 0.0, %v2839
        %v2841 = vpop.f32.mrf.mxu0
        %v2842 = vadd.f32 0.0, %v2841
        %2843 = vmatprep.mubr.bf16.mxu0 %v2300
        %2844 = vmatmul.mubr.bf16.gmra.mxu0 %v2299
        %v2845 = vpop.f32.mrf.mxu0
        %v2846 = vadd.f32 0.0, %v2845
        %v2847 = vpop.f32.mrf.mxu0
        %v2848 = vadd.f32 0.0, %v2847
        %v2849 = vpop.f32.mrf.mxu0
        %v2850 = vadd.f32 0.0, %v2849
        %v2851 = vpop.f32.mrf.mxu0
        %v2852 = vadd.f32 0.0, %v2851
        %2853 = vmatprep.mubr.bf16.mxu0 %v2302
        %2854 = vmatmul.mubr.bf16.gmra.mxu0 %v2301
        %v2855 = vpop.f32.mrf.mxu0
        %v2856 = vadd.f32 0.0, %v2855
        %v2857 = vpop.f32.mrf.mxu0
        %v2858 = vadd.f32 0.0, %v2857
        %v2859 = vpop.f32.mrf.mxu0
        %v2860 = vadd.f32 0.0, %v2859
        %v2861 = vpop.f32.mrf.mxu0
        %v2862 = vadd.f32 0.0, %v2861
        %2863 = vmatprep.mubr.bf16.mxu0 %v2304
        %2864 = vmatmul.mubr.bf16.gmra.mxu0 %v2303
        %v2865 = vpop.f32.mrf.mxu0
        %v2866 = vadd.f32 0.0, %v2865
        %v2867 = vpop.f32.mrf.mxu0
        %v2868 = vadd.f32 0.0, %v2867
        %v2869 = vpop.f32.mrf.mxu0
        %v2870 = vadd.f32 0.0, %v2869
        %v2871 = vpop.f32.mrf.mxu0
        %v2872 = vadd.f32 0.0, %v2871
        %2873 = vmatprep.mubr.bf16.mxu0 %v2306
        %2874 = vmatmul.mubr.bf16.gmra.mxu0 %v2305
        %v2875 = vpop.f32.mrf.mxu0
        %v2876 = vadd.f32 0.0, %v2875
        %v2877 = vpop.f32.mrf.mxu0
        %v2878 = vadd.f32 0.0, %v2877
        %v2879 = vpop.f32.mrf.mxu0
        %v2880 = vadd.f32 0.0, %v2879
        %v2881 = vpop.f32.mrf.mxu0
        %v2882 = vadd.f32 0.0, %v2881
        %2883 = vmatprep.mubr.bf16.mxu0 %v2308
        %2884 = vmatmul.mubr.bf16.gmra.mxu0 %v2307
        %v2885 = vpop.f32.mrf.mxu0
        %v2886 = vadd.f32 0.0, %v2885
        %v2887 = vpop.f32.mrf.mxu0
        %v2888 = vadd.f32 0.0, %v2887
        %v2889 = vpop.f32.mrf.mxu0
        %v2890 = vadd.f32 0.0, %v2889
        %v2891 = vpop.f32.mrf.mxu0
        %v2892 = vadd.f32 0.0, %v2891
        %2893 = vmatprep.mubr.bf16.mxu0 %v2310
        %2894 = vmatmul.mubr.bf16.gmra.mxu0 %v2309
        %v2895 = vpop.f32.mrf.mxu0
        %v2896 = vadd.f32 0.0, %v2895
        %v2897 = vpop.f32.mrf.mxu0
        %v2898 = vadd.f32 0.0, %v2897
        %v2899 = vpop.f32.mrf.mxu0
        %v2900 = vadd.f32 0.0, %v2899
        %v2901 = vpop.f32.mrf.mxu0
        %v2902 = vadd.f32 0.0, %v2901
        %2903 = vmatprep.mubr.bf16.mxu0 %v2312
        %2904 = vmatmul.mubr.bf16.gmra.mxu0 %v2311
        %v2905 = vpop.f32.mrf.mxu0
        %v2906 = vadd.f32 0.0, %v2905
        %v2907 = vpop.f32.mrf.mxu0
        %v2908 = vadd.f32 0.0, %v2907
        %v2909 = vpop.f32.mrf.mxu0
        %v2910 = vadd.f32 0.0, %v2909
        %v2911 = vpop.f32.mrf.mxu0
        %v2912 = vadd.f32 0.0, %v2911
        %2913 = vmatprep.mubr.bf16.mxu0 %v2314
        %2914 = vmatmul.mubr.bf16.gmra.mxu0 %v2313
        %v2915 = vpop.f32.mrf.mxu0
        %v2916 = vadd.f32 0.0, %v2915
        %v2917 = vpop.f32.mrf.mxu0
        %v2918 = vadd.f32 0.0, %v2917
        %v2919 = vpop.f32.mrf.mxu0
        %v2920 = vadd.f32 0.0, %v2919
        %v2921 = vpop.f32.mrf.mxu0
        %v2922 = vadd.f32 0.0, %v2921
        %2923 = vmatprep.mubr.bf16.mxu0 %v2316
        %2924 = vmatmul.mubr.bf16.gmra.mxu0 %v2315
        %v2925 = vpop.f32.mrf.mxu0
        %v2926 = vadd.f32 0.0, %v2925
        %v2927 = vpop.f32.mrf.mxu0
        %v2928 = vadd.f32 0.0, %v2927
        %v2929 = vpop.f32.mrf.mxu0
        %v2930 = vadd.f32 0.0, %v2929
        %v2931 = vpop.f32.mrf.mxu0
        %v2932 = vadd.f32 0.0, %v2931
        %2933 = vmatprep.mubr.bf16.mxu0 %v2318
        %2934 = vmatmul.mubr.bf16.gmra.mxu0 %v2317
        %v2935 = vpop.f32.mrf.mxu0
        %v2936 = vadd.f32 0.0, %v2935
        %v2937 = vpop.f32.mrf.mxu0
        %v2938 = vadd.f32 0.0, %v2937
        %v2939 = vpop.f32.mrf.mxu0
        %v2940 = vadd.f32 0.0, %v2939
        %v2941 = vpop.f32.mrf.mxu0
        %v2942 = vadd.f32 0.0, %v2941
        %2943 = vmatprep.mubr.bf16.mxu0 %v2320
        %2944 = vmatmul.mubr.bf16.gmra.mxu0 %v2319
        %v2945 = vpop.f32.mrf.mxu0
        %v2946 = vadd.f32 0.0, %v2945
        %v2947 = vpop.f32.mrf.mxu0
        %v2948 = vadd.f32 0.0, %v2947
        %v2949 = vpop.f32.mrf.mxu0
        %v2950 = vadd.f32 0.0, %v2949
        %v2951 = vpop.f32.mrf.mxu0
        %v2952 = vadd.f32 0.0, %v2951
        %2953 = vmatprep.mubr.bf16.mxu0 %v2322
        %2954 = vmatmul.mubr.bf16.gmra.mxu0 %v2321
        %v2955 = vpop.f32.mrf.mxu0
        %v2956 = vadd.f32 0.0, %v2955
        %v2957 = vpop.f32.mrf.mxu0
        %v2958 = vadd.f32 0.0, %v2957
        %v2959 = vpop.f32.mrf.mxu0
        %v2960 = vadd.f32 0.0, %v2959
        %v2961 = vpop.f32.mrf.mxu0
        %v2962 = vadd.f32 0.0, %v2961
        %2963 = vmatprep.mubr.bf16.mxu0 %v2324
        %2964 = vmatmul.mubr.bf16.gmra.mxu0 %v2323
        %v2965 = vpop.f32.mrf.mxu0
        %v2966 = vadd.f32 0.0, %v2965
        %v2967 = vpop.f32.mrf.mxu0
        %v2968 = vadd.f32 0.0, %v2967
        %v2969 = vpop.f32.mrf.mxu0
        %v2970 = vadd.f32 0.0, %v2969
        %v2971 = vpop.f32.mrf.mxu0
        %v2972 = vadd.f32 0.0, %v2971
        %2973 = vmatprep.mubr.bf16.mxu0 %v2326
        %2974 = vmatmul.mubr.bf16.gmra.mxu0 %v2325
        %v2975 = vpop.f32.mrf.mxu0
        %v2976 = vadd.f32 0.0, %v2975
        %v2977 = vpop.f32.mrf.mxu0
        %v2978 = vadd.f32 0.0, %v2977
        %v2979 = vpop.f32.mrf.mxu0
        %v2980 = vadd.f32 0.0, %v2979
        %v2981 = vpop.f32.mrf.mxu0
        %v2982 = vadd.f32 0.0, %v2981
        %2983 = vmatprep.mubr.bf16.mxu0 %v2328
        %2984 = vmatmul.mubr.bf16.gmra.mxu0 %v2327
        %v2985 = vpop.f32.mrf.mxu0
        %v2986 = vadd.f32 0.0, %v2985
        %v2987 = vpop.f32.mrf.mxu0
        %v2988 = vadd.f32 0.0, %v2987
        %v2989 = vpop.f32.mrf.mxu0
        %v2990 = vadd.f32 0.0, %v2989
        %v2991 = vpop.f32.mrf.mxu0
        %v2992 = vadd.f32 0.0, %v2991
        %2993 = vmatprep.mubr.bf16.mxu0 %v2330
        %2994 = vmatmul.mubr.bf16.gmra.mxu0 %v2329
        %v2995 = vpop.f32.mrf.mxu0
        %v2996 = vadd.f32 0.0, %v2995
        %v2997 = vpop.f32.mrf.mxu0
        %v2998 = vadd.f32 0.0, %v2997
        %v2999 = vpop.f32.mrf.mxu0
        %v3000 = vadd.f32 0.0, %v2999
        %v3001 = vpop.f32.mrf.mxu0
        %v3002 = vadd.f32 0.0, %v3001
        %3003 = vmatprep.mubr.bf16.mxu0 %v2332
        %3004 = vmatmul.mubr.bf16.gmra.mxu0 %v2331
        %v3005 = vpop.f32.mrf.mxu0
        %v3006 = vadd.f32 0.0, %v3005
        %v3007 = vpop.f32.mrf.mxu0
        %v3008 = vadd.f32 0.0, %v3007
        %v3009 = vpop.f32.mrf.mxu0
        %v3010 = vadd.f32 0.0, %v3009
        %v3011 = vpop.f32.mrf.mxu0
        %v3012 = vadd.f32 0.0, %v3011
        %3013 = vmatprep.mubr.bf16.mxu0 %v2334
        %3014 = vmatmul.mubr.bf16.gmra.mxu0 %v2333
        %v3015 = vpop.f32.mrf.mxu0
        %v3016 = vadd.f32 0.0, %v3015
        %v3017 = vpop.f32.mrf.mxu0
        %v3018 = vadd.f32 0.0, %v3017
        %v3019 = vpop.f32.mrf.mxu0
        %v3020 = vadd.f32 0.0, %v3019
        %v3021 = vpop.f32.mrf.mxu0
        %v3022 = vadd.f32 0.0, %v3021
        %3023 = vmatprep.mubr.bf16.mxu0 %v2336
        %3024 = vmatmul.mubr.bf16.gmra.mxu0 %v2335
        %v3025 = vpop.f32.mrf.mxu0
        %v3026 = vadd.f32 0.0, %v3025
        %v3027 = vpop.f32.mrf.mxu0
        %v3028 = vadd.f32 0.0, %v3027
        %v3029 = vpop.f32.mrf.mxu0
        %v3030 = vadd.f32 0.0, %v3029
        %v3031 = vpop.f32.mrf.mxu0
        %v3032 = vadd.f32 0.0, %v3031
        %3033 = vmatprep.mubr.bf16.mxu0 %v2338
        %3034 = vmatmul.mubr.bf16.gmra.mxu0 %v2337
        %v3035 = vpop.f32.mrf.mxu0
        %v3036 = vadd.f32 0.0, %v3035
        %v3037 = vpop.f32.mrf.mxu0
        %v3038 = vadd.f32 0.0, %v3037
        %v3039 = vpop.f32.mrf.mxu0
        %v3040 = vadd.f32 0.0, %v3039
        %v3041 = vpop.f32.mrf.mxu0
        %v3042 = vadd.f32 0.0, %v3041
        %3043 = vmatprep.mubr.bf16.mxu0 %v2340
        %3044 = vmatmul.mubr.bf16.gmra.mxu0 %v2339
        %v3045 = vpop.f32.mrf.mxu0
        %v3046 = vadd.f32 0.0, %v3045
        %v3047 = vpop.f32.mrf.mxu0
        %v3048 = vadd.f32 0.0, %v3047
        %v3049 = vpop.f32.mrf.mxu0
        %v3050 = vadd.f32 0.0, %v3049
        %v3051 = vpop.f32.mrf.mxu0
        %v3052 = vadd.f32 0.0, %v3051
        %3053 = vmatprep.mubr.bf16.mxu0 %v2342
        %3054 = vmatmul.mubr.bf16.gmra.mxu0 %v2341
        %v3055 = vpop.f32.mrf.mxu0
        %v3056 = vadd.f32 0.0, %v3055
        %v3057 = vpop.f32.mrf.mxu0
        %v3058 = vadd.f32 0.0, %v3057
        %v3059 = vpop.f32.mrf.mxu0
        %v3060 = vadd.f32 0.0, %v3059
        %v3061 = vpop.f32.mrf.mxu0
        %v3062 = vadd.f32 0.0, %v3061
        %3063 = vmatprep.mubr.bf16.mxu0 %v2344
        %3064 = vmatmul.mubr.bf16.gmra.mxu0 %v2343
        %v3065 = vpop.f32.mrf.mxu0
        %v3066 = vadd.f32 0.0, %v3065
        %v3067 = vpop.f32.mrf.mxu0
        %v3068 = vadd.f32 0.0, %v3067
        %v3069 = vpop.f32.mrf.mxu0
        %v3070 = vadd.f32 0.0, %v3069
        %v3071 = vpop.f32.mrf.mxu0
        %v3072 = vadd.f32 0.0, %v3071
        %3073 = vmatprep.mubr.bf16.mxu0 %v2346
        %3074 = vmatmul.mubr.bf16.gmra.mxu0 %v2345
        %v3075 = vpop.f32.mrf.mxu0
        %v3076 = vadd.f32 0.0, %v3075
        %v3077 = vpop.f32.mrf.mxu0
        %v3078 = vadd.f32 0.0, %v3077
        %v3079 = vpop.f32.mrf.mxu0
        %v3080 = vadd.f32 0.0, %v3079
        %v3081 = vpop.f32.mrf.mxu0
        %v3082 = vadd.f32 0.0, %v3081
        %3083 = vdwg.mxu0
        %3084 = vmatprep.subr.bf16.mxu0 %v2634
        %3085 = vmatpush1.bf16.msra.mxu0 %v2633
        %3086 = vmatprep.subr.bf16.mxu0 %v2630
        %3087 = vmatpush1.bf16.msra.mxu0 %v2629
        %3088 = vmatprep.subr.bf16.mxu0 %v2626
        %3089 = vmatpush1.bf16.msra.mxu0 %v2625
        %3090 = vmatprep.subr.bf16.mxu0 %v2622
        %3091 = vmatpush1.bf16.msra.mxu0 %v2621
        %3092 = vmatprep.subr.bf16.mxu0 %v2618
        %3093 = vmatpush1.bf16.msra.mxu0 %v2617
        %3094 = vmatprep.subr.bf16.mxu0 %v2614
        %3095 = vmatpush1.bf16.msra.mxu0 %v2613
        %3096 = vmatprep.subr.bf16.mxu0 %v2610
        %3097 = vmatpush1.bf16.msra.mxu0 %v2609
        %3098 = vmatprep.subr.bf16.mxu0 %v2606
        %3099 = vmatpush1.bf16.msra.mxu0 %v2605
        %3100 = vmatprep.subr.bf16.mxu0 %v2666
        %3101 = vmatpush2.bf16.msra.mxu0 %v2665
        %3102 = vmatprep.subr.bf16.mxu0 %v2662
        %3103 = vmatpush2.bf16.msra.mxu0 %v2661
        %3104 = vmatprep.subr.bf16.mxu0 %v2658
        %3105 = vmatpush2.bf16.msra.mxu0 %v2657
        %3106 = vmatprep.subr.bf16.mxu0 %v2654
        %3107 = vmatpush2.bf16.msra.mxu0 %v2653
        %3108 = vmatprep.subr.bf16.mxu0 %v2650
        %3109 = vmatpush2.bf16.msra.mxu0 %v2649
        %3110 = vmatprep.subr.bf16.mxu0 %v2646
        %3111 = vmatpush2.bf16.msra.mxu0 %v2645
        %3112 = vmatprep.subr.bf16.mxu0 %v2642
        %3113 = vmatpush2.bf16.msra.mxu0 %v2641
        %3114 = vmatprep.subr.bf16.mxu0 %v2638
        %3115 = vmatpush2.bf16.msra.mxu0 %v2637
        %3116 = vmatprep.mubr.bf16.mxu0 %v2284
        %3117 = vmatmul.mubr.bf16.gmra.mxu0 %v2283
        %v3118 = vpop.f32.mrf.mxu0
        %v3119 = vadd.f32 0.0, %v3118
        %v3120 = vpop.f32.mrf.mxu0
        %v3121 = vadd.f32 0.0, %v3120
        %v3122 = vpop.f32.mrf.mxu0
        %v3123 = vadd.f32 0.0, %v3122
        %v3124 = vpop.f32.mrf.mxu0
        %v3125 = vadd.f32 0.0, %v3124
        %3126 = vmatprep.mubr.bf16.mxu0 %v2286
        %3127 = vmatmul.mubr.bf16.gmra.mxu0 %v2285
        %v3128 = vpop.f32.mrf.mxu0
        %v3129 = vadd.f32 0.0, %v3128
        %v3130 = vpop.f32.mrf.mxu0
        %v3131 = vadd.f32 0.0, %v3130
        %v3132 = vpop.f32.mrf.mxu0
        %v3133 = vadd.f32 0.0, %v3132
        %v3134 = vpop.f32.mrf.mxu0
        %v3135 = vadd.f32 0.0, %v3134
        %3136 = vmatprep.mubr.bf16.mxu0 %v2288
        %3137 = vmatmul.mubr.bf16.gmra.mxu0 %v2287
        %v3138 = vpop.f32.mrf.mxu0
        %v3139 = vadd.f32 0.0, %v3138
        %v3140 = vpop.f32.mrf.mxu0
        %v3141 = vadd.f32 0.0, %v3140
        %v3142 = vpop.f32.mrf.mxu0
        %v3143 = vadd.f32 0.0, %v3142
        %v3144 = vpop.f32.mrf.mxu0
        %v3145 = vadd.f32 0.0, %v3144
        %3146 = vmatprep.mubr.bf16.mxu0 %v2290
        %3147 = vmatmul.mubr.bf16.gmra.mxu0 %v2289
        %v3148 = vpop.f32.mrf.mxu0
        %v3149 = vadd.f32 0.0, %v3148
        %v3150 = vpop.f32.mrf.mxu0
        %v3151 = vadd.f32 0.0, %v3150
        %v3152 = vpop.f32.mrf.mxu0
        %v3153 = vadd.f32 0.0, %v3152
        %v3154 = vpop.f32.mrf.mxu0
        %v3155 = vadd.f32 0.0, %v3154
        %3156 = vmatprep.mubr.bf16.mxu0 %v2292
        %3157 = vmatmul.mubr.bf16.gmra.mxu0 %v2291
        %v3158 = vpop.f32.mrf.mxu0
        %v3159 = vadd.f32 0.0, %v3158
        %v3160 = vpop.f32.mrf.mxu0
        %v3161 = vadd.f32 0.0, %v3160
        %v3162 = vpop.f32.mrf.mxu0
        %v3163 = vadd.f32 0.0, %v3162
        %v3164 = vpop.f32.mrf.mxu0
        %v3165 = vadd.f32 0.0, %v3164
        %3166 = vmatprep.mubr.bf16.mxu0 %v2294
        %3167 = vmatmul.mubr.bf16.gmra.mxu0 %v2293
        %v3168 = vpop.f32.mrf.mxu0
        %v3169 = vadd.f32 0.0, %v3168
        %v3170 = vpop.f32.mrf.mxu0
        %v3171 = vadd.f32 0.0, %v3170
        %v3172 = vpop.f32.mrf.mxu0
        %v3173 = vadd.f32 0.0, %v3172
        %v3174 = vpop.f32.mrf.mxu0
        %v3175 = vadd.f32 0.0, %v3174
        %3176 = vmatprep.mubr.bf16.mxu0 %v2296
        %3177 = vmatmul.mubr.bf16.gmra.mxu0 %v2295
        %v3178 = vpop.f32.mrf.mxu0
        %v3179 = vadd.f32 0.0, %v3178
        %v3180 = vpop.f32.mrf.mxu0
        %v3181 = vadd.f32 0.0, %v3180
        %v3182 = vpop.f32.mrf.mxu0
        %v3183 = vadd.f32 0.0, %v3182
        %v3184 = vpop.f32.mrf.mxu0
        %v3185 = vadd.f32 0.0, %v3184
        %3186 = vmatprep.mubr.bf16.mxu0 %v2298
        %3187 = vmatmul.mubr.bf16.gmra.mxu0 %v2297
        %v3188 = vpop.f32.mrf.mxu0
        %v3189 = vadd.f32 0.0, %v3188
        %v3190 = vpop.f32.mrf.mxu0
        %v3191 = vadd.f32 0.0, %v3190
        %v3192 = vpop.f32.mrf.mxu0
        %v3193 = vadd.f32 0.0, %v3192
        %v3194 = vpop.f32.mrf.mxu0
        %v3195 = vadd.f32 0.0, %v3194
        %3196 = vmatprep.mubr.bf16.mxu0 %v2300
        %3197 = vmatmul.mubr.bf16.gmra.mxu0 %v2299
        %v3198 = vpop.f32.mrf.mxu0
        %v3199 = vadd.f32 0.0, %v3198
        %v3200 = vpop.f32.mrf.mxu0
        %v3201 = vadd.f32 0.0, %v3200
        %v3202 = vpop.f32.mrf.mxu0
        %v3203 = vadd.f32 0.0, %v3202
        %v3204 = vpop.f32.mrf.mxu0
        %v3205 = vadd.f32 0.0, %v3204
        %3206 = vmatprep.mubr.bf16.mxu0 %v2302
        %3207 = vmatmul.mubr.bf16.gmra.mxu0 %v2301
        %v3208 = vpop.f32.mrf.mxu0
        %v3209 = vadd.f32 0.0, %v3208
        %v3210 = vpop.f32.mrf.mxu0
        %v3211 = vadd.f32 0.0, %v3210
        %v3212 = vpop.f32.mrf.mxu0
        %v3213 = vadd.f32 0.0, %v3212
        %v3214 = vpop.f32.mrf.mxu0
        %v3215 = vadd.f32 0.0, %v3214
        %3216 = vmatprep.mubr.bf16.mxu0 %v2304
        %3217 = vmatmul.mubr.bf16.gmra.mxu0 %v2303
        %v3218 = vpop.f32.mrf.mxu0
        %v3219 = vadd.f32 0.0, %v3218
        %v3220 = vpop.f32.mrf.mxu0
        %v3221 = vadd.f32 0.0, %v3220
        %v3222 = vpop.f32.mrf.mxu0
        %v3223 = vadd.f32 0.0, %v3222
        %v3224 = vpop.f32.mrf.mxu0
        %v3225 = vadd.f32 0.0, %v3224
        %3226 = vmatprep.mubr.bf16.mxu0 %v2306
        %3227 = vmatmul.mubr.bf16.gmra.mxu0 %v2305
        %v3228 = vpop.f32.mrf.mxu0
        %v3229 = vadd.f32 0.0, %v3228
        %v3230 = vpop.f32.mrf.mxu0
        %v3231 = vadd.f32 0.0, %v3230
        %v3232 = vpop.f32.mrf.mxu0
        %v3233 = vadd.f32 0.0, %v3232
        %v3234 = vpop.f32.mrf.mxu0
        %v3235 = vadd.f32 0.0, %v3234
        %3236 = vmatprep.mubr.bf16.mxu0 %v2308
        %3237 = vmatmul.mubr.bf16.gmra.mxu0 %v2307
        %v3238 = vpop.f32.mrf.mxu0
        %v3239 = vadd.f32 0.0, %v3238
        %v3240 = vpop.f32.mrf.mxu0
        %v3241 = vadd.f32 0.0, %v3240
        %v3242 = vpop.f32.mrf.mxu0
        %v3243 = vadd.f32 0.0, %v3242
        %v3244 = vpop.f32.mrf.mxu0
        %v3245 = vadd.f32 0.0, %v3244
        %3246 = vmatprep.mubr.bf16.mxu0 %v2310
        %3247 = vmatmul.mubr.bf16.gmra.mxu0 %v2309
        %v3248 = vpop.f32.mrf.mxu0
        %v3249 = vadd.f32 0.0, %v3248
        %v3250 = vpop.f32.mrf.mxu0
        %v3251 = vadd.f32 0.0, %v3250
        %v3252 = vpop.f32.mrf.mxu0
        %v3253 = vadd.f32 0.0, %v3252
        %v3254 = vpop.f32.mrf.mxu0
        %v3255 = vadd.f32 0.0, %v3254
        %3256 = vmatprep.mubr.bf16.mxu0 %v2312
        %3257 = vmatmul.mubr.bf16.gmra.mxu0 %v2311
        %v3258 = vpop.f32.mrf.mxu0
        %v3259 = vadd.f32 0.0, %v3258
        %v3260 = vpop.f32.mrf.mxu0
        %v3261 = vadd.f32 0.0, %v3260
        %v3262 = vpop.f32.mrf.mxu0
        %v3263 = vadd.f32 0.0, %v3262
        %v3264 = vpop.f32.mrf.mxu0
        %v3265 = vadd.f32 0.0, %v3264
        %3266 = vmatprep.mubr.bf16.mxu0 %v2314
        %3267 = vmatmul.mubr.bf16.gmra.mxu0 %v2313
        %v3268 = vpop.f32.mrf.mxu0
        %v3269 = vadd.f32 0.0, %v3268
        %v3270 = vpop.f32.mrf.mxu0
        %v3271 = vadd.f32 0.0, %v3270
        %v3272 = vpop.f32.mrf.mxu0
        %v3273 = vadd.f32 0.0, %v3272
        %v3274 = vpop.f32.mrf.mxu0
        %v3275 = vadd.f32 0.0, %v3274
        %3276 = vmatprep.mubr.bf16.mxu0 %v2316
        %3277 = vmatmul.mubr.bf16.gmra.mxu0 %v2315
        %v3278 = vpop.f32.mrf.mxu0
        %v3279 = vadd.f32 0.0, %v3278
        %v3280 = vpop.f32.mrf.mxu0
        %v3281 = vadd.f32 0.0, %v3280
        %v3282 = vpop.f32.mrf.mxu0
        %v3283 = vadd.f32 0.0, %v3282
        %v3284 = vpop.f32.mrf.mxu0
        %v3285 = vadd.f32 0.0, %v3284
        %3286 = vmatprep.mubr.bf16.mxu0 %v2318
        %3287 = vmatmul.mubr.bf16.gmra.mxu0 %v2317
        %v3288 = vpop.f32.mrf.mxu0
        %v3289 = vadd.f32 0.0, %v3288
        %v3290 = vpop.f32.mrf.mxu0
        %v3291 = vadd.f32 0.0, %v3290
        %v3292 = vpop.f32.mrf.mxu0
        %v3293 = vadd.f32 0.0, %v3292
        %v3294 = vpop.f32.mrf.mxu0
        %v3295 = vadd.f32 0.0, %v3294
        %3296 = vmatprep.mubr.bf16.mxu0 %v2320
        %3297 = vmatmul.mubr.bf16.gmra.mxu0 %v2319
        %v3298 = vpop.f32.mrf.mxu0
        %v3299 = vadd.f32 0.0, %v3298
        %v3300 = vpop.f32.mrf.mxu0
        %v3301 = vadd.f32 0.0, %v3300
        %v3302 = vpop.f32.mrf.mxu0
        %v3303 = vadd.f32 0.0, %v3302
        %v3304 = vpop.f32.mrf.mxu0
        %v3305 = vadd.f32 0.0, %v3304
        %3306 = vmatprep.mubr.bf16.mxu0 %v2322
        %3307 = vmatmul.mubr.bf16.gmra.mxu0 %v2321
        %v3308 = vpop.f32.mrf.mxu0
        %v3309 = vadd.f32 0.0, %v3308
        %v3310 = vpop.f32.mrf.mxu0
        %v3311 = vadd.f32 0.0, %v3310
        %v3312 = vpop.f32.mrf.mxu0
        %v3313 = vadd.f32 0.0, %v3312
        %v3314 = vpop.f32.mrf.mxu0
        %v3315 = vadd.f32 0.0, %v3314
        %3316 = vmatprep.mubr.bf16.mxu0 %v2324
        %3317 = vmatmul.mubr.bf16.gmra.mxu0 %v2323
        %v3318 = vpop.f32.mrf.mxu0
        %v3319 = vadd.f32 0.0, %v3318
        %v3320 = vpop.f32.mrf.mxu0
        %v3321 = vadd.f32 0.0, %v3320
        %v3322 = vpop.f32.mrf.mxu0
        %v3323 = vadd.f32 0.0, %v3322
        %v3324 = vpop.f32.mrf.mxu0
        %v3325 = vadd.f32 0.0, %v3324
        %3326 = vmatprep.mubr.bf16.mxu0 %v2326
        %3327 = vmatmul.mubr.bf16.gmra.mxu0 %v2325
        %v3328 = vpop.f32.mrf.mxu0
        %v3329 = vadd.f32 0.0, %v3328
        %v3330 = vpop.f32.mrf.mxu0
        %v3331 = vadd.f32 0.0, %v3330
        %v3332 = vpop.f32.mrf.mxu0
        %v3333 = vadd.f32 0.0, %v3332
        %v3334 = vpop.f32.mrf.mxu0
        %v3335 = vadd.f32 0.0, %v3334
        %3336 = vmatprep.mubr.bf16.mxu0 %v2328
        %3337 = vmatmul.mubr.bf16.gmra.mxu0 %v2327
        %v3338 = vpop.f32.mrf.mxu0
        %v3339 = vadd.f32 0.0, %v3338
        %v3340 = vpop.f32.mrf.mxu0
        %v3341 = vadd.f32 0.0, %v3340
        %v3342 = vpop.f32.mrf.mxu0
        %v3343 = vadd.f32 0.0, %v3342
        %v3344 = vpop.f32.mrf.mxu0
        %v3345 = vadd.f32 0.0, %v3344
        %3346 = vmatprep.mubr.bf16.mxu0 %v2330
        %3347 = vmatmul.mubr.bf16.gmra.mxu0 %v2329
        %v3348 = vpop.f32.mrf.mxu0
        %v3349 = vadd.f32 0.0, %v3348
        %v3350 = vpop.f32.mrf.mxu0
        %v3351 = vadd.f32 0.0, %v3350
        %v3352 = vpop.f32.mrf.mxu0
        %v3353 = vadd.f32 0.0, %v3352
        %v3354 = vpop.f32.mrf.mxu0
        %v3355 = vadd.f32 0.0, %v3354
        %3356 = vmatprep.mubr.bf16.mxu0 %v2332
        %3357 = vmatmul.mubr.bf16.gmra.mxu0 %v2331
        %v3358 = vpop.f32.mrf.mxu0
        %v3359 = vadd.f32 0.0, %v3358
        %v3360 = vpop.f32.mrf.mxu0
        %v3361 = vadd.f32 0.0, %v3360
        %v3362 = vpop.f32.mrf.mxu0
        %v3363 = vadd.f32 0.0, %v3362
        %v3364 = vpop.f32.mrf.mxu0
        %v3365 = vadd.f32 0.0, %v3364
        %3366 = vmatprep.mubr.bf16.mxu0 %v2334
        %3367 = vmatmul.mubr.bf16.gmra.mxu0 %v2333
        %v3368 = vpop.f32.mrf.mxu0
        %v3369 = vadd.f32 0.0, %v3368
        %v3370 = vpop.f32.mrf.mxu0
        %v3371 = vadd.f32 0.0, %v3370
        %v3372 = vpop.f32.mrf.mxu0
        %v3373 = vadd.f32 0.0, %v3372
        %v3374 = vpop.f32.mrf.mxu0
        %v3375 = vadd.f32 0.0, %v3374
        %3376 = vmatprep.mubr.bf16.mxu0 %v2336
        %3377 = vmatmul.mubr.bf16.gmra.mxu0 %v2335
        %v3378 = vpop.f32.mrf.mxu0
        %v3379 = vadd.f32 0.0, %v3378
        %v3380 = vpop.f32.mrf.mxu0
        %v3381 = vadd.f32 0.0, %v3380
        %v3382 = vpop.f32.mrf.mxu0
        %v3383 = vadd.f32 0.0, %v3382
        %v3384 = vpop.f32.mrf.mxu0
        %v3385 = vadd.f32 0.0, %v3384
        %3386 = vmatprep.mubr.bf16.mxu0 %v2338
        %3387 = vmatmul.mubr.bf16.gmra.mxu0 %v2337
        %v3388 = vpop.f32.mrf.mxu0
        %v3389 = vadd.f32 0.0, %v3388
        %v3390 = vpop.f32.mrf.mxu0
        %v3391 = vadd.f32 0.0, %v3390
        %v3392 = vpop.f32.mrf.mxu0
        %v3393 = vadd.f32 0.0, %v3392
        %v3394 = vpop.f32.mrf.mxu0
        %v3395 = vadd.f32 0.0, %v3394
        %3396 = vmatprep.mubr.bf16.mxu0 %v2340
        %3397 = vmatmul.mubr.bf16.gmra.mxu0 %v2339
        %v3398 = vpop.f32.mrf.mxu0
        %v3399 = vadd.f32 0.0, %v3398
        %v3400 = vpop.f32.mrf.mxu0
        %v3401 = vadd.f32 0.0, %v3400
        %v3402 = vpop.f32.mrf.mxu0
        %v3403 = vadd.f32 0.0, %v3402
        %v3404 = vpop.f32.mrf.mxu0
        %v3405 = vadd.f32 0.0, %v3404
        %3406 = vmatprep.mubr.bf16.mxu0 %v2342
        %3407 = vmatmul.mubr.bf16.gmra.mxu0 %v2341
        %v3408 = vpop.f32.mrf.mxu0
        %v3409 = vadd.f32 0.0, %v3408
        %v3410 = vpop.f32.mrf.mxu0
        %v3411 = vadd.f32 0.0, %v3410
        %v3412 = vpop.f32.mrf.mxu0
        %v3413 = vadd.f32 0.0, %v3412
        %v3414 = vpop.f32.mrf.mxu0
        %v3415 = vadd.f32 0.0, %v3414
        %3416 = vmatprep.mubr.bf16.mxu0 %v2344
        %3417 = vmatmul.mubr.bf16.gmra.mxu0 %v2343
        %v3418 = vpop.f32.mrf.mxu0
        %v3419 = vadd.f32 0.0, %v3418
        %v3420 = vpop.f32.mrf.mxu0
        %v3421 = vadd.f32 0.0, %v3420
        %v3422 = vpop.f32.mrf.mxu0
        %v3423 = vadd.f32 0.0, %v3422
        %v3424 = vpop.f32.mrf.mxu0
        %v3425 = vadd.f32 0.0, %v3424
        %3426 = vmatprep.mubr.bf16.mxu0 %v2346
        %3427 = vmatmul.mubr.bf16.gmra.mxu0 %v2345
        %v3428 = vpop.f32.mrf.mxu0
        %v3429 = vadd.f32 0.0, %v3428
        %v3430 = vpop.f32.mrf.mxu0
        %v3431 = vadd.f32 0.0, %v3430
        %v3432 = vpop.f32.mrf.mxu0
        %v3433 = vadd.f32 0.0, %v3432
        %v3434 = vpop.f32.mrf.mxu0
        %v3435 = vadd.f32 0.0, %v3434
        %3436 = vdwg.mxu0
        %v3437 = vpack.c.bf16 %v2770, %v2766
        %v3438 = vpack.c.bf16 %v2772, %v2768
        %v3439 = vpack.c.bf16 %v3123, %v3119
        %v3440 = vpack.c.bf16 %v3125, %v3121
        %v3441 = vpack.c.bf16 %v2780, %v2776
        %v3442 = vpack.c.bf16 %v2782, %v2778
        %v3443 = vpack.c.bf16 %v3133, %v3129
        %v3444 = vpack.c.bf16 %v3135, %v3131
        %v3445 = vpack.c.bf16 %v2790, %v2786
        %v3446 = vpack.c.bf16 %v2792, %v2788
        %v3447 = vpack.c.bf16 %v3143, %v3139
        %v3448 = vpack.c.bf16 %v3145, %v3141
        %v3449 = vpack.c.bf16 %v2800, %v2796
        %v3450 = vpack.c.bf16 %v2802, %v2798
        %v3451 = vpack.c.bf16 %v3153, %v3149
        %v3452 = vpack.c.bf16 %v3155, %v3151
        %v3453 = vpack.c.bf16 %v2810, %v2806
        %v3454 = vpack.c.bf16 %v2812, %v2808
        %v3455 = vpack.c.bf16 %v3163, %v3159
        %v3456 = vpack.c.bf16 %v3165, %v3161
        %v3457 = vpack.c.bf16 %v2820, %v2816
        %v3458 = vpack.c.bf16 %v2822, %v2818
        %v3459 = vpack.c.bf16 %v3173, %v3169
        %v3460 = vpack.c.bf16 %v3175, %v3171
        %v3461 = vpack.c.bf16 %v2830, %v2826
        %v3462 = vpack.c.bf16 %v2832, %v2828
        %v3463 = vpack.c.bf16 %v3183, %v3179
        %v3464 = vpack.c.bf16 %v3185, %v3181
        %v3465 = vpack.c.bf16 %v2840, %v2836
        %v3466 = vpack.c.bf16 %v2842, %v2838
        %v3467 = vpack.c.bf16 %v3193, %v3189
        %v3468 = vpack.c.bf16 %v3195, %v3191
        %v3469 = vpack.c.bf16 %v2850, %v2846
        %v3470 = vpack.c.bf16 %v2852, %v2848
        %v3471 = vpack.c.bf16 %v3203, %v3199
        %v3472 = vpack.c.bf16 %v3205, %v3201
        %v3473 = vpack.c.bf16 %v2860, %v2856
        %v3474 = vpack.c.bf16 %v2862, %v2858
        %v3475 = vpack.c.bf16 %v3213, %v3209
        %v3476 = vpack.c.bf16 %v3215, %v3211
        %v3477 = vpack.c.bf16 %v2870, %v2866
        %v3478 = vpack.c.bf16 %v2872, %v2868
        %v3479 = vpack.c.bf16 %v3223, %v3219
        %v3480 = vpack.c.bf16 %v3225, %v3221
        %v3481 = vpack.c.bf16 %v2880, %v2876
        %v3482 = vpack.c.bf16 %v2882, %v2878
        %v3483 = vpack.c.bf16 %v3233, %v3229
        %v3484 = vpack.c.bf16 %v3235, %v3231
        %v3485 = vpack.c.bf16 %v2890, %v2886
        %v3486 = vpack.c.bf16 %v2892, %v2888
        %v3487 = vpack.c.bf16 %v3243, %v3239
        %v3488 = vpack.c.bf16 %v3245, %v3241
        %v3489 = vpack.c.bf16 %v2900, %v2896
        %v3490 = vpack.c.bf16 %v2902, %v2898
        %v3491 = vpack.c.bf16 %v3253, %v3249
        %v3492 = vpack.c.bf16 %v3255, %v3251
        %v3493 = vpack.c.bf16 %v2910, %v2906
        %v3494 = vpack.c.bf16 %v2912, %v2908
        %v3495 = vpack.c.bf16 %v3263, %v3259
        %v3496 = vpack.c.bf16 %v3265, %v3261
        %v3497 = vpack.c.bf16 %v2920, %v2916
        %v3498 = vpack.c.bf16 %v2922, %v2918
        %v3499 = vpack.c.bf16 %v3273, %v3269
        %v3500 = vpack.c.bf16 %v3275, %v3271
        %v3501 = vpack.c.bf16 %v2930, %v2926
        %v3502 = vpack.c.bf16 %v2932, %v2928
        %v3503 = vpack.c.bf16 %v3283, %v3279
        %v3504 = vpack.c.bf16 %v3285, %v3281
        %v3505 = vpack.c.bf16 %v2940, %v2936
        %v3506 = vpack.c.bf16 %v2942, %v2938
        %v3507 = vpack.c.bf16 %v3293, %v3289
        %v3508 = vpack.c.bf16 %v3295, %v3291
        %v3509 = vpack.c.bf16 %v2950, %v2946
        %v3510 = vpack.c.bf16 %v2952, %v2948
        %v3511 = vpack.c.bf16 %v3303, %v3299
        %v3512 = vpack.c.bf16 %v3305, %v3301
        %v3513 = vpack.c.bf16 %v2960, %v2956
        %v3514 = vpack.c.bf16 %v2962, %v2958
        %v3515 = vpack.c.bf16 %v3313, %v3309
        %v3516 = vpack.c.bf16 %v3315, %v3311
        %v3517 = vpack.c.bf16 %v2970, %v2966
        %v3518 = vpack.c.bf16 %v2972, %v2968
        %v3519 = vpack.c.bf16 %v3323, %v3319
        %v3520 = vpack.c.bf16 %v3325, %v3321
        %v3521 = vpack.c.bf16 %v2980, %v2976
        %v3522 = vpack.c.bf16 %v2982, %v2978
        %v3523 = vpack.c.bf16 %v3333, %v3329
        %v3524 = vpack.c.bf16 %v3335, %v3331
        %v3525 = vpack.c.bf16 %v2990, %v2986
        %v3526 = vpack.c.bf16 %v2992, %v2988
        %v3527 = vpack.c.bf16 %v3343, %v3339
        %v3528 = vpack.c.bf16 %v3345, %v3341
        %v3529 = vpack.c.bf16 %v3000, %v2996
        %v3530 = vpack.c.bf16 %v3002, %v2998
        %v3531 = vpack.c.bf16 %v3353, %v3349
        %v3532 = vpack.c.bf16 %v3355, %v3351
        %v3533 = vpack.c.bf16 %v3010, %v3006
        %v3534 = vpack.c.bf16 %v3012, %v3008
        %v3535 = vpack.c.bf16 %v3363, %v3359
        %v3536 = vpack.c.bf16 %v3365, %v3361
        %v3537 = vpack.c.bf16 %v3020, %v3016
        %v3538 = vpack.c.bf16 %v3022, %v3018
        %v3539 = vpack.c.bf16 %v3373, %v3369
        %v3540 = vpack.c.bf16 %v3375, %v3371
        %v3541 = vpack.c.bf16 %v3030, %v3026
        %v3542 = vpack.c.bf16 %v3032, %v3028
        %v3543 = vpack.c.bf16 %v3383, %v3379
        %v3544 = vpack.c.bf16 %v3385, %v3381
        %v3545 = vpack.c.bf16 %v3040, %v3036
        %v3546 = vpack.c.bf16 %v3042, %v3038
        %v3547 = vpack.c.bf16 %v3393, %v3389
        %v3548 = vpack.c.bf16 %v3395, %v3391
        %v3549 = vpack.c.bf16 %v3050, %v3046
        %v3550 = vpack.c.bf16 %v3052, %v3048
        %v3551 = vpack.c.bf16 %v3403, %v3399
        %v3552 = vpack.c.bf16 %v3405, %v3401
        %v3553 = vpack.c.bf16 %v3060, %v3056
        %v3554 = vpack.c.bf16 %v3062, %v3058
        %v3555 = vpack.c.bf16 %v3413, %v3409
        %v3556 = vpack.c.bf16 %v3415, %v3411
        %v3557 = vpack.c.bf16 %v3070, %v3066
        %v3558 = vpack.c.bf16 %v3072, %v3068
        %v3559 = vpack.c.bf16 %v3423, %v3419
        %v3560 = vpack.c.bf16 %v3425, %v3421
        %v3561 = vpack.c.bf16 %v3080, %v3076
        %v3562 = vpack.c.bf16 %v3082, %v3078
        %v3563 = vpack.c.bf16 %v3433, %v3429
        %v3564 = vpack.c.bf16 %v3435, %v3431
        %v3565 = vld [vmem:[%s8] sm:$0xf]
        %v3567 = vlaneseq
        %v3568 = vshrl.u32 %v3567, 7
        %v3569 = vsub.s32 0, %v3568
        %v3570 = vrot.slane %v3565, %v3569
        %v3571 = vlaneseq
        %v3572 = vshrl.u32 %v3571, 7
        %v3573 = vsub.s32 1, %v3572
        %v3574 = vrot.slane %v3565, %v3573
        %v3575 = vlaneseq
        %v3576 = vshrl.u32 %v3575, 7
        %v3577 = vsub.s32 2, %v3576
        %v3578 = vrot.slane %v3565, %v3577
        %v3579 = vlaneseq
        %v3580 = vshrl.u32 %v3579, 7
        %v3581 = vsub.s32 3, %v3580
        %v3582 = vrot.slane %v3565, %v3581
        %v3587 = vpack.c.bf16 %v3570, %v3570
        %v3588 = vpack.c.bf16 %v3574, %v3574
        %v3589 = vpack.c.bf16 %v3578, %v3578
        %v3590 = vpack.c.bf16 %v3582, %v3582
        %v3592 = vpack.i.b16 %v3587, %v3587
        %v3594 = vlaneseq
        %v3595 = vshrl.u32 %v3594, 7
        %v3596 = vsub.s32 0, %v3595
        %v3597 = vrot.slane %v3592, %v3596
        %v3599 = vpack.i.b16 %v3588, %v3588
        %v3601 = vlaneseq
        %v3602 = vshrl.u32 %v3601, 7
        %v3603 = vsub.s32 0, %v3602
        %v3604 = vrot.slane %v3599, %v3603
        %v3606 = vpack.i.b16 %v3589, %v3589
        %v3608 = vlaneseq
        %v3609 = vshrl.u32 %v3608, 7
        %v3610 = vsub.s32 0, %v3609
        %v3611 = vrot.slane %v3606, %v3610
        %v3613 = vpack.i.b16 %v3590, %v3590
        %v3615 = vlaneseq
        %v3616 = vshrl.u32 %v3615, 7
        %v3617 = vsub.s32 0, %v3616
        %v3618 = vrot.slane %v3613, %v3617
        %v3619 = vadd.bf16 %v3437, %v3597
        %v3620 = vadd.bf16 %v3438, %v3604
        %v3621 = vadd.bf16 %v3439, %v3611
        %v3622 = vadd.bf16 %v3440, %v3618
        %v3623 = vadd.bf16 %v3441, %v3597
        %v3624 = vadd.bf16 %v3442, %v3604
        %v3625 = vadd.bf16 %v3443, %v3611
        %v3626 = vadd.bf16 %v3444, %v3618
        %v3627 = vadd.bf16 %v3445, %v3597
        %v3628 = vadd.bf16 %v3446, %v3604
        %v3629 = vadd.bf16 %v3447, %v3611
        %v3630 = vadd.bf16 %v3448, %v3618
        %v3631 = vadd.bf16 %v3449, %v3597
        %v3632 = vadd.bf16 %v3450, %v3604
        %v3633 = vadd.bf16 %v3451, %v3611
        %v3634 = vadd.bf16 %v3452, %v3618
        %v3635 = vadd.bf16 %v3453, %v3597
        %v3636 = vadd.bf16 %v3454, %v3604
        %v3637 = vadd.bf16 %v3455, %v3611
        %v3638 = vadd.bf16 %v3456, %v3618
        %v3639 = vadd.bf16 %v3457, %v3597
        %v3640 = vadd.bf16 %v3458, %v3604
        %v3641 = vadd.bf16 %v3459, %v3611
        %v3642 = vadd.bf16 %v3460, %v3618
        %v3643 = vadd.bf16 %v3461, %v3597
        %v3644 = vadd.bf16 %v3462, %v3604
        %v3645 = vadd.bf16 %v3463, %v3611
        %v3646 = vadd.bf16 %v3464, %v3618
        %v3647 = vadd.bf16 %v3465, %v3597
        %v3648 = vadd.bf16 %v3466, %v3604
        %v3649 = vadd.bf16 %v3467, %v3611
        %v3650 = vadd.bf16 %v3468, %v3618
        %v3651 = vadd.bf16 %v3469, %v3597
        %v3652 = vadd.bf16 %v3470, %v3604
        %v3653 = vadd.bf16 %v3471, %v3611
        %v3654 = vadd.bf16 %v3472, %v3618
        %v3655 = vadd.bf16 %v3473, %v3597
        %v3656 = vadd.bf16 %v3474, %v3604
        %v3657 = vadd.bf16 %v3475, %v3611
        %v3658 = vadd.bf16 %v3476, %v3618
        %v3659 = vadd.bf16 %v3477, %v3597
        %v3660 = vadd.bf16 %v3478, %v3604
        %v3661 = vadd.bf16 %v3479, %v3611
        %v3662 = vadd.bf16 %v3480, %v3618
        %v3663 = vadd.bf16 %v3481, %v3597
        %v3664 = vadd.bf16 %v3482, %v3604
        %v3665 = vadd.bf16 %v3483, %v3611
        %v3666 = vadd.bf16 %v3484, %v3618
        %v3667 = vadd.bf16 %v3485, %v3597
        %v3668 = vadd.bf16 %v3486, %v3604
        %v3669 = vadd.bf16 %v3487, %v3611
        %v3670 = vadd.bf16 %v3488, %v3618
        %v3671 = vadd.bf16 %v3489, %v3597
        %v3672 = vadd.bf16 %v3490, %v3604
        %v3673 = vadd.bf16 %v3491, %v3611
        %v3674 = vadd.bf16 %v3492, %v3618
        %v3675 = vadd.bf16 %v3493, %v3597
        %v3676 = vadd.bf16 %v3494, %v3604
        %v3677 = vadd.bf16 %v3495, %v3611
        %v3678 = vadd.bf16 %v3496, %v3618
        %v3679 = vadd.bf16 %v3497, %v3597
        %v3680 = vadd.bf16 %v3498, %v3604
        %v3681 = vadd.bf16 %v3499, %v3611
        %v3682 = vadd.bf16 %v3500, %v3618
        %v3683 = vadd.bf16 %v3501, %v3597
        %v3684 = vadd.bf16 %v3502, %v3604
        %v3685 = vadd.bf16 %v3503, %v3611
        %v3686 = vadd.bf16 %v3504, %v3618
        %v3687 = vadd.bf16 %v3505, %v3597
        %v3688 = vadd.bf16 %v3506, %v3604
        %v3689 = vadd.bf16 %v3507, %v3611
        %v3690 = vadd.bf16 %v3508, %v3618
        %v3691 = vadd.bf16 %v3509, %v3597
        %v3692 = vadd.bf16 %v3510, %v3604
        %v3693 = vadd.bf16 %v3511, %v3611
        %v3694 = vadd.bf16 %v3512, %v3618
        %v3695 = vadd.bf16 %v3513, %v3597
        %v3696 = vadd.bf16 %v3514, %v3604
        %v3697 = vadd.bf16 %v3515, %v3611
        %v3698 = vadd.bf16 %v3516, %v3618
        %v3699 = vadd.bf16 %v3517, %v3597
        %v3700 = vadd.bf16 %v3518, %v3604
        %v3701 = vadd.bf16 %v3519, %v3611
        %v3702 = vadd.bf16 %v3520, %v3618
        %v3703 = vadd.bf16 %v3521, %v3597
        %v3704 = vadd.bf16 %v3522, %v3604
        %v3705 = vadd.bf16 %v3523, %v3611
        %v3706 = vadd.bf16 %v3524, %v3618
        %v3707 = vadd.bf16 %v3525, %v3597
        %v3708 = vadd.bf16 %v3526, %v3604
        %v3709 = vadd.bf16 %v3527, %v3611
        %v3710 = vadd.bf16 %v3528, %v3618
        %v3711 = vadd.bf16 %v3529, %v3597
        %v3712 = vadd.bf16 %v3530, %v3604
        %v3713 = vadd.bf16 %v3531, %v3611
        %v3714 = vadd.bf16 %v3532, %v3618
        %v3715 = vadd.bf16 %v3533, %v3597
        %v3716 = vadd.bf16 %v3534, %v3604
        %v3717 = vadd.bf16 %v3535, %v3611
        %v3718 = vadd.bf16 %v3536, %v3618
        %v3719 = vadd.bf16 %v3537, %v3597
        %v3720 = vadd.bf16 %v3538, %v3604
        %v3721 = vadd.bf16 %v3539, %v3611
        %v3722 = vadd.bf16 %v3540, %v3618
        %v3723 = vadd.bf16 %v3541, %v3597
        %v3724 = vadd.bf16 %v3542, %v3604
        %v3725 = vadd.bf16 %v3543, %v3611
        %v3726 = vadd.bf16 %v3544, %v3618
        %v3727 = vadd.bf16 %v3545, %v3597
        %v3728 = vadd.bf16 %v3546, %v3604
        %v3729 = vadd.bf16 %v3547, %v3611
        %v3730 = vadd.bf16 %v3548, %v3618
        %v3731 = vadd.bf16 %v3549, %v3597
        %v3732 = vadd.bf16 %v3550, %v3604
        %v3733 = vadd.bf16 %v3551, %v3611
        %v3734 = vadd.bf16 %v3552, %v3618
        %v3735 = vadd.bf16 %v3553, %v3597
        %v3736 = vadd.bf16 %v3554, %v3604
        %v3737 = vadd.bf16 %v3555, %v3611
        %v3738 = vadd.bf16 %v3556, %v3618
        %v3739 = vadd.bf16 %v3557, %v3597
        %v3740 = vadd.bf16 %v3558, %v3604
        %v3741 = vadd.bf16 %v3559, %v3611
        %v3742 = vadd.bf16 %v3560, %v3618
        %v3743 = vadd.bf16 %v3561, %v3597
        %v3744 = vadd.bf16 %v3562, %v3604
        %v3745 = vadd.bf16 %v3563, %v3611
        %v3746 = vadd.bf16 %v3564, %v3618
        %v3747 = vmax.bf16 %v3619, 0
        %v3748 = vmax.bf16 %v3620, 0
        %v3749 = vmax.bf16 %v3621, 0
        %v3750 = vmax.bf16 %v3622, 0
        %v3751 = vmax.bf16 %v3623, 0
        %v3752 = vmax.bf16 %v3624, 0
        %v3753 = vmax.bf16 %v3625, 0
        %v3754 = vmax.bf16 %v3626, 0
        %v3755 = vmax.bf16 %v3627, 0
        %v3756 = vmax.bf16 %v3628, 0
        %v3757 = vmax.bf16 %v3629, 0
        %v3758 = vmax.bf16 %v3630, 0
        %v3759 = vmax.bf16 %v3631, 0
        %v3760 = vmax.bf16 %v3632, 0
        %v3761 = vmax.bf16 %v3633, 0
        %v3762 = vmax.bf16 %v3634, 0
        %v3763 = vmax.bf16 %v3635, 0
        %v3764 = vmax.bf16 %v3636, 0
        %v3765 = vmax.bf16 %v3637, 0
        %v3766 = vmax.bf16 %v3638, 0
        %v3767 = vmax.bf16 %v3639, 0
        %v3768 = vmax.bf16 %v3640, 0
        %v3769 = vmax.bf16 %v3641, 0
        %v3770 = vmax.bf16 %v3642, 0
        %v3771 = vmax.bf16 %v3643, 0
        %v3772 = vmax.bf16 %v3644, 0
        %v3773 = vmax.bf16 %v3645, 0
        %v3774 = vmax.bf16 %v3646, 0
        %v3775 = vmax.bf16 %v3647, 0
        %v3776 = vmax.bf16 %v3648, 0
        %v3777 = vmax.bf16 %v3649, 0
        %v3778 = vmax.bf16 %v3650, 0
        %v3779 = vmax.bf16 %v3651, 0
        %v3780 = vmax.bf16 %v3652, 0
        %v3781 = vmax.bf16 %v3653, 0
        %v3782 = vmax.bf16 %v3654, 0
        %v3783 = vmax.bf16 %v3655, 0
        %v3784 = vmax.bf16 %v3656, 0
        %v3785 = vmax.bf16 %v3657, 0
        %v3786 = vmax.bf16 %v3658, 0
        %v3787 = vmax.bf16 %v3659, 0
        %v3788 = vmax.bf16 %v3660, 0
        %v3789 = vmax.bf16 %v3661, 0
        %v3790 = vmax.bf16 %v3662, 0
        %v3791 = vmax.bf16 %v3663, 0
        %v3792 = vmax.bf16 %v3664, 0
        %v3793 = vmax.bf16 %v3665, 0
        %v3794 = vmax.bf16 %v3666, 0
        %v3795 = vmax.bf16 %v3667, 0
        %v3796 = vmax.bf16 %v3668, 0
        %v3797 = vmax.bf16 %v3669, 0
        %v3798 = vmax.bf16 %v3670, 0
        %v3799 = vmax.bf16 %v3671, 0
        %v3800 = vmax.bf16 %v3672, 0
        %v3801 = vmax.bf16 %v3673, 0
        %v3802 = vmax.bf16 %v3674, 0
        %v3803 = vmax.bf16 %v3675, 0
        %v3804 = vmax.bf16 %v3676, 0
        %v3805 = vmax.bf16 %v3677, 0
        %v3806 = vmax.bf16 %v3678, 0
        %v3807 = vmax.bf16 %v3679, 0
        %v3808 = vmax.bf16 %v3680, 0
        %v3809 = vmax.bf16 %v3681, 0
        %v3810 = vmax.bf16 %v3682, 0
        %v3811 = vmax.bf16 %v3683, 0
        %v3812 = vmax.bf16 %v3684, 0
        %v3813 = vmax.bf16 %v3685, 0
        %v3814 = vmax.bf16 %v3686, 0
        %v3815 = vmax.bf16 %v3687, 0
        %v3816 = vmax.bf16 %v3688, 0
        %v3817 = vmax.bf16 %v3689, 0
        %v3818 = vmax.bf16 %v3690, 0
        %v3819 = vmax.bf16 %v3691, 0
        %v3820 = vmax.bf16 %v3692, 0
        %v3821 = vmax.bf16 %v3693, 0
        %v3822 = vmax.bf16 %v3694, 0
        %v3823 = vmax.bf16 %v3695, 0
        %v3824 = vmax.bf16 %v3696, 0
        %v3825 = vmax.bf16 %v3697, 0
        %v3826 = vmax.bf16 %v3698, 0
        %v3827 = vmax.bf16 %v3699, 0
        %v3828 = vmax.bf16 %v3700, 0
        %v3829 = vmax.bf16 %v3701, 0
        %v3830 = vmax.bf16 %v3702, 0
        %v3831 = vmax.bf16 %v3703, 0
        %v3832 = vmax.bf16 %v3704, 0
        %v3833 = vmax.bf16 %v3705, 0
        %v3834 = vmax.bf16 %v3706, 0
        %v3835 = vmax.bf16 %v3707, 0
        %v3836 = vmax.bf16 %v3708, 0
        %v3837 = vmax.bf16 %v3709, 0
        %v3838 = vmax.bf16 %v3710, 0
        %v3839 = vmax.bf16 %v3711, 0
        %v3840 = vmax.bf16 %v3712, 0
        %v3841 = vmax.bf16 %v3713, 0
        %v3842 = vmax.bf16 %v3714, 0
        %v3843 = vmax.bf16 %v3715, 0
        %v3844 = vmax.bf16 %v3716, 0
        %v3845 = vmax.bf16 %v3717, 0
        %v3846 = vmax.bf16 %v3718, 0
        %v3847 = vmax.bf16 %v3719, 0
        %v3848 = vmax.bf16 %v3720, 0
        %v3849 = vmax.bf16 %v3721, 0
        %v3850 = vmax.bf16 %v3722, 0
        %v3851 = vmax.bf16 %v3723, 0
        %v3852 = vmax.bf16 %v3724, 0
        %v3853 = vmax.bf16 %v3725, 0
        %v3854 = vmax.bf16 %v3726, 0
        %v3855 = vmax.bf16 %v3727, 0
        %v3856 = vmax.bf16 %v3728, 0
        %v3857 = vmax.bf16 %v3729, 0
        %v3858 = vmax.bf16 %v3730, 0
        %v3859 = vmax.bf16 %v3731, 0
        %v3860 = vmax.bf16 %v3732, 0
        %v3861 = vmax.bf16 %v3733, 0
        %v3862 = vmax.bf16 %v3734, 0
        %v3863 = vmax.bf16 %v3735, 0
        %v3864 = vmax.bf16 %v3736, 0
        %v3865 = vmax.bf16 %v3737, 0
        %v3866 = vmax.bf16 %v3738, 0
        %v3867 = vmax.bf16 %v3739, 0
        %v3868 = vmax.bf16 %v3740, 0
        %v3869 = vmax.bf16 %v3741, 0
        %v3870 = vmax.bf16 %v3742, 0
        %v3871 = vmax.bf16 %v3743, 0
        %v3872 = vmax.bf16 %v3744, 0
        %v3873 = vmax.bf16 %v3745, 0
        %v3874 = vmax.bf16 %v3746, 0
        %v3875 = vld [vmem:[#allocation5] sm:$0xff]
        %v3876 = vld [vmem:[#allocation5 + $0x8] sm:$0xff]
        %v3877 = vld [vmem:[#allocation5 + $0x10] sm:$0xff]
        %v3878 = vld [vmem:[#allocation5 + $0x18] sm:$0xff]
        %v3879 = vld [vmem:[#allocation5 + $0x20] sm:$0xff]
        %v3880 = vld [vmem:[#allocation5 + $0x28] sm:$0xff]
        %v3881 = vld [vmem:[#allocation5 + $0x30] sm:$0xff]
        %v3882 = vld [vmem:[#allocation5 + $0x38] sm:$0xff]
        %v3883 = vld [vmem:[#allocation5 + $0x40] sm:$0xff]
        %v3884 = vld [vmem:[#allocation5 + $0x48] sm:$0xff]
        %v3885 = vld [vmem:[#allocation5 + $0x50] sm:$0xff]
        %v3886 = vld [vmem:[#allocation5 + $0x58] sm:$0xff]
        %v3887 = vld [vmem:[#allocation5 + $0x60] sm:$0xff]
        %v3888 = vld [vmem:[#allocation5 + $0x68] sm:$0xff]
        %v3889 = vld [vmem:[#allocation5 + $0x70] sm:$0xff]
        %v3890 = vld [vmem:[#allocation5 + $0x78] sm:$0xff]
        %v3891 = vld [vmem:[#allocation5 + $0x80] sm:$0xff]
        %v3892 = vld [vmem:[#allocation5 + $0x88] sm:$0xff]
        %v3893 = vld [vmem:[#allocation5 + $0x90] sm:$0xff]
        %v3894 = vld [vmem:[#allocation5 + $0x98] sm:$0xff]
        %v3895 = vld [vmem:[#allocation5 + $0xa0] sm:$0xff]
        %v3896 = vld [vmem:[#allocation5 + $0xa8] sm:$0xff]
        %v3897 = vld [vmem:[#allocation5 + $0xb0] sm:$0xff]
        %v3898 = vld [vmem:[#allocation5 + $0xb8] sm:$0xff]
        %v3899 = vld [vmem:[#allocation5 + $0xc0] sm:$0xff]
        %v3900 = vld [vmem:[#allocation5 + $0xc8] sm:$0xff]
        %v3901 = vld [vmem:[#allocation5 + $0xd0] sm:$0xff]
        %v3902 = vld [vmem:[#allocation5 + $0xd8] sm:$0xff]
        %v3903 = vld [vmem:[#allocation5 + $0xe0] sm:$0xff]
        %v3904 = vld [vmem:[#allocation5 + $0xe8] sm:$0xff]
        %v3905 = vld [vmem:[#allocation5 + $0xf0] sm:$0xff]
        %v3906 = vld [vmem:[#allocation5 + $0xf8] sm:$0xff]
        %v3907 = vld [vmem:[#allocation5 + $0x100] sm:$0xff]
        %v3908 = vld [vmem:[#allocation5 + $0x108] sm:$0xff]
        %v3909 = vld [vmem:[#allocation5 + $0x110] sm:$0xff]
        %v3910 = vld [vmem:[#allocation5 + $0x118] sm:$0xff]
        %v3911 = vld [vmem:[#allocation5 + $0x120] sm:$0xff]
        %v3912 = vld [vmem:[#allocation5 + $0x128] sm:$0xff]
        %v3913 = vld [vmem:[#allocation5 + $0x130] sm:$0xff]
        %v3914 = vld [vmem:[#allocation5 + $0x138] sm:$0xff]
        %v3915 = vld [vmem:[#allocation5 + $0x140] sm:$0xff]
        %v3916 = vld [vmem:[#allocation5 + $0x148] sm:$0xff]
        %v3917 = vld [vmem:[#allocation5 + $0x150] sm:$0xff]
        %v3918 = vld [vmem:[#allocation5 + $0x158] sm:$0xff]
        %v3919 = vld [vmem:[#allocation5 + $0x160] sm:$0xff]
        %v3920 = vld [vmem:[#allocation5 + $0x168] sm:$0xff]
        %v3921 = vld [vmem:[#allocation5 + $0x170] sm:$0xff]
        %v3922 = vld [vmem:[#allocation5 + $0x178] sm:$0xff]
        %v3923 = vld [vmem:[#allocation5 + $0x180] sm:$0xff]
        %v3924 = vld [vmem:[#allocation5 + $0x188] sm:$0xff]
        %v3925 = vld [vmem:[#allocation5 + $0x190] sm:$0xff]
        %v3926 = vld [vmem:[#allocation5 + $0x198] sm:$0xff]
        %v3927 = vld [vmem:[#allocation5 + $0x1a0] sm:$0xff]
        %v3928 = vld [vmem:[#allocation5 + $0x1a8] sm:$0xff]
        %v3929 = vld [vmem:[#allocation5 + $0x1b0] sm:$0xff]
        %v3930 = vld [vmem:[#allocation5 + $0x1b8] sm:$0xff]
        %v3931 = vld [vmem:[#allocation5 + $0x1c0] sm:$0xff]
        %v3932 = vld [vmem:[#allocation5 + $0x1c8] sm:$0xff]
        %v3933 = vld [vmem:[#allocation5 + $0x1d0] sm:$0xff]
        %v3934 = vld [vmem:[#allocation5 + $0x1d8] sm:$0xff]
        %v3935 = vld [vmem:[#allocation5 + $0x1e0] sm:$0xff]
        %v3936 = vld [vmem:[#allocation5 + $0x1e8] sm:$0xff]
        %v3937 = vld [vmem:[#allocation5 + $0x1f0] sm:$0xff]
        %v3938 = vld [vmem:[#allocation5 + $0x1f8] sm:$0xff]
        %v3939 = vld [vmem:[%s10] sm:$0x3]
        %v3941 = vlaneseq
        %v3942 = vshrl.u32 %v3941, 7
        %v3943 = vsub.s32 0, %v3942
        %v3944 = vrot.slane %v3939, %v3943
        %v3945 = vlaneseq
        %v3946 = vshrl.u32 %v3945, 7
        %v3947 = vsub.s32 1, %v3946
        %v3948 = vrot.slane %v3939, %v3947
        %v4015 = vunpack.c.l.b16 %v3875
        %v4016 = vunpack.c.h.b16 %v3875
        %v4017 = vunpack.c.l.b16 %v3876
        %v4018 = vunpack.c.h.b16 %v3876
        %v4019 = vunpack.c.l.b16 %v3877
        %v4020 = vunpack.c.h.b16 %v3877
        %v4021 = vunpack.c.l.b16 %v3878
        %v4022 = vunpack.c.h.b16 %v3878
        %v4023 = vunpack.c.l.b16 %v3879
        %v4024 = vunpack.c.h.b16 %v3879
        %v4025 = vunpack.c.l.b16 %v3880
        %v4026 = vunpack.c.h.b16 %v3880
        %v4027 = vunpack.c.l.b16 %v3881
        %v4028 = vunpack.c.h.b16 %v3881
        %v4029 = vunpack.c.l.b16 %v3882
        %v4030 = vunpack.c.h.b16 %v3882
        %v4031 = vunpack.c.l.b16 %v3883
        %v4032 = vunpack.c.h.b16 %v3883
        %v4033 = vunpack.c.l.b16 %v3884
        %v4034 = vunpack.c.h.b16 %v3884
        %v4035 = vunpack.c.l.b16 %v3885
        %v4036 = vunpack.c.h.b16 %v3885
        %v4037 = vunpack.c.l.b16 %v3886
        %v4038 = vunpack.c.h.b16 %v3886
        %v4039 = vunpack.c.l.b16 %v3887
        %v4040 = vunpack.c.h.b16 %v3887
        %v4041 = vunpack.c.l.b16 %v3888
        %v4042 = vunpack.c.h.b16 %v3888
        %v4043 = vunpack.c.l.b16 %v3889
        %v4044 = vunpack.c.h.b16 %v3889
        %v4045 = vunpack.c.l.b16 %v3890
        %v4046 = vunpack.c.h.b16 %v3890
        %v4047 = vunpack.c.l.b16 %v3891
        %v4048 = vunpack.c.h.b16 %v3891
        %v4049 = vunpack.c.l.b16 %v3892
        %v4050 = vunpack.c.h.b16 %v3892
        %v4051 = vunpack.c.l.b16 %v3893
        %v4052 = vunpack.c.h.b16 %v3893
        %v4053 = vunpack.c.l.b16 %v3894
        %v4054 = vunpack.c.h.b16 %v3894
        %v4055 = vunpack.c.l.b16 %v3895
        %v4056 = vunpack.c.h.b16 %v3895
        %v4057 = vunpack.c.l.b16 %v3896
        %v4058 = vunpack.c.h.b16 %v3896
        %v4059 = vunpack.c.l.b16 %v3897
        %v4060 = vunpack.c.h.b16 %v3897
        %v4061 = vunpack.c.l.b16 %v3898
        %v4062 = vunpack.c.h.b16 %v3898
        %v4063 = vunpack.c.l.b16 %v3899
        %v4064 = vunpack.c.h.b16 %v3899
        %v4065 = vunpack.c.l.b16 %v3900
        %v4066 = vunpack.c.h.b16 %v3900
        %v4067 = vunpack.c.l.b16 %v3901
        %v4068 = vunpack.c.h.b16 %v3901
        %v4069 = vunpack.c.l.b16 %v3902
        %v4070 = vunpack.c.h.b16 %v3902
        %v4071 = vunpack.c.l.b16 %v3903
        %v4072 = vunpack.c.h.b16 %v3903
        %v4073 = vunpack.c.l.b16 %v3904
        %v4074 = vunpack.c.h.b16 %v3904
        %v4075 = vunpack.c.l.b16 %v3905
        %v4076 = vunpack.c.h.b16 %v3905
        %v4077 = vunpack.c.l.b16 %v3906
        %v4078 = vunpack.c.h.b16 %v3906
        %v4079 = vunpack.c.l.b16 %v3907
        %v4080 = vunpack.c.h.b16 %v3907
        %v4081 = vunpack.c.l.b16 %v3908
        %v4082 = vunpack.c.h.b16 %v3908
        %v4083 = vunpack.c.l.b16 %v3909
        %v4084 = vunpack.c.h.b16 %v3909
        %v4085 = vunpack.c.l.b16 %v3910
        %v4086 = vunpack.c.h.b16 %v3910
        %v4087 = vunpack.c.l.b16 %v3911
        %v4088 = vunpack.c.h.b16 %v3911
        %v4089 = vunpack.c.l.b16 %v3912
        %v4090 = vunpack.c.h.b16 %v3912
        %v4091 = vunpack.c.l.b16 %v3913
        %v4092 = vunpack.c.h.b16 %v3913
        %v4093 = vunpack.c.l.b16 %v3914
        %v4094 = vunpack.c.h.b16 %v3914
        %v4095 = vunpack.c.l.b16 %v3915
        %v4096 = vunpack.c.h.b16 %v3915
        %v4097 = vunpack.c.l.b16 %v3916
        %v4098 = vunpack.c.h.b16 %v3916
        %v4099 = vunpack.c.l.b16 %v3917
        %v4100 = vunpack.c.h.b16 %v3917
        %v4101 = vunpack.c.l.b16 %v3918
        %v4102 = vunpack.c.h.b16 %v3918
        %v4103 = vunpack.c.l.b16 %v3919
        %v4104 = vunpack.c.h.b16 %v3919
        %v4105 = vunpack.c.l.b16 %v3920
        %v4106 = vunpack.c.h.b16 %v3920
        %v4107 = vunpack.c.l.b16 %v3921
        %v4108 = vunpack.c.h.b16 %v3921
        %v4109 = vunpack.c.l.b16 %v3922
        %v4110 = vunpack.c.h.b16 %v3922
        %v4111 = vunpack.c.l.b16 %v3923
        %v4112 = vunpack.c.h.b16 %v3923
        %v4113 = vunpack.c.l.b16 %v3924
        %v4114 = vunpack.c.h.b16 %v3924
        %v4115 = vunpack.c.l.b16 %v3925
        %v4116 = vunpack.c.h.b16 %v3925
        %v4117 = vunpack.c.l.b16 %v3926
        %v4118 = vunpack.c.h.b16 %v3926
        %v4119 = vunpack.c.l.b16 %v3927
        %v4120 = vunpack.c.h.b16 %v3927
        %v4121 = vunpack.c.l.b16 %v3928
        %v4122 = vunpack.c.h.b16 %v3928
        %v4123 = vunpack.c.l.b16 %v3929
        %v4124 = vunpack.c.h.b16 %v3929
        %v4125 = vunpack.c.l.b16 %v3930
        %v4126 = vunpack.c.h.b16 %v3930
        %v4127 = vunpack.c.l.b16 %v3931
        %v4128 = vunpack.c.h.b16 %v3931
        %v4129 = vunpack.c.l.b16 %v3932
        %v4130 = vunpack.c.h.b16 %v3932
        %v4131 = vunpack.c.l.b16 %v3933
        %v4132 = vunpack.c.h.b16 %v3933
        %v4133 = vunpack.c.l.b16 %v3934
        %v4134 = vunpack.c.h.b16 %v3934
        %v4135 = vunpack.c.l.b16 %v3935
        %v4136 = vunpack.c.h.b16 %v3935
        %v4137 = vunpack.c.l.b16 %v3936
        %v4138 = vunpack.c.h.b16 %v3936
        %v4139 = vunpack.c.l.b16 %v3937
        %v4140 = vunpack.c.h.b16 %v3937
        %v4141 = vunpack.c.l.b16 %v3938
        %v4142 = vunpack.c.h.b16 %v3938
        %v4143 = vpack.c.b16 %v4017, %v4015
        %v4144 = vpack.c.b16 %v4018, %v4016
        %v4145 = vpack.c.b16 %v4021, %v4019
        %v4146 = vpack.c.b16 %v4022, %v4020
        %v4147 = vpack.c.b16 %v4025, %v4023
        %v4148 = vpack.c.b16 %v4026, %v4024
        %v4149 = vpack.c.b16 %v4029, %v4027
        %v4150 = vpack.c.b16 %v4030, %v4028
        %v4151 = vpack.c.b16 %v4033, %v4031
        %v4152 = vpack.c.b16 %v4034, %v4032
        %v4153 = vpack.c.b16 %v4037, %v4035
        %v4154 = vpack.c.b16 %v4038, %v4036
        %v4155 = vpack.c.b16 %v4041, %v4039
        %v4156 = vpack.c.b16 %v4042, %v4040
        %v4157 = vpack.c.b16 %v4045, %v4043
        %v4158 = vpack.c.b16 %v4046, %v4044
        %v4159 = vpack.c.b16 %v4049, %v4047
        %v4160 = vpack.c.b16 %v4050, %v4048
        %v4161 = vpack.c.b16 %v4053, %v4051
        %v4162 = vpack.c.b16 %v4054, %v4052
        %v4163 = vpack.c.b16 %v4057, %v4055
        %v4164 = vpack.c.b16 %v4058, %v4056
        %v4165 = vpack.c.b16 %v4061, %v4059
        %v4166 = vpack.c.b16 %v4062, %v4060
        %v4167 = vpack.c.b16 %v4065, %v4063
        %v4168 = vpack.c.b16 %v4066, %v4064
        %v4169 = vpack.c.b16 %v4069, %v4067
        %v4170 = vpack.c.b16 %v4070, %v4068
        %v4171 = vpack.c.b16 %v4073, %v4071
        %v4172 = vpack.c.b16 %v4074, %v4072
        %v4173 = vpack.c.b16 %v4077, %v4075
        %v4174 = vpack.c.b16 %v4078, %v4076
        %v4175 = vpack.c.b16 %v4081, %v4079
        %v4176 = vpack.c.b16 %v4082, %v4080
        %v4177 = vpack.c.b16 %v4085, %v4083
        %v4178 = vpack.c.b16 %v4086, %v4084
        %v4179 = vpack.c.b16 %v4089, %v4087
        %v4180 = vpack.c.b16 %v4090, %v4088
        %v4181 = vpack.c.b16 %v4093, %v4091
        %v4182 = vpack.c.b16 %v4094, %v4092
        %v4183 = vpack.c.b16 %v4097, %v4095
        %v4184 = vpack.c.b16 %v4098, %v4096
        %v4185 = vpack.c.b16 %v4101, %v4099
        %v4186 = vpack.c.b16 %v4102, %v4100
        %v4187 = vpack.c.b16 %v4105, %v4103
        %v4188 = vpack.c.b16 %v4106, %v4104
        %v4189 = vpack.c.b16 %v4109, %v4107
        %v4190 = vpack.c.b16 %v4110, %v4108
        %v4191 = vpack.c.b16 %v4113, %v4111
        %v4192 = vpack.c.b16 %v4114, %v4112
        %v4193 = vpack.c.b16 %v4117, %v4115
        %v4194 = vpack.c.b16 %v4118, %v4116
        %v4195 = vpack.c.b16 %v4121, %v4119
        %v4196 = vpack.c.b16 %v4122, %v4120
        %v4197 = vpack.c.b16 %v4125, %v4123
        %v4198 = vpack.c.b16 %v4126, %v4124
        %v4199 = vpack.c.b16 %v4129, %v4127
        %v4200 = vpack.c.b16 %v4130, %v4128
        %v4201 = vpack.c.b16 %v4133, %v4131
        %v4202 = vpack.c.b16 %v4134, %v4132
        %v4203 = vpack.c.b16 %v4137, %v4135
        %v4204 = vpack.c.b16 %v4138, %v4136
        %v4205 = vpack.c.b16 %v4141, %v4139
        %v4206 = vpack.c.b16 %v4142, %v4140
        %4271 = vmatprep.subr.bf16.mxu0 %v4158
        %4272 = vmatpush1.bf16.msra.mxu0 %v4157
        %4273 = vmatprep.subr.bf16.mxu0 %v4156
        %4274 = vmatpush1.bf16.msra.mxu0 %v4155
        %4275 = vmatprep.subr.bf16.mxu0 %v4154
        %4276 = vmatpush1.bf16.msra.mxu0 %v4153
        %4277 = vmatprep.subr.bf16.mxu0 %v4152
        %4278 = vmatpush1.bf16.msra.mxu0 %v4151
        %4279 = vmatprep.subr.bf16.mxu0 %v4150
        %4280 = vmatpush1.bf16.msra.mxu0 %v4149
        %4281 = vmatprep.subr.bf16.mxu0 %v4148
        %4282 = vmatpush1.bf16.msra.mxu0 %v4147
        %4283 = vmatprep.subr.bf16.mxu0 %v4146
        %4284 = vmatpush1.bf16.msra.mxu0 %v4145
        %4285 = vmatprep.subr.bf16.mxu0 %v4144
        %4286 = vmatpush1.bf16.msra.mxu0 %v4143
        %4287 = vmatprep.subr.bf16.mxu0 %v4174
        %4288 = vmatpush2.bf16.msra.mxu0 %v4173
        %4289 = vmatprep.subr.bf16.mxu0 %v4172
        %4290 = vmatpush2.bf16.msra.mxu0 %v4171
        %4291 = vmatprep.subr.bf16.mxu0 %v4170
        %4292 = vmatpush2.bf16.msra.mxu0 %v4169
        %4293 = vmatprep.subr.bf16.mxu0 %v4168
        %4294 = vmatpush2.bf16.msra.mxu0 %v4167
        %4295 = vmatprep.subr.bf16.mxu0 %v4166
        %4296 = vmatpush2.bf16.msra.mxu0 %v4165
        %4297 = vmatprep.subr.bf16.mxu0 %v4164
        %4298 = vmatpush2.bf16.msra.mxu0 %v4163
        %4299 = vmatprep.subr.bf16.mxu0 %v4162
        %4300 = vmatpush2.bf16.msra.mxu0 %v4161
        %4301 = vmatprep.subr.bf16.mxu0 %v4160
        %4302 = vmatpush2.bf16.msra.mxu0 %v4159
        %4303 = vmatprep.mubr.bf16.mxu0 %v3748
        %4304 = vmatmul.mubr.bf16.gmra.mxu0 %v3747
        %v4305 = vpop.f32.mrf.mxu0
        %v4306 = vadd.f32 %v3944, %v4305
        %v4307 = vpop.f32.mrf.mxu0
        %v4308 = vadd.f32 %v3948, %v4307
        %v4309 = vpop.f32.mrf.mxu0
        %v4310 = vadd.f32 %v3944, %v4309
        %v4311 = vpop.f32.mrf.mxu0
        %v4312 = vadd.f32 %v3948, %v4311
        %4313 = vmatprep.mubr.bf16.mxu0 %v3752
        %4314 = vmatmul.mubr.bf16.gmra.mxu0 %v3751
        %v4315 = vpop.f32.mrf.mxu0
        %v4316 = vadd.f32 %v3944, %v4315
        %v4317 = vpop.f32.mrf.mxu0
        %v4318 = vadd.f32 %v3948, %v4317
        %v4319 = vpop.f32.mrf.mxu0
        %v4320 = vadd.f32 %v3944, %v4319
        %v4321 = vpop.f32.mrf.mxu0
        %v4322 = vadd.f32 %v3948, %v4321
        %4323 = vmatprep.mubr.bf16.mxu0 %v3756
        %4324 = vmatmul.mubr.bf16.gmra.mxu0 %v3755
        %v4325 = vpop.f32.mrf.mxu0
        %v4326 = vadd.f32 %v3944, %v4325
        %v4327 = vpop.f32.mrf.mxu0
        %v4328 = vadd.f32 %v3948, %v4327
        %v4329 = vpop.f32.mrf.mxu0
        %v4330 = vadd.f32 %v3944, %v4329
        %v4331 = vpop.f32.mrf.mxu0
        %v4332 = vadd.f32 %v3948, %v4331
        %4333 = vmatprep.mubr.bf16.mxu0 %v3760
        %4334 = vmatmul.mubr.bf16.gmra.mxu0 %v3759
        %v4335 = vpop.f32.mrf.mxu0
        %v4336 = vadd.f32 %v3944, %v4335
        %v4337 = vpop.f32.mrf.mxu0
        %v4338 = vadd.f32 %v3948, %v4337
        %v4339 = vpop.f32.mrf.mxu0
        %v4340 = vadd.f32 %v3944, %v4339
        %v4341 = vpop.f32.mrf.mxu0
        %v4342 = vadd.f32 %v3948, %v4341
        %4343 = vmatprep.mubr.bf16.mxu0 %v3764
        %4344 = vmatmul.mubr.bf16.gmra.mxu0 %v3763
        %v4345 = vpop.f32.mrf.mxu0
        %v4346 = vadd.f32 %v3944, %v4345
        %v4347 = vpop.f32.mrf.mxu0
        %v4348 = vadd.f32 %v3948, %v4347
        %v4349 = vpop.f32.mrf.mxu0
        %v4350 = vadd.f32 %v3944, %v4349
        %v4351 = vpop.f32.mrf.mxu0
        %v4352 = vadd.f32 %v3948, %v4351
        %4353 = vmatprep.mubr.bf16.mxu0 %v3768
        %4354 = vmatmul.mubr.bf16.gmra.mxu0 %v3767
        %v4355 = vpop.f32.mrf.mxu0
        %v4356 = vadd.f32 %v3944, %v4355
        %v4357 = vpop.f32.mrf.mxu0
        %v4358 = vadd.f32 %v3948, %v4357
        %v4359 = vpop.f32.mrf.mxu0
        %v4360 = vadd.f32 %v3944, %v4359
        %v4361 = vpop.f32.mrf.mxu0
        %v4362 = vadd.f32 %v3948, %v4361
        %4363 = vmatprep.mubr.bf16.mxu0 %v3772
        %4364 = vmatmul.mubr.bf16.gmra.mxu0 %v3771
        %v4365 = vpop.f32.mrf.mxu0
        %v4366 = vadd.f32 %v3944, %v4365
        %v4367 = vpop.f32.mrf.mxu0
        %v4368 = vadd.f32 %v3948, %v4367
        %v4369 = vpop.f32.mrf.mxu0
        %v4370 = vadd.f32 %v3944, %v4369
        %v4371 = vpop.f32.mrf.mxu0
        %v4372 = vadd.f32 %v3948, %v4371
        %4373 = vmatprep.mubr.bf16.mxu0 %v3776
        %4374 = vmatmul.mubr.bf16.gmra.mxu0 %v3775
        %v4375 = vpop.f32.mrf.mxu0
        %v4376 = vadd.f32 %v3944, %v4375
        %v4377 = vpop.f32.mrf.mxu0
        %v4378 = vadd.f32 %v3948, %v4377
        %v4379 = vpop.f32.mrf.mxu0
        %v4380 = vadd.f32 %v3944, %v4379
        %v4381 = vpop.f32.mrf.mxu0
        %v4382 = vadd.f32 %v3948, %v4381
        %4383 = vmatprep.mubr.bf16.mxu0 %v3780
        %4384 = vmatmul.mubr.bf16.gmra.mxu0 %v3779
        %v4385 = vpop.f32.mrf.mxu0
        %v4386 = vadd.f32 %v3944, %v4385
        %v4387 = vpop.f32.mrf.mxu0
        %v4388 = vadd.f32 %v3948, %v4387
        %v4389 = vpop.f32.mrf.mxu0
        %v4390 = vadd.f32 %v3944, %v4389
        %v4391 = vpop.f32.mrf.mxu0
        %v4392 = vadd.f32 %v3948, %v4391
        %4393 = vmatprep.mubr.bf16.mxu0 %v3784
        %4394 = vmatmul.mubr.bf16.gmra.mxu0 %v3783
        %v4395 = vpop.f32.mrf.mxu0
        %v4396 = vadd.f32 %v3944, %v4395
        %v4397 = vpop.f32.mrf.mxu0
        %v4398 = vadd.f32 %v3948, %v4397
        %v4399 = vpop.f32.mrf.mxu0
        %v4400 = vadd.f32 %v3944, %v4399
        %v4401 = vpop.f32.mrf.mxu0
        %v4402 = vadd.f32 %v3948, %v4401
        %4403 = vmatprep.mubr.bf16.mxu0 %v3788
        %4404 = vmatmul.mubr.bf16.gmra.mxu0 %v3787
        %v4405 = vpop.f32.mrf.mxu0
        %v4406 = vadd.f32 %v3944, %v4405
        %v4407 = vpop.f32.mrf.mxu0
        %v4408 = vadd.f32 %v3948, %v4407
        %v4409 = vpop.f32.mrf.mxu0
        %v4410 = vadd.f32 %v3944, %v4409
        %v4411 = vpop.f32.mrf.mxu0
        %v4412 = vadd.f32 %v3948, %v4411
        %4413 = vmatprep.mubr.bf16.mxu0 %v3792
        %4414 = vmatmul.mubr.bf16.gmra.mxu0 %v3791
        %v4415 = vpop.f32.mrf.mxu0
        %v4416 = vadd.f32 %v3944, %v4415
        %v4417 = vpop.f32.mrf.mxu0
        %v4418 = vadd.f32 %v3948, %v4417
        %v4419 = vpop.f32.mrf.mxu0
        %v4420 = vadd.f32 %v3944, %v4419
        %v4421 = vpop.f32.mrf.mxu0
        %v4422 = vadd.f32 %v3948, %v4421
        %4423 = vmatprep.mubr.bf16.mxu0 %v3796
        %4424 = vmatmul.mubr.bf16.gmra.mxu0 %v3795
        %v4425 = vpop.f32.mrf.mxu0
        %v4426 = vadd.f32 %v3944, %v4425
        %v4427 = vpop.f32.mrf.mxu0
        %v4428 = vadd.f32 %v3948, %v4427
        %v4429 = vpop.f32.mrf.mxu0
        %v4430 = vadd.f32 %v3944, %v4429
        %v4431 = vpop.f32.mrf.mxu0
        %v4432 = vadd.f32 %v3948, %v4431
        %4433 = vmatprep.mubr.bf16.mxu0 %v3800
        %4434 = vmatmul.mubr.bf16.gmra.mxu0 %v3799
        %v4435 = vpop.f32.mrf.mxu0
        %v4436 = vadd.f32 %v3944, %v4435
        %v4437 = vpop.f32.mrf.mxu0
        %v4438 = vadd.f32 %v3948, %v4437
        %v4439 = vpop.f32.mrf.mxu0
        %v4440 = vadd.f32 %v3944, %v4439
        %v4441 = vpop.f32.mrf.mxu0
        %v4442 = vadd.f32 %v3948, %v4441
        %4443 = vmatprep.mubr.bf16.mxu0 %v3804
        %4444 = vmatmul.mubr.bf16.gmra.mxu0 %v3803
        %v4445 = vpop.f32.mrf.mxu0
        %v4446 = vadd.f32 %v3944, %v4445
        %v4447 = vpop.f32.mrf.mxu0
        %v4448 = vadd.f32 %v3948, %v4447
        %v4449 = vpop.f32.mrf.mxu0
        %v4450 = vadd.f32 %v3944, %v4449
        %v4451 = vpop.f32.mrf.mxu0
        %v4452 = vadd.f32 %v3948, %v4451
        %4453 = vmatprep.mubr.bf16.mxu0 %v3808
        %4454 = vmatmul.mubr.bf16.gmra.mxu0 %v3807
        %v4455 = vpop.f32.mrf.mxu0
        %v4456 = vadd.f32 %v3944, %v4455
        %v4457 = vpop.f32.mrf.mxu0
        %v4458 = vadd.f32 %v3948, %v4457
        %v4459 = vpop.f32.mrf.mxu0
        %v4460 = vadd.f32 %v3944, %v4459
        %v4461 = vpop.f32.mrf.mxu0
        %v4462 = vadd.f32 %v3948, %v4461
        %4463 = vmatprep.mubr.bf16.mxu0 %v3812
        %4464 = vmatmul.mubr.bf16.gmra.mxu0 %v3811
        %v4465 = vpop.f32.mrf.mxu0
        %v4466 = vadd.f32 %v3944, %v4465
        %v4467 = vpop.f32.mrf.mxu0
        %v4468 = vadd.f32 %v3948, %v4467
        %v4469 = vpop.f32.mrf.mxu0
        %v4470 = vadd.f32 %v3944, %v4469
        %v4471 = vpop.f32.mrf.mxu0
        %v4472 = vadd.f32 %v3948, %v4471
        %4473 = vmatprep.mubr.bf16.mxu0 %v3816
        %4474 = vmatmul.mubr.bf16.gmra.mxu0 %v3815
        %v4475 = vpop.f32.mrf.mxu0
        %v4476 = vadd.f32 %v3944, %v4475
        %v4477 = vpop.f32.mrf.mxu0
        %v4478 = vadd.f32 %v3948, %v4477
        %v4479 = vpop.f32.mrf.mxu0
        %v4480 = vadd.f32 %v3944, %v4479
        %v4481 = vpop.f32.mrf.mxu0
        %v4482 = vadd.f32 %v3948, %v4481
        %4483 = vmatprep.mubr.bf16.mxu0 %v3820
        %4484 = vmatmul.mubr.bf16.gmra.mxu0 %v3819
        %v4485 = vpop.f32.mrf.mxu0
        %v4486 = vadd.f32 %v3944, %v4485
        %v4487 = vpop.f32.mrf.mxu0
        %v4488 = vadd.f32 %v3948, %v4487
        %v4489 = vpop.f32.mrf.mxu0
        %v4490 = vadd.f32 %v3944, %v4489
        %v4491 = vpop.f32.mrf.mxu0
        %v4492 = vadd.f32 %v3948, %v4491
        %4493 = vmatprep.mubr.bf16.mxu0 %v3824
        %4494 = vmatmul.mubr.bf16.gmra.mxu0 %v3823
        %v4495 = vpop.f32.mrf.mxu0
        %v4496 = vadd.f32 %v3944, %v4495
        %v4497 = vpop.f32.mrf.mxu0
        %v4498 = vadd.f32 %v3948, %v4497
        %v4499 = vpop.f32.mrf.mxu0
        %v4500 = vadd.f32 %v3944, %v4499
        %v4501 = vpop.f32.mrf.mxu0
        %v4502 = vadd.f32 %v3948, %v4501
        %4503 = vmatprep.mubr.bf16.mxu0 %v3828
        %4504 = vmatmul.mubr.bf16.gmra.mxu0 %v3827
        %v4505 = vpop.f32.mrf.mxu0
        %v4506 = vadd.f32 %v3944, %v4505
        %v4507 = vpop.f32.mrf.mxu0
        %v4508 = vadd.f32 %v3948, %v4507
        %v4509 = vpop.f32.mrf.mxu0
        %v4510 = vadd.f32 %v3944, %v4509
        %v4511 = vpop.f32.mrf.mxu0
        %v4512 = vadd.f32 %v3948, %v4511
        %4513 = vmatprep.mubr.bf16.mxu0 %v3832
        %4514 = vmatmul.mubr.bf16.gmra.mxu0 %v3831
        %v4515 = vpop.f32.mrf.mxu0
        %v4516 = vadd.f32 %v3944, %v4515
        %v4517 = vpop.f32.mrf.mxu0
        %v4518 = vadd.f32 %v3948, %v4517
        %v4519 = vpop.f32.mrf.mxu0
        %v4520 = vadd.f32 %v3944, %v4519
        %v4521 = vpop.f32.mrf.mxu0
        %v4522 = vadd.f32 %v3948, %v4521
        %4523 = vmatprep.mubr.bf16.mxu0 %v3836
        %4524 = vmatmul.mubr.bf16.gmra.mxu0 %v3835
        %v4525 = vpop.f32.mrf.mxu0
        %v4526 = vadd.f32 %v3944, %v4525
        %v4527 = vpop.f32.mrf.mxu0
        %v4528 = vadd.f32 %v3948, %v4527
        %v4529 = vpop.f32.mrf.mxu0
        %v4530 = vadd.f32 %v3944, %v4529
        %v4531 = vpop.f32.mrf.mxu0
        %v4532 = vadd.f32 %v3948, %v4531
        %4533 = vmatprep.mubr.bf16.mxu0 %v3840
        %4534 = vmatmul.mubr.bf16.gmra.mxu0 %v3839
        %v4535 = vpop.f32.mrf.mxu0
        %v4536 = vadd.f32 %v3944, %v4535
        %v4537 = vpop.f32.mrf.mxu0
        %v4538 = vadd.f32 %v3948, %v4537
        %v4539 = vpop.f32.mrf.mxu0
        %v4540 = vadd.f32 %v3944, %v4539
        %v4541 = vpop.f32.mrf.mxu0
        %v4542 = vadd.f32 %v3948, %v4541
        %4543 = vmatprep.mubr.bf16.mxu0 %v3844
        %4544 = vmatmul.mubr.bf16.gmra.mxu0 %v3843
        %v4545 = vpop.f32.mrf.mxu0
        %v4546 = vadd.f32 %v3944, %v4545
        %v4547 = vpop.f32.mrf.mxu0
        %v4548 = vadd.f32 %v3948, %v4547
        %v4549 = vpop.f32.mrf.mxu0
        %v4550 = vadd.f32 %v3944, %v4549
        %v4551 = vpop.f32.mrf.mxu0
        %v4552 = vadd.f32 %v3948, %v4551
        %4553 = vmatprep.mubr.bf16.mxu0 %v3848
        %4554 = vmatmul.mubr.bf16.gmra.mxu0 %v3847
        %v4555 = vpop.f32.mrf.mxu0
        %v4556 = vadd.f32 %v3944, %v4555
        %v4557 = vpop.f32.mrf.mxu0
        %v4558 = vadd.f32 %v3948, %v4557
        %v4559 = vpop.f32.mrf.mxu0
        %v4560 = vadd.f32 %v3944, %v4559
        %v4561 = vpop.f32.mrf.mxu0
        %v4562 = vadd.f32 %v3948, %v4561
        %4563 = vmatprep.mubr.bf16.mxu0 %v3852
        %4564 = vmatmul.mubr.bf16.gmra.mxu0 %v3851
        %v4565 = vpop.f32.mrf.mxu0
        %v4566 = vadd.f32 %v3944, %v4565
        %v4567 = vpop.f32.mrf.mxu0
        %v4568 = vadd.f32 %v3948, %v4567
        %v4569 = vpop.f32.mrf.mxu0
        %v4570 = vadd.f32 %v3944, %v4569
        %v4571 = vpop.f32.mrf.mxu0
        %v4572 = vadd.f32 %v3948, %v4571
        %4573 = vmatprep.mubr.bf16.mxu0 %v3856
        %4574 = vmatmul.mubr.bf16.gmra.mxu0 %v3855
        %v4575 = vpop.f32.mrf.mxu0
        %v4576 = vadd.f32 %v3944, %v4575
        %v4577 = vpop.f32.mrf.mxu0
        %v4578 = vadd.f32 %v3948, %v4577
        %v4579 = vpop.f32.mrf.mxu0
        %v4580 = vadd.f32 %v3944, %v4579
        %v4581 = vpop.f32.mrf.mxu0
        %v4582 = vadd.f32 %v3948, %v4581
        %4583 = vmatprep.mubr.bf16.mxu0 %v3860
        %4584 = vmatmul.mubr.bf16.gmra.mxu0 %v3859
        %v4585 = vpop.f32.mrf.mxu0
        %v4586 = vadd.f32 %v3944, %v4585
        %v4587 = vpop.f32.mrf.mxu0
        %v4588 = vadd.f32 %v3948, %v4587
        %v4589 = vpop.f32.mrf.mxu0
        %v4590 = vadd.f32 %v3944, %v4589
        %v4591 = vpop.f32.mrf.mxu0
        %v4592 = vadd.f32 %v3948, %v4591
        %4593 = vmatprep.mubr.bf16.mxu0 %v3864
        %4594 = vmatmul.mubr.bf16.gmra.mxu0 %v3863
        %v4595 = vpop.f32.mrf.mxu0
        %v4596 = vadd.f32 %v3944, %v4595
        %v4597 = vpop.f32.mrf.mxu0
        %v4598 = vadd.f32 %v3948, %v4597
        %v4599 = vpop.f32.mrf.mxu0
        %v4600 = vadd.f32 %v3944, %v4599
        %v4601 = vpop.f32.mrf.mxu0
        %v4602 = vadd.f32 %v3948, %v4601
        %4603 = vmatprep.mubr.bf16.mxu0 %v3868
        %4604 = vmatmul.mubr.bf16.gmra.mxu0 %v3867
        %v4605 = vpop.f32.mrf.mxu0
        %v4606 = vadd.f32 %v3944, %v4605
        %v4607 = vpop.f32.mrf.mxu0
        %v4608 = vadd.f32 %v3948, %v4607
        %v4609 = vpop.f32.mrf.mxu0
        %v4610 = vadd.f32 %v3944, %v4609
        %v4611 = vpop.f32.mrf.mxu0
        %v4612 = vadd.f32 %v3948, %v4611
        %4613 = vmatprep.mubr.bf16.mxu0 %v3872
        %4614 = vmatmul.mubr.bf16.gmra.mxu0 %v3871
        %v4615 = vpop.f32.mrf.mxu0
        %v4616 = vadd.f32 %v3944, %v4615
        %v4617 = vpop.f32.mrf.mxu0
        %v4618 = vadd.f32 %v3948, %v4617
        %v4619 = vpop.f32.mrf.mxu0
        %v4620 = vadd.f32 %v3944, %v4619
        %v4621 = vpop.f32.mrf.mxu0
        %v4622 = vadd.f32 %v3948, %v4621
        %4623 = vdwg.mxu0
        %4624 = vmatprep.subr.bf16.mxu0 %v4190
        %4625 = vmatpush1.bf16.msra.mxu0 %v4189
        %4626 = vmatprep.subr.bf16.mxu0 %v4188
        %4627 = vmatpush1.bf16.msra.mxu0 %v4187
        %4628 = vmatprep.subr.bf16.mxu0 %v4186
        %4629 = vmatpush1.bf16.msra.mxu0 %v4185
        %4630 = vmatprep.subr.bf16.mxu0 %v4184
        %4631 = vmatpush1.bf16.msra.mxu0 %v4183
        %4632 = vmatprep.subr.bf16.mxu0 %v4182
        %4633 = vmatpush1.bf16.msra.mxu0 %v4181
        %4634 = vmatprep.subr.bf16.mxu0 %v4180
        %4635 = vmatpush1.bf16.msra.mxu0 %v4179
        %4636 = vmatprep.subr.bf16.mxu0 %v4178
        %4637 = vmatpush1.bf16.msra.mxu0 %v4177
        %4638 = vmatprep.subr.bf16.mxu0 %v4176
        %4639 = vmatpush1.bf16.msra.mxu0 %v4175
        %4640 = vmatprep.subr.bf16.mxu0 %v4206
        %4641 = vmatpush2.bf16.msra.mxu0 %v4205
        %4642 = vmatprep.subr.bf16.mxu0 %v4204
        %4643 = vmatpush2.bf16.msra.mxu0 %v4203
        %4644 = vmatprep.subr.bf16.mxu0 %v4202
        %4645 = vmatpush2.bf16.msra.mxu0 %v4201
        %4646 = vmatprep.subr.bf16.mxu0 %v4200
        %4647 = vmatpush2.bf16.msra.mxu0 %v4199
        %4648 = vmatprep.subr.bf16.mxu0 %v4198
        %4649 = vmatpush2.bf16.msra.mxu0 %v4197
        %4650 = vmatprep.subr.bf16.mxu0 %v4196
        %4651 = vmatpush2.bf16.msra.mxu0 %v4195
        %4652 = vmatprep.subr.bf16.mxu0 %v4194
        %4653 = vmatpush2.bf16.msra.mxu0 %v4193
        %4654 = vmatprep.subr.bf16.mxu0 %v4192
        %4655 = vmatpush2.bf16.msra.mxu0 %v4191
        %4656 = vmatprep.mubr.bf16.mxu0 %v3750
        %4657 = vmatmul.mubr.bf16.gmra.mxu0 %v3749
        %v4658 = vpop.f32.mrf.mxu0
        %v4659 = vadd.f32 %v4306, %v4658
        %v4660 = vpop.f32.mrf.mxu0
        %v4661 = vadd.f32 %v4308, %v4660
        %v4662 = vpop.f32.mrf.mxu0
        %v4663 = vadd.f32 %v4310, %v4662
        %v4664 = vpop.f32.mrf.mxu0
        %v4665 = vadd.f32 %v4312, %v4664
        %4666 = vmatprep.mubr.bf16.mxu0 %v3754
        %4667 = vmatmul.mubr.bf16.gmra.mxu0 %v3753
        %v4668 = vpop.f32.mrf.mxu0
        %v4669 = vadd.f32 %v4316, %v4668
        %v4670 = vpop.f32.mrf.mxu0
        %v4671 = vadd.f32 %v4318, %v4670
        %v4672 = vpop.f32.mrf.mxu0
        %v4673 = vadd.f32 %v4320, %v4672
        %v4674 = vpop.f32.mrf.mxu0
        %v4675 = vadd.f32 %v4322, %v4674
        %4676 = vmatprep.mubr.bf16.mxu0 %v3758
        %4677 = vmatmul.mubr.bf16.gmra.mxu0 %v3757
        %v4678 = vpop.f32.mrf.mxu0
        %v4679 = vadd.f32 %v4326, %v4678
        %v4680 = vpop.f32.mrf.mxu0
        %v4681 = vadd.f32 %v4328, %v4680
        %v4682 = vpop.f32.mrf.mxu0
        %v4683 = vadd.f32 %v4330, %v4682
        %v4684 = vpop.f32.mrf.mxu0
        %v4685 = vadd.f32 %v4332, %v4684
        %4686 = vmatprep.mubr.bf16.mxu0 %v3762
        %4687 = vmatmul.mubr.bf16.gmra.mxu0 %v3761
        %v4688 = vpop.f32.mrf.mxu0
        %v4689 = vadd.f32 %v4336, %v4688
        %v4690 = vpop.f32.mrf.mxu0
        %v4691 = vadd.f32 %v4338, %v4690
        %v4692 = vpop.f32.mrf.mxu0
        %v4693 = vadd.f32 %v4340, %v4692
        %v4694 = vpop.f32.mrf.mxu0
        %v4695 = vadd.f32 %v4342, %v4694
        %4696 = vmatprep.mubr.bf16.mxu0 %v3766
        %4697 = vmatmul.mubr.bf16.gmra.mxu0 %v3765
        %v4698 = vpop.f32.mrf.mxu0
        %v4699 = vadd.f32 %v4346, %v4698
        %v4700 = vpop.f32.mrf.mxu0
        %v4701 = vadd.f32 %v4348, %v4700
        %v4702 = vpop.f32.mrf.mxu0
        %v4703 = vadd.f32 %v4350, %v4702
        %v4704 = vpop.f32.mrf.mxu0
        %v4705 = vadd.f32 %v4352, %v4704
        %4706 = vmatprep.mubr.bf16.mxu0 %v3770
        %4707 = vmatmul.mubr.bf16.gmra.mxu0 %v3769
        %v4708 = vpop.f32.mrf.mxu0
        %v4709 = vadd.f32 %v4356, %v4708
        %v4710 = vpop.f32.mrf.mxu0
        %v4711 = vadd.f32 %v4358, %v4710
        %v4712 = vpop.f32.mrf.mxu0
        %v4713 = vadd.f32 %v4360, %v4712
        %v4714 = vpop.f32.mrf.mxu0
        %v4715 = vadd.f32 %v4362, %v4714
        %4716 = vmatprep.mubr.bf16.mxu0 %v3774
        %4717 = vmatmul.mubr.bf16.gmra.mxu0 %v3773
        %v4718 = vpop.f32.mrf.mxu0
        %v4719 = vadd.f32 %v4366, %v4718
        %v4720 = vpop.f32.mrf.mxu0
        %v4721 = vadd.f32 %v4368, %v4720
        %v4722 = vpop.f32.mrf.mxu0
        %v4723 = vadd.f32 %v4370, %v4722
        %v4724 = vpop.f32.mrf.mxu0
        %v4725 = vadd.f32 %v4372, %v4724
        %4726 = vmatprep.mubr.bf16.mxu0 %v3778
        %4727 = vmatmul.mubr.bf16.gmra.mxu0 %v3777
        %v4728 = vpop.f32.mrf.mxu0
        %v4729 = vadd.f32 %v4376, %v4728
        %v4730 = vpop.f32.mrf.mxu0
        %v4731 = vadd.f32 %v4378, %v4730
        %v4732 = vpop.f32.mrf.mxu0
        %v4733 = vadd.f32 %v4380, %v4732
        %v4734 = vpop.f32.mrf.mxu0
        %v4735 = vadd.f32 %v4382, %v4734
        %4736 = vmatprep.mubr.bf16.mxu0 %v3782
        %4737 = vmatmul.mubr.bf16.gmra.mxu0 %v3781
        %v4738 = vpop.f32.mrf.mxu0
        %v4739 = vadd.f32 %v4386, %v4738
        %v4740 = vpop.f32.mrf.mxu0
        %v4741 = vadd.f32 %v4388, %v4740
        %v4742 = vpop.f32.mrf.mxu0
        %v4743 = vadd.f32 %v4390, %v4742
        %v4744 = vpop.f32.mrf.mxu0
        %v4745 = vadd.f32 %v4392, %v4744
        %4746 = vmatprep.mubr.bf16.mxu0 %v3786
        %4747 = vmatmul.mubr.bf16.gmra.mxu0 %v3785
        %v4748 = vpop.f32.mrf.mxu0
        %v4749 = vadd.f32 %v4396, %v4748
        %v4750 = vpop.f32.mrf.mxu0
        %v4751 = vadd.f32 %v4398, %v4750
        %v4752 = vpop.f32.mrf.mxu0
        %v4753 = vadd.f32 %v4400, %v4752
        %v4754 = vpop.f32.mrf.mxu0
        %v4755 = vadd.f32 %v4402, %v4754
        %4756 = vmatprep.mubr.bf16.mxu0 %v3790
        %4757 = vmatmul.mubr.bf16.gmra.mxu0 %v3789
        %v4758 = vpop.f32.mrf.mxu0
        %v4759 = vadd.f32 %v4406, %v4758
        %v4760 = vpop.f32.mrf.mxu0
        %v4761 = vadd.f32 %v4408, %v4760
        %v4762 = vpop.f32.mrf.mxu0
        %v4763 = vadd.f32 %v4410, %v4762
        %v4764 = vpop.f32.mrf.mxu0
        %v4765 = vadd.f32 %v4412, %v4764
        %4766 = vmatprep.mubr.bf16.mxu0 %v3794
        %4767 = vmatmul.mubr.bf16.gmra.mxu0 %v3793
        %v4768 = vpop.f32.mrf.mxu0
        %v4769 = vadd.f32 %v4416, %v4768
        %v4770 = vpop.f32.mrf.mxu0
        %v4771 = vadd.f32 %v4418, %v4770
        %v4772 = vpop.f32.mrf.mxu0
        %v4773 = vadd.f32 %v4420, %v4772
        %v4774 = vpop.f32.mrf.mxu0
        %v4775 = vadd.f32 %v4422, %v4774
        %4776 = vmatprep.mubr.bf16.mxu0 %v3798
        %4777 = vmatmul.mubr.bf16.gmra.mxu0 %v3797
        %v4778 = vpop.f32.mrf.mxu0
        %v4779 = vadd.f32 %v4426, %v4778
        %v4780 = vpop.f32.mrf.mxu0
        %v4781 = vadd.f32 %v4428, %v4780
        %v4782 = vpop.f32.mrf.mxu0
        %v4783 = vadd.f32 %v4430, %v4782
        %v4784 = vpop.f32.mrf.mxu0
        %v4785 = vadd.f32 %v4432, %v4784
        %4786 = vmatprep.mubr.bf16.mxu0 %v3802
        %4787 = vmatmul.mubr.bf16.gmra.mxu0 %v3801
        %v4788 = vpop.f32.mrf.mxu0
        %v4789 = vadd.f32 %v4436, %v4788
        %v4790 = vpop.f32.mrf.mxu0
        %v4791 = vadd.f32 %v4438, %v4790
        %v4792 = vpop.f32.mrf.mxu0
        %v4793 = vadd.f32 %v4440, %v4792
        %v4794 = vpop.f32.mrf.mxu0
        %v4795 = vadd.f32 %v4442, %v4794
        %4796 = vmatprep.mubr.bf16.mxu0 %v3806
        %4797 = vmatmul.mubr.bf16.gmra.mxu0 %v3805
        %v4798 = vpop.f32.mrf.mxu0
        %v4799 = vadd.f32 %v4446, %v4798
        %v4800 = vpop.f32.mrf.mxu0
        %v4801 = vadd.f32 %v4448, %v4800
        %v4802 = vpop.f32.mrf.mxu0
        %v4803 = vadd.f32 %v4450, %v4802
        %v4804 = vpop.f32.mrf.mxu0
        %v4805 = vadd.f32 %v4452, %v4804
        %4806 = vmatprep.mubr.bf16.mxu0 %v3810
        %4807 = vmatmul.mubr.bf16.gmra.mxu0 %v3809
        %v4808 = vpop.f32.mrf.mxu0
        %v4809 = vadd.f32 %v4456, %v4808
        %v4810 = vpop.f32.mrf.mxu0
        %v4811 = vadd.f32 %v4458, %v4810
        %v4812 = vpop.f32.mrf.mxu0
        %v4813 = vadd.f32 %v4460, %v4812
        %v4814 = vpop.f32.mrf.mxu0
        %v4815 = vadd.f32 %v4462, %v4814
        %4816 = vmatprep.mubr.bf16.mxu0 %v3814
        %4817 = vmatmul.mubr.bf16.gmra.mxu0 %v3813
        %v4818 = vpop.f32.mrf.mxu0
        %v4819 = vadd.f32 %v4466, %v4818
        %v4820 = vpop.f32.mrf.mxu0
        %v4821 = vadd.f32 %v4468, %v4820
        %v4822 = vpop.f32.mrf.mxu0
        %v4823 = vadd.f32 %v4470, %v4822
        %v4824 = vpop.f32.mrf.mxu0
        %v4825 = vadd.f32 %v4472, %v4824
        %4826 = vmatprep.mubr.bf16.mxu0 %v3818
        %4827 = vmatmul.mubr.bf16.gmra.mxu0 %v3817
        %v4828 = vpop.f32.mrf.mxu0
        %v4829 = vadd.f32 %v4476, %v4828
        %v4830 = vpop.f32.mrf.mxu0
        %v4831 = vadd.f32 %v4478, %v4830
        %v4832 = vpop.f32.mrf.mxu0
        %v4833 = vadd.f32 %v4480, %v4832
        %v4834 = vpop.f32.mrf.mxu0
        %v4835 = vadd.f32 %v4482, %v4834
        %4836 = vmatprep.mubr.bf16.mxu0 %v3822
        %4837 = vmatmul.mubr.bf16.gmra.mxu0 %v3821
        %v4838 = vpop.f32.mrf.mxu0
        %v4839 = vadd.f32 %v4486, %v4838
        %v4840 = vpop.f32.mrf.mxu0
        %v4841 = vadd.f32 %v4488, %v4840
        %v4842 = vpop.f32.mrf.mxu0
        %v4843 = vadd.f32 %v4490, %v4842
        %v4844 = vpop.f32.mrf.mxu0
        %v4845 = vadd.f32 %v4492, %v4844
        %4846 = vmatprep.mubr.bf16.mxu0 %v3826
        %4847 = vmatmul.mubr.bf16.gmra.mxu0 %v3825
        %v4848 = vpop.f32.mrf.mxu0
        %v4849 = vadd.f32 %v4496, %v4848
        %v4850 = vpop.f32.mrf.mxu0
        %v4851 = vadd.f32 %v4498, %v4850
        %v4852 = vpop.f32.mrf.mxu0
        %v4853 = vadd.f32 %v4500, %v4852
        %v4854 = vpop.f32.mrf.mxu0
        %v4855 = vadd.f32 %v4502, %v4854
        %4856 = vmatprep.mubr.bf16.mxu0 %v3830
        %4857 = vmatmul.mubr.bf16.gmra.mxu0 %v3829
        %v4858 = vpop.f32.mrf.mxu0
        %v4859 = vadd.f32 %v4506, %v4858
        %v4860 = vpop.f32.mrf.mxu0
        %v4861 = vadd.f32 %v4508, %v4860
        %v4862 = vpop.f32.mrf.mxu0
        %v4863 = vadd.f32 %v4510, %v4862
        %v4864 = vpop.f32.mrf.mxu0
        %v4865 = vadd.f32 %v4512, %v4864
        %4866 = vmatprep.mubr.bf16.mxu0 %v3834
        %4867 = vmatmul.mubr.bf16.gmra.mxu0 %v3833
        %v4868 = vpop.f32.mrf.mxu0
        %v4869 = vadd.f32 %v4516, %v4868
        %v4870 = vpop.f32.mrf.mxu0
        %v4871 = vadd.f32 %v4518, %v4870
        %v4872 = vpop.f32.mrf.mxu0
        %v4873 = vadd.f32 %v4520, %v4872
        %v4874 = vpop.f32.mrf.mxu0
        %v4875 = vadd.f32 %v4522, %v4874
        %4876 = vmatprep.mubr.bf16.mxu0 %v3838
        %4877 = vmatmul.mubr.bf16.gmra.mxu0 %v3837
        %v4878 = vpop.f32.mrf.mxu0
        %v4879 = vadd.f32 %v4526, %v4878
        %v4880 = vpop.f32.mrf.mxu0
        %v4881 = vadd.f32 %v4528, %v4880
        %v4882 = vpop.f32.mrf.mxu0
        %v4883 = vadd.f32 %v4530, %v4882
        %v4884 = vpop.f32.mrf.mxu0
        %v4885 = vadd.f32 %v4532, %v4884
        %4886 = vmatprep.mubr.bf16.mxu0 %v3842
        %4887 = vmatmul.mubr.bf16.gmra.mxu0 %v3841
        %v4888 = vpop.f32.mrf.mxu0
        %v4889 = vadd.f32 %v4536, %v4888
        %v4890 = vpop.f32.mrf.mxu0
        %v4891 = vadd.f32 %v4538, %v4890
        %v4892 = vpop.f32.mrf.mxu0
        %v4893 = vadd.f32 %v4540, %v4892
        %v4894 = vpop.f32.mrf.mxu0
        %v4895 = vadd.f32 %v4542, %v4894
        %4896 = vmatprep.mubr.bf16.mxu0 %v3846
        %4897 = vmatmul.mubr.bf16.gmra.mxu0 %v3845
        %v4898 = vpop.f32.mrf.mxu0
        %v4899 = vadd.f32 %v4546, %v4898
        %v4900 = vpop.f32.mrf.mxu0
        %v4901 = vadd.f32 %v4548, %v4900
        %v4902 = vpop.f32.mrf.mxu0
        %v4903 = vadd.f32 %v4550, %v4902
        %v4904 = vpop.f32.mrf.mxu0
        %v4905 = vadd.f32 %v4552, %v4904
        %4906 = vmatprep.mubr.bf16.mxu0 %v3850
        %4907 = vmatmul.mubr.bf16.gmra.mxu0 %v3849
        %v4908 = vpop.f32.mrf.mxu0
        %v4909 = vadd.f32 %v4556, %v4908
        %v4910 = vpop.f32.mrf.mxu0
        %v4911 = vadd.f32 %v4558, %v4910
        %v4912 = vpop.f32.mrf.mxu0
        %v4913 = vadd.f32 %v4560, %v4912
        %v4914 = vpop.f32.mrf.mxu0
        %v4915 = vadd.f32 %v4562, %v4914
        %4916 = vmatprep.mubr.bf16.mxu0 %v3854
        %4917 = vmatmul.mubr.bf16.gmra.mxu0 %v3853
        %v4918 = vpop.f32.mrf.mxu0
        %v4919 = vadd.f32 %v4566, %v4918
        %v4920 = vpop.f32.mrf.mxu0
        %v4921 = vadd.f32 %v4568, %v4920
        %v4922 = vpop.f32.mrf.mxu0
        %v4923 = vadd.f32 %v4570, %v4922
        %v4924 = vpop.f32.mrf.mxu0
        %v4925 = vadd.f32 %v4572, %v4924
        %4926 = vmatprep.mubr.bf16.mxu0 %v3858
        %4927 = vmatmul.mubr.bf16.gmra.mxu0 %v3857
        %v4928 = vpop.f32.mrf.mxu0
        %v4929 = vadd.f32 %v4576, %v4928
        %v4930 = vpop.f32.mrf.mxu0
        %v4931 = vadd.f32 %v4578, %v4930
        %v4932 = vpop.f32.mrf.mxu0
        %v4933 = vadd.f32 %v4580, %v4932
        %v4934 = vpop.f32.mrf.mxu0
        %v4935 = vadd.f32 %v4582, %v4934
        %4936 = vmatprep.mubr.bf16.mxu0 %v3862
        %4937 = vmatmul.mubr.bf16.gmra.mxu0 %v3861
        %v4938 = vpop.f32.mrf.mxu0
        %v4939 = vadd.f32 %v4586, %v4938
        %v4940 = vpop.f32.mrf.mxu0
        %v4941 = vadd.f32 %v4588, %v4940
        %v4942 = vpop.f32.mrf.mxu0
        %v4943 = vadd.f32 %v4590, %v4942
        %v4944 = vpop.f32.mrf.mxu0
        %v4945 = vadd.f32 %v4592, %v4944
        %4946 = vmatprep.mubr.bf16.mxu0 %v3866
        %4947 = vmatmul.mubr.bf16.gmra.mxu0 %v3865
        %v4948 = vpop.f32.mrf.mxu0
        %v4949 = vadd.f32 %v4596, %v4948
        %v4950 = vpop.f32.mrf.mxu0
        %v4951 = vadd.f32 %v4598, %v4950
        %v4952 = vpop.f32.mrf.mxu0
        %v4953 = vadd.f32 %v4600, %v4952
        %v4954 = vpop.f32.mrf.mxu0
        %v4955 = vadd.f32 %v4602, %v4954
        %4956 = vmatprep.mubr.bf16.mxu0 %v3870
        %4957 = vmatmul.mubr.bf16.gmra.mxu0 %v3869
        %v4958 = vpop.f32.mrf.mxu0
        %v4959 = vadd.f32 %v4606, %v4958
        %v4960 = vpop.f32.mrf.mxu0
        %v4961 = vadd.f32 %v4608, %v4960
        %v4962 = vpop.f32.mrf.mxu0
        %v4963 = vadd.f32 %v4610, %v4962
        %v4964 = vpop.f32.mrf.mxu0
        %v4965 = vadd.f32 %v4612, %v4964
        %4966 = vmatprep.mubr.bf16.mxu0 %v3874
        %4967 = vmatmul.mubr.bf16.gmra.mxu0 %v3873
        %v4968 = vpop.f32.mrf.mxu0
        %v4969 = vadd.f32 %v4616, %v4968
        %v4970 = vpop.f32.mrf.mxu0
        %v4971 = vadd.f32 %v4618, %v4970
        %v4972 = vpop.f32.mrf.mxu0
        %v4973 = vadd.f32 %v4620, %v4972
        %v4974 = vpop.f32.mrf.mxu0
        %v4975 = vadd.f32 %v4622, %v4974
        %4976 = vdwg.mxu0
        %v4977 = vmax.f32 %v4659, 0.0
        %v4978 = vmax.f32 %v4661, 0.0
        %v4979 = vmax.f32 %v4663, 0.0
        %v4980 = vmax.f32 %v4665, 0.0
        %v4981 = vmax.f32 %v4669, 0.0
        %v4982 = vmax.f32 %v4671, 0.0
        %v4983 = vmax.f32 %v4673, 0.0
        %v4984 = vmax.f32 %v4675, 0.0
        %v4985 = vmax.f32 %v4679, 0.0
        %v4986 = vmax.f32 %v4681, 0.0
        %v4987 = vmax.f32 %v4683, 0.0
        %v4988 = vmax.f32 %v4685, 0.0
        %v4989 = vmax.f32 %v4689, 0.0
        %v4990 = vmax.f32 %v4691, 0.0
        %v4991 = vmax.f32 %v4693, 0.0
        %v4992 = vmax.f32 %v4695, 0.0
        %v4993 = vmax.f32 %v4699, 0.0
        %v4994 = vmax.f32 %v4701, 0.0
        %v4995 = vmax.f32 %v4703, 0.0
        %v4996 = vmax.f32 %v4705, 0.0
        %v4997 = vmax.f32 %v4709, 0.0
        %v4998 = vmax.f32 %v4711, 0.0
        %v4999 = vmax.f32 %v4713, 0.0
        %v5000 = vmax.f32 %v4715, 0.0
        %v5001 = vmax.f32 %v4719, 0.0
        %v5002 = vmax.f32 %v4721, 0.0
        %v5003 = vmax.f32 %v4723, 0.0
        %v5004 = vmax.f32 %v4725, 0.0
        %v5005 = vmax.f32 %v4729, 0.0
        %v5006 = vmax.f32 %v4731, 0.0
        %v5007 = vmax.f32 %v4733, 0.0
        %v5008 = vmax.f32 %v4735, 0.0
        %v5009 = vmax.f32 %v4739, 0.0
        %v5010 = vmax.f32 %v4741, 0.0
        %v5011 = vmax.f32 %v4743, 0.0
        %v5012 = vmax.f32 %v4745, 0.0
        %v5013 = vmax.f32 %v4749, 0.0
        %v5014 = vmax.f32 %v4751, 0.0
        %v5015 = vmax.f32 %v4753, 0.0
        %v5016 = vmax.f32 %v4755, 0.0
        %v5017 = vmax.f32 %v4759, 0.0
        %v5018 = vmax.f32 %v4761, 0.0
        %v5019 = vmax.f32 %v4763, 0.0
        %v5020 = vmax.f32 %v4765, 0.0
        %v5021 = vmax.f32 %v4769, 0.0
        %v5022 = vmax.f32 %v4771, 0.0
        %v5023 = vmax.f32 %v4773, 0.0
        %v5024 = vmax.f32 %v4775, 0.0
        %v5025 = vmax.f32 %v4779, 0.0
        %v5026 = vmax.f32 %v4781, 0.0
        %v5027 = vmax.f32 %v4783, 0.0
        %v5028 = vmax.f32 %v4785, 0.0
        %v5029 = vmax.f32 %v4789, 0.0
        %v5030 = vmax.f32 %v4791, 0.0
        %v5031 = vmax.f32 %v4793, 0.0
        %v5032 = vmax.f32 %v4795, 0.0
        %v5033 = vmax.f32 %v4799, 0.0
        %v5034 = vmax.f32 %v4801, 0.0
        %v5035 = vmax.f32 %v4803, 0.0
        %v5036 = vmax.f32 %v4805, 0.0
        %v5037 = vmax.f32 %v4809, 0.0
        %v5038 = vmax.f32 %v4811, 0.0
        %v5039 = vmax.f32 %v4813, 0.0
        %v5040 = vmax.f32 %v4815, 0.0
        %v5041 = vmax.f32 %v4819, 0.0
        %v5042 = vmax.f32 %v4821, 0.0
        %v5043 = vmax.f32 %v4823, 0.0
        %v5044 = vmax.f32 %v4825, 0.0
        %v5045 = vmax.f32 %v4829, 0.0
        %v5046 = vmax.f32 %v4831, 0.0
        %v5047 = vmax.f32 %v4833, 0.0
        %v5048 = vmax.f32 %v4835, 0.0
        %v5049 = vmax.f32 %v4839, 0.0
        %v5050 = vmax.f32 %v4841, 0.0
        %v5051 = vmax.f32 %v4843, 0.0
        %v5052 = vmax.f32 %v4845, 0.0
        %v5053 = vmax.f32 %v4849, 0.0
        %v5054 = vmax.f32 %v4851, 0.0
        %v5055 = vmax.f32 %v4853, 0.0
        %v5056 = vmax.f32 %v4855, 0.0
        %v5057 = vmax.f32 %v4859, 0.0
        %v5058 = vmax.f32 %v4861, 0.0
        %v5059 = vmax.f32 %v4863, 0.0
        %v5060 = vmax.f32 %v4865, 0.0
        %v5061 = vmax.f32 %v4869, 0.0
        %v5062 = vmax.f32 %v4871, 0.0
        %v5063 = vmax.f32 %v4873, 0.0
        %v5064 = vmax.f32 %v4875, 0.0
        %v5065 = vmax.f32 %v4879, 0.0
        %v5066 = vmax.f32 %v4881, 0.0
        %v5067 = vmax.f32 %v4883, 0.0
        %v5068 = vmax.f32 %v4885, 0.0
        %v5069 = vmax.f32 %v4889, 0.0
        %v5070 = vmax.f32 %v4891, 0.0
        %v5071 = vmax.f32 %v4893, 0.0
        %v5072 = vmax.f32 %v4895, 0.0
        %v5073 = vmax.f32 %v4899, 0.0
        %v5074 = vmax.f32 %v4901, 0.0
        %v5075 = vmax.f32 %v4903, 0.0
        %v5076 = vmax.f32 %v4905, 0.0
        %v5077 = vmax.f32 %v4909, 0.0
        %v5078 = vmax.f32 %v4911, 0.0
        %v5079 = vmax.f32 %v4913, 0.0
        %v5080 = vmax.f32 %v4915, 0.0
        %v5081 = vmax.f32 %v4919, 0.0
        %v5082 = vmax.f32 %v4921, 0.0
        %v5083 = vmax.f32 %v4923, 0.0
        %v5084 = vmax.f32 %v4925, 0.0
        %v5085 = vmax.f32 %v4929, 0.0
        %v5086 = vmax.f32 %v4931, 0.0
        %v5087 = vmax.f32 %v4933, 0.0
        %v5088 = vmax.f32 %v4935, 0.0
        %v5089 = vmax.f32 %v4939, 0.0
        %v5090 = vmax.f32 %v4941, 0.0
        %v5091 = vmax.f32 %v4943, 0.0
        %v5092 = vmax.f32 %v4945, 0.0
        %v5093 = vmax.f32 %v4949, 0.0
        %v5094 = vmax.f32 %v4951, 0.0
        %v5095 = vmax.f32 %v4953, 0.0
        %v5096 = vmax.f32 %v4955, 0.0
        %v5097 = vmax.f32 %v4959, 0.0
        %v5098 = vmax.f32 %v4961, 0.0
        %v5099 = vmax.f32 %v4963, 0.0
        %v5100 = vmax.f32 %v4965, 0.0
        %v5101 = vmax.f32 %v4969, 0.0
        %v5102 = vmax.f32 %v4971, 0.0
        %v5103 = vmax.f32 %v4973, 0.0
        %v5104 = vmax.f32 %v4975, 0.0
        %v5105 = vmax.f32 %v4977, %v4981
        %v5106 = vmax.f32 %v4979, %v4983
        %v5107 = vmax.f32 %v5105, %v4985
        %v5108 = vmax.f32 %v5106, %v4987
        %v5109 = vmax.f32 %v5107, %v4989
        %v5110 = vmax.f32 %v5108, %v4991
        %v5111 = vmax.f32 %v5109, %v4993
        %v5112 = vmax.f32 %v5110, %v4995
        %v5113 = vmax.f32 %v5111, %v4997
        %v5114 = vmax.f32 %v5112, %v4999
        %v5115 = vmax.f32 %v5113, %v5001
        %v5116 = vmax.f32 %v5114, %v5003
        %v5117 = vmax.f32 %v5115, %v5005
        %v5118 = vmax.f32 %v5116, %v5007
        %v5119 = vmax.f32 %v5117, %v5009
        %v5120 = vmax.f32 %v5118, %v5011
        %v5121 = vmax.f32 %v5119, %v5013
        %v5122 = vmax.f32 %v5120, %v5015
        %v5123 = vmax.f32 %v5121, %v5017
        %v5124 = vmax.f32 %v5122, %v5019
        %v5125 = vmax.f32 %v5123, %v5021
        %v5126 = vmax.f32 %v5124, %v5023
        %v5127 = vmax.f32 %v5125, %v5025
        %v5128 = vmax.f32 %v5126, %v5027
        %v5129 = vmax.f32 %v5127, %v5029
        %v5130 = vmax.f32 %v5128, %v5031
        %v5131 = vmax.f32 %v5129, %v5033
        %v5132 = vmax.f32 %v5130, %v5035
        %v5133 = vmax.f32 %v5131, %v5037
        %v5134 = vmax.f32 %v5132, %v5039
        %v5135 = vmax.f32 %v5133, %v5041
        %v5136 = vmax.f32 %v5134, %v5043
        %v5137 = vmax.f32 %v5135, %v5045
        %v5138 = vmax.f32 %v5136, %v5047
        %v5139 = vmax.f32 %v5137, %v5049
        %v5140 = vmax.f32 %v5138, %v5051
        %v5141 = vmax.f32 %v5139, %v5053
        %v5142 = vmax.f32 %v5140, %v5055
        %v5143 = vmax.f32 %v5141, %v5057
        %v5144 = vmax.f32 %v5142, %v5059
        %v5145 = vmax.f32 %v5143, %v5061
        %v5146 = vmax.f32 %v5144, %v5063
        %v5147 = vmax.f32 %v5145, %v5065
        %v5148 = vmax.f32 %v5146, %v5067
        %v5149 = vmax.f32 %v5147, %v5069
        %v5150 = vmax.f32 %v5148, %v5071
        %v5151 = vmax.f32 %v5149, %v5073
        %v5152 = vmax.f32 %v5150, %v5075
        %v5153 = vmax.f32 %v5151, %v5077
        %v5154 = vmax.f32 %v5152, %v5079
        %v5155 = vmax.f32 %v5153, %v5081
        %v5156 = vmax.f32 %v5154, %v5083
        %v5157 = vmax.f32 %v5155, %v5085
        %v5158 = vmax.f32 %v5156, %v5087
        %v5159 = vmax.f32 %v5157, %v5089
        %v5160 = vmax.f32 %v5158, %v5091
        %v5161 = vmax.f32 %v5159, %v5093
        %v5162 = vmax.f32 %v5160, %v5095
        %v5163 = vmax.f32 %v5161, %v5097
        %v5164 = vmax.f32 %v5162, %v5099
        %v5165 = vmax.f32 %v5163, %v5101
        %v5166 = vmax.f32 %v5164, %v5103
        %v5167 = vmax.f32 %v5165, %v5166
        %v5168 = vrot.slane %v5167, 4
        %v5169 = vmax.f32 %v5167, %v5168
        %v5170 = vrot.slane %v5169, 2
        %v5171 = vmax.f32 %v5169, %v5170
        %v5172 = vrot.slane %v5171, 1
        %v5173 = vmax.f32 %v5171, %v5172
        %v5174 = vmax.f32 %v4978, %v4982
        %v5175 = vmax.f32 %v4980, %v4984
        %v5176 = vmax.f32 %v5174, %v4986
        %v5177 = vmax.f32 %v5175, %v4988
        %v5178 = vmax.f32 %v5176, %v4990
        %v5179 = vmax.f32 %v5177, %v4992
        %v5180 = vmax.f32 %v5178, %v4994
        %v5181 = vmax.f32 %v5179, %v4996
        %v5182 = vmax.f32 %v5180, %v4998
        %v5183 = vmax.f32 %v5181, %v5000
        %v5184 = vmax.f32 %v5182, %v5002
        %v5185 = vmax.f32 %v5183, %v5004
        %v5186 = vmax.f32 %v5184, %v5006
        %v5187 = vmax.f32 %v5185, %v5008
        %v5188 = vmax.f32 %v5186, %v5010
        %v5189 = vmax.f32 %v5187, %v5012
        %v5190 = vmax.f32 %v5188, %v5014
        %v5191 = vmax.f32 %v5189, %v5016
        %v5192 = vmax.f32 %v5190, %v5018
        %v5193 = vmax.f32 %v5191, %v5020
        %v5194 = vmax.f32 %v5192, %v5022
        %v5195 = vmax.f32 %v5193, %v5024
        %v5196 = vmax.f32 %v5194, %v5026
        %v5197 = vmax.f32 %v5195, %v5028
        %v5198 = vmax.f32 %v5196, %v5030
        %v5199 = vmax.f32 %v5197, %v5032
        %v5200 = vmax.f32 %v5198, %v5034
        %v5201 = vmax.f32 %v5199, %v5036
        %v5202 = vmax.f32 %v5200, %v5038
        %v5203 = vmax.f32 %v5201, %v5040
        %v5204 = vmax.f32 %v5202, %v5042
        %v5205 = vmax.f32 %v5203, %v5044
        %v5206 = vmax.f32 %v5204, %v5046
        %v5207 = vmax.f32 %v5205, %v5048
        %v5208 = vmax.f32 %v5206, %v5050
        %v5209 = vmax.f32 %v5207, %v5052
        %v5210 = vmax.f32 %v5208, %v5054
        %v5211 = vmax.f32 %v5209, %v5056
        %v5212 = vmax.f32 %v5210, %v5058
        %v5213 = vmax.f32 %v5211, %v5060
        %v5214 = vmax.f32 %v5212, %v5062
        %v5215 = vmax.f32 %v5213, %v5064
        %v5216 = vmax.f32 %v5214, %v5066
        %v5217 = vmax.f32 %v5215, %v5068
        %v5218 = vmax.f32 %v5216, %v5070
        %v5219 = vmax.f32 %v5217, %v5072
        %v5220 = vmax.f32 %v5218, %v5074
        %v5221 = vmax.f32 %v5219, %v5076
        %v5222 = vmax.f32 %v5220, %v5078
        %v5223 = vmax.f32 %v5221, %v5080
        %v5224 = vmax.f32 %v5222, %v5082
        %v5225 = vmax.f32 %v5223, %v5084
        %v5226 = vmax.f32 %v5224, %v5086
        %v5227 = vmax.f32 %v5225, %v5088
        %v5228 = vmax.f32 %v5226, %v5090
        %v5229 = vmax.f32 %v5227, %v5092
        %v5230 = vmax.f32 %v5228, %v5094
        %v5231 = vmax.f32 %v5229, %v5096
        %v5232 = vmax.f32 %v5230, %v5098
        %v5233 = vmax.f32 %v5231, %v5100
        %v5234 = vmax.f32 %v5232, %v5102
        %v5235 = vmax.f32 %v5233, %v5104
        %v5236 = vmax.f32 %v5234, %v5235
        %v5237 = vrot.slane %v5236, 4
        %v5238 = vmax.f32 %v5236, %v5237
        %v5239 = vrot.slane %v5238, 2
        %v5240 = vmax.f32 %v5238, %v5239
        %v5241 = vrot.slane %v5240, 1
        %v5242 = vmax.f32 %v5240, %v5241
        %v5243 = vld [vmem:[%s451] sm:$0x3]
        %v5246 = vcombine.low %v5173, %v5242
        %v5248 = vunpack.c.l.s4 1966171168
        %v5249 = vunpack.c.0.s8 %v5248
        %v5250 = vlaneseq
        %v5251 = vshrl.u32 %v5250, 7
        %v5252 = vsub.s32 %v5249, %v5251
        %v5253 = vrot.slane %v5246, %v5252
        %v5255 = vunpack.c.l.s4 1966171168
        %v5256 = vunpack.c.0.s8 %v5255
        %v5257 = vlaneseq
        %v5258 = vshrl.u32 %v5257, 7
        %v5259 = vsub.s32 %v5256, %v5258
        %v5260 = vrot.slane %v5253, %v5259
        %v5262 = vmax.f32 %v5243, %v5260
        %v5263 = vlaneseq
        %vm5264 = vcmp.ge.s32.totalorder %v5263, 0
        %vm5265 = vcmp.lt.s32.totalorder %v5263, 256
        %vm5266 = vmand %vm5264, %vm5265
        %5267 = vst.msk [vmem:[%s451] sm:$0x3] %vm5266, %v5262
        %s5268 = sand.u32 %s298, 1
        %s5269 = scalar_lea.sflag [#allocation4], %s5268
        %s5270 = sand.u32 %s298, 1
        %s5271 = smul.addr %s5270, 2
        %s5272 = scalar_lea.vmem [#allocation7], %s5271
        // Predicated region
        $region77: #{tpu_custom_call.1} parent=63 // pred_check
          %p5273 = pneg %p308
        $region78: #{tpu_custom_call.1} parent=63 // pred_check_branch
          %5275 = sbr.rel (%p5273) target = $region80
        $region79: #{tpu_custom_call.1} parent=63 // pred_region
          %s5277 = ssub.s32 32, 32
          %5278 = vsyncadd %s5269, %s5277
          %s5279 = smul.addr %s33, 2
          %s5280 = smul.addr %s32, 4
          %s5281 = sadd.s32 %s5279, %s5280
          %s5282 = smul.addr %s5281, 16
          %s5283 = scalar_lea.hbm %s11, %s5282
          %s5285 = sshll.u32 %s5272, 4
          %s5286 = int_to_ptr.vmem [resolvable:$true] %s5285
          %5288 = dma.vmem_to_hbm [thread:$0]  %s5286, 32, %s5283, %s5269
        $region80: #{tpu_custom_call.1} parent=63 // pred_fallthru
          _
      $region64: #{tpu_custom_call.1} parent=5 // pred_fallthru
        _
      %p5289 = scmp.le.s32.totalorder 2, %s22
      // Predicated region
      $region81: #{tpu_custom_call.1} parent=5 // pred_check
        %p5290 = pneg %p5289
      $region82: #{tpu_custom_call.1} parent=5 // pred_check_branch
        %5292 = sbr.rel (%p5290) target = $region84
      $region83: #{tpu_custom_call.1} parent=5 // pred_region
        %s5293 = ssub.s32 %s22, 2
        // Predicated region
        $region85: #{tpu_custom_call.1} parent=83 // pred_check
          %p5294 = pneg %p314
        $region86: #{tpu_custom_call.1} parent=83 // pred_check_branch
          %5296 = sbr.rel (%p5294) target = $region88
        $region87: #{tpu_custom_call.1} parent=83 // pred_region
          %s5297 = sand.u32 %s299, 1
          %s5298 = scalar_lea.sflag [#allocation4], %s5297
          %s5299 = sand.u32 %s299, 1
          %s5300 = smul.addr %s5299, 2
          %s5301 = scalar_lea.vmem [#allocation7], %s5300
          %5302 = dma.done %s5298, 32
        $region88: #{tpu_custom_call.1} parent=83 // pred_fallthru
          _
      $region84: #{tpu_custom_call.1} parent=5 // pred_fallthru
        _
    $region6: #{tpu_custom_call.1} parent=1 // loop_footer
      %s26 = sadd.s32 1, %s22
    $region7: #{tpu_custom_call.1} parent=1 // loop_footer_branch
      %21 = sbr.rel target = $region3
    $region8: #{tpu_custom_call.1} parent=1 // loop_exit
      _
    %5303 = vsyncpa [#allocation3], 1
    %s5304 = scalar_lea.sflag [#allocation3], 1
    %5305 = vsyncpa %s5304, 1
    %5306 = vsyncpa [#allocation6], 1
    %5307 = vsyncpa [#allocation4], 1
    %s5308 = scalar_lea.sflag [#allocation4], 1
    %5309 = vsyncpa %s5308, 1

</llo_original>
